<compile_context>
chip_gen: v7x
topology: tpu7x:2x2x1
jax: 0.10.0
libtpu: 0.0.40
codegen_flags: <defaults>
</compile_context>

<pallas_src>
import functools

import numpy as np
import jax
import jax.numpy as jnp
from jax.experimental import pallas as pl
from jax.experimental.pallas import tpu as pltpu


# --------------------------------------------------------------------------
# Fused kernel: whole AutoEncoder forward for the whole (batch-folded) input.
# --------------------------------------------------------------------------
def _autoencoder_kernel(x_ref,
                        s1_ref, m1_ref, c1_ref,
                        s2_ref, m2_ref, c2_ref,
                        s3_ref, m3_ref, c3_ref,
                        s4_ref, m4_ref, c4_ref,
                        alpha_ref, o_ref):
    """x_ref: (N*Hin, Win*Cin); s*: (k, N*Ho, N*Hin) block-diag row shifts;
    m*: (k, Win*Cin, Wo*Cout) banded weight expansions; c*: (1, Wo*Cout)
    bias rows; alpha_ref: (3,) f32 in SMEM; o_ref: (N*Hout, Wout*3)."""
    x = x_ref[...]                                      # (N*Hin, Win*Cin)

    def layer(inp, s_ref, m_ref, c_ref):
        k, rows_out, _ = s_ref.shape
        n_out = m_ref.shape[2]
        acc = jnp.zeros((rows_out, n_out), jnp.float32)
        for kh in range(k):                             # k = 5 or 6, unrolled
            rows = jnp.dot(s_ref[kh], inp,
                           preferred_element_type=jnp.float32)
            acc = acc + jnp.dot(rows, m_ref[kh],
                                preferred_element_type=jnp.float32)
        return acc + c_ref[...]                         # (1, n_out) broadcast

    def prelu(v, a):
        return jnp.where(v >= 0.0, v, a * v)

    y = prelu(layer(x, s1_ref, m1_ref, c1_ref), alpha_ref[0])   # conv 3->8, /2
    y = prelu(layer(y, s2_ref, m2_ref, c2_ref), alpha_ref[1])   # conv 8->8, /2
    y = prelu(layer(y, s3_ref, m3_ref, c3_ref), alpha_ref[2])   # deconv 8->8, x2
    y = layer(y, s4_ref, m4_ref, c4_ref)                        # deconv 8->3, x2
    # numerically-safe sigmoid: exp(-y) may overflow to inf -> 1/inf = 0, no NaN
    o_ref[...] = (1.0 / (1.0 + jnp.exp(-y))).astype(o_ref.dtype)


# --------------------------------------------------------------------------
# One-time weight pre-expansion (done at parameter setup, NOT per forward).
# --------------------------------------------------------------------------
def _conv_operators(w, b, hin, win, stride, pad):
    """Conv2d, torch OIHW weight -> (S, B, bias_row, ho, wo).
    out[i, j*Cout+co] = sum_{ci,kh,kw} x[s*i+kh-p, (s*j+kw-p)*Cin+ci] * w[co,ci,kh,kw]."""
    cout, cin, k, _ = w.shape
    ho = (hin + 2 * pad - k) // stride + 1
    wo = (win + 2 * pad - k) // stride + 1
    S = np.zeros((k, ho, hin), np.float32)
    B = np.zeros((k, win * cin, wo * cout), np.float32)
    for kh in range(k):
        for i in range(ho):
            hi = stride * i + kh - pad
            if 0 <= hi < hin:
                S[kh, i, hi] = 1.0
        for kw in range(k):
            for j in range(wo):
                wi = stride * j + kw - pad
                if 0 <= wi < win:
                    B[kh, wi * cin:(wi + 1) * cin,
                          j * cout:(j + 1) * cout] += w[:, :, kh, kw].T
    brow = np.tile(np.asarray(b, np.float32), wo).reshape(1, wo * cout)
    return S, B, brow, ho, wo


def _deconv_operators(w, b, hin, win, stride, pad):
    """ConvTranspose2d, torch (Cin,Cout,kH,kW) weight -> (S, B, bias_row, ho, wo).
    out[ho, wo*Cout+co] += x[hi, wi*Cin+ci] * w[ci,co,kh,kw]
      whenever ho = s*hi+kh-p and wo = s*wi+kw-p."""
    cin, cout, k, _ = w.shape
    ho = (hin - 1) * stride - 2 * pad + k
    wo = (win - 1) * stride - 2 * pad + k
    S = np.zeros((k, ho, hin), np.float32)
    B = np.zeros((k, win * cin, wo * cout), np.float32)
    for kh in range(k):
        for hi in range(hin):
            o = stride * hi + kh - pad
            if 0 <= o < ho:
                S[kh, o, hi] = 1.0
        for kw in range(k):
            for wi in range(win):
                wo_ = stride * wi + kw - pad
                if 0 <= wo_ < wo:
                    B[kh, wi * cin:(wi + 1) * cin,
                          wo_ * cout:(wo_ + 1) * cout] += w[:, :, kh, kw]
    brow = np.tile(np.asarray(b, np.float32), wo).reshape(1, wo * cout)
    return S, B, brow, ho, wo


def _fold_batch(S, n):
    """(k, Ho, Hin) row-shift operator -> block-diagonal (k, n*Ho, n*Hin)
    so the whole batch can be stacked along the sublane axis."""
    k, ho, hi = S.shape
    out = np.zeros((k, n * ho, n * hi), np.float32)
    for b in range(n):
        out[:, b * ho:(b + 1) * ho, b * hi:(b + 1) * hi] = S
    return out


def build_operators(params, hin, win, batch):
    p = {k: np.asarray(v) for k, v in params.items()}
    s1, m1, c1, h1, w1 = _conv_operators(p["enc_w1"], p["enc_b1"], hin, win, 2, 2)
    s2, m2, c2, h2, w2 = _conv_operators(p["enc_w2"], p["enc_b2"], h1, w1, 2, 2)
    s3, m3, c3, h3, w3 = _deconv_operators(p["dec_w1"], p["dec_b1"], h2, w2, 2, 2)
    s4, m4, c4, h4, w4 = _deconv_operators(p["dec_w2"], p["dec_b2"], h3, w3, 2, 2)
    ops = dict(S1=_fold_batch(s1, batch), M1=m1, C1=c1,
               S2=_fold_batch(s2, batch), M2=m2, C2=c2,
               S3=_fold_batch(s3, batch), M3=m3, C3=c3,
               S4=_fold_batch(s4, batch), M4=m4, C4=c4)
    ops = {k: jnp.asarray(v) for k, v in ops.items()}
    alphas = jnp.asarray(
        np.stack([p["alpha1"], p["alpha2"], p["alpha3"]]).astype(np.float32))
    meta = dict(hout=int(h4), wout=int(w4), cout=int(p["dec_w2"].shape[1]),
                batch=int(batch))
    return ops, alphas, meta


# --------------------------------------------------------------------------
# pallas_call wrapper + jitted forward
# --------------------------------------------------------------------------
def _run_pallas(x2d, ops, alphas):
    rows_in, wc_in = x2d.shape                 # (N*Hin, Win*Cin)
    rows_out = ops["S4"].shape[1]              # N*Hout
    wc_out = ops["M4"].shape[2]                # Wout*Cout

    def full_spec(a):
        return pl.BlockSpec(a.shape, lambda i: (0,) * a.ndim)

    in_specs = [pl.BlockSpec((rows_in, wc_in), lambda i: (0, 0))]
    operands = [x2d]
    for name in ("S1", "M1", "C1", "S2", "M2", "C2",
                 "S3", "M3", "C3", "S4", "M4", "C4"):
        a = ops[name]
        in_specs.append(full_spec(a))
        operands.append(a)
    in_specs.append(pl.BlockSpec(memory_space=pltpu.MemorySpace.SMEM))
    operands.append(alphas)

    return pl.pallas_call(
        _autoencoder_kernel,
        out_shape=jax.ShapeDtypeStruct((rows_out, wc_out), jnp.float32),
        grid=(1,),                              # single step: whole batch at once
        in_specs=in_specs,
        out_specs=pl.BlockSpec((rows_out, wc_out), lambda i: (0, 0)),
        compiler_params=pltpu.CompilerParams(
            dimension_semantics=("arbitrary",)),
    )(*operands)


@functools.partial(jax.jit, static_argnames=("hout", "wout", "cout"))
def autoencoder_forward(x_nchw, ops, alphas, *, hout, wout, cout):
    n, cin, hin, win = x_nchw.shape
    # NCHW -> lane-dense (N*Hin, Win*Cin); batch stacked along sublanes.
    x = jnp.transpose(x_nchw, (0, 2, 3, 1)).reshape(n * hin, win * cin)
    out = _run_pallas(x, ops, alphas)                  # (N*Hout, Wout*Cout)
    out = out.reshape(n, hout, wout, cout)
    return jnp.transpose(out, (0, 3, 1, 2))            # NCHW, like PyTorch


# --------------------------------------------------------------------------
# Synthetic parameters (torch layouts) and a plain-JAX reference for checking
# --------------------------------------------------------------------------
def init_params(key):
    ks = jax.random.split(key, 8)
    s = 0.1
    return {
        "enc_w1": jax.random.normal(ks[0], (8, 3, 5, 5), jnp.float32) * s,
        "enc_b1": jax.random.normal(ks[1], (8,), jnp.float32) * s,
        "enc_w2": jax.random.normal(ks[2], (8, 8, 5, 5), jnp.float32) * s,
        "enc_b2": jax.random.normal(ks[3], (8,), jnp.float32) * s,
        "dec_w1": jax.random.normal(ks[4], (8, 8, 6, 6), jnp.float32) * s,
        "dec_b1": jax.random.normal(ks[5], (8,), jnp.float32) * s,
        "dec_w2": jax.random.normal(ks[6], (8, 3, 6, 6), jnp.float32) * s,
        "dec_b2": jax.random.normal(ks[7], (3,), jnp.float32) * s,
        # nn.PReLU() default slope
        "alpha1": jnp.float32(0.25),
        "alpha2": jnp.float32(0.25),
        "alpha3": jnp.float32(0.25),
    }


def reference_forward(x, params):
    """Pure-JAX reference of the PyTorch AutoEncoder forward (for verification)."""
    def conv(v, w, b, stride, pad):
        out = jax.lax.conv_general_dilated(
            v, w, (stride, stride), ((pad, pad), (pad, pad)),
            dimension_numbers=("NCHW", "OIHW", "NCHW"))
        return out + b.reshape(1, -1, 1, 1)

    def deconv(v, w_t, b, stride, pad):
        k = w_t.shape[2]
        w = jnp.transpose(w_t[:, :, ::-1, ::-1], (1, 0, 2, 3))
        out = jax.lax.conv_general_dilated(
            v, w, (1, 1), ((k - 1 - pad, k - 1 - pad),) * 2,
            lhs_dilation=(stride, stride),
            dimension_numbers=("NCHW", "OIHW", "NCHW"))
        return out + b.reshape(1, -1, 1, 1)

    def prelu(v, a):
        return jnp.where(v >= 0, v, a * v)

    y = prelu(conv(x, params["enc_w1"], params["enc_b1"], 2, 2), params["alpha1"])
    y = prelu(conv(y, params["enc_w2"], params["enc_b2"], 2, 2), params["alpha2"])
    y = prelu(deconv(y, params["dec_w1"], params["dec_b1"], 2, 2), params["alpha3"])
    y = deconv(y, params["dec_w2"], params["dec_b2"], 2, 2)
    return jax.nn.sigmoid(y)


if __name__ == "__main__":
    key = jax.random.PRNGKey(0)
    kx, kp = jax.random.split(key)
    N, C, H, W = 2, 3, 16, 16
    x = jax.random.normal(kx, (N, C, H, W), jnp.float32)
    params = init_params(kp)

    ops, alphas, meta = build_operators(params, H, W, batch=N)   # one-time setup

    out = autoencoder_forward(x, ops, alphas,
                              hout=meta["hout"], wout=meta["wout"],
                              cout=meta["cout"])
    jax.block_until_ready(out)

    assert out.shape == (N, C, H, W), out.shape
    assert bool(jnp.all(jnp.isfinite(out)))
    assert bool(jnp.all((out >= 0.0) & (out <= 1.0)))            # sigmoid range

    ref = reference_forward(x, params)
    assert bool(jnp.allclose(out, ref, atol=1e-2, rtol=0.0)), \
        float(jnp.max(jnp.abs(out - ref)))

    print("KERNEL_OK")
</pallas_src>

<mosaic_0001>
module attributes {stable_mosaic.version = 11 : i64} {
  func.func @_autoencoder_kernel(%arg0: i32, %arg1: memref<32x48xf32, #tpu.memory_space<vmem>>, %arg2: memref<5x16x32xf32, #tpu.memory_space<vmem>>, %arg3: memref<5x48x64xf32, #tpu.memory_space<vmem>>, %arg4: memref<1x64xf32, #tpu.memory_space<vmem>>, %arg5: memref<5x8x16xf32, #tpu.memory_space<vmem>>, %arg6: memref<5x64x32xf32, #tpu.memory_space<vmem>>, %arg7: memref<1x32xf32, #tpu.memory_space<vmem>>, %arg8: memref<6x16x8xf32, #tpu.memory_space<vmem>>, %arg9: memref<6x32x64xf32, #tpu.memory_space<vmem>>, %arg10: memref<1x64xf32, #tpu.memory_space<vmem>>, %arg11: memref<6x32x16xf32, #tpu.memory_space<vmem>>, %arg12: memref<6x64x48xf32, #tpu.memory_space<vmem>>, %arg13: memref<1x48xf32, #tpu.memory_space<vmem>>, %arg14: memref<3xf32, #tpu.memory_space<smem>>, %arg15: memref<32x48xf32, #tpu.memory_space<vmem>>) attributes {dimension_semantics = [#tpu.dimension_semantics<arbitrary>], iteration_bounds = array<i64: 1>, scalar_prefetch = 0 : i64, scratch_operands = 0 : i64, tpu.core_type = #tpu.core_type<tc>, window_params = [{pipeline_mode = #tpu.pipeline_mode<synchronous>, transform_indices = @transform_0, window_bounds = array<i64: 32, 48>}, {pipeline_mode = #tpu.pipeline_mode<synchronous>, transform_indices = @transform_1, window_bounds = array<i64: 5, 16, 32>}, {pipeline_mode = #tpu.pipeline_mode<synchronous>, transform_indices = @transform_2, window_bounds = array<i64: 5, 48, 64>}, {pipeline_mode = #tpu.pipeline_mode<synchronous>, transform_indices = @transform_3, window_bounds = array<i64: 1, 64>}, {pipeline_mode = #tpu.pipeline_mode<synchronous>, transform_indices = @transform_4, window_bounds = array<i64: 5, 8, 16>}, {pipeline_mode = #tpu.pipeline_mode<synchronous>, transform_indices = @transform_5, window_bounds = array<i64: 5, 64, 32>}, {pipeline_mode = #tpu.pipeline_mode<synchronous>, transform_indices = @transform_6, window_bounds = array<i64: 1, 32>}, {pipeline_mode = #tpu.pipeline_mode<synchronous>, transform_indices = @transform_7, window_bounds = array<i64: 6, 16, 8>}, {pipeline_mode = #tpu.pipeline_mode<synchronous>, transform_indices = @transform_8, window_bounds = array<i64: 6, 32, 64>}, {pipeline_mode = #tpu.pipeline_mode<synchronous>, transform_indices = @transform_9, window_bounds = array<i64: 1, 64>}, {pipeline_mode = #tpu.pipeline_mode<synchronous>, transform_indices = @transform_10, window_bounds = array<i64: 6, 32, 16>}, {pipeline_mode = #tpu.pipeline_mode<synchronous>, transform_indices = @transform_11, window_bounds = array<i64: 6, 64, 48>}, {pipeline_mode = #tpu.pipeline_mode<synchronous>, transform_indices = @transform_12, window_bounds = array<i64: 1, 48>}, {transform_indices = @transform_13, window_bounds = array<i64: 3>}, {pipeline_mode = #tpu.pipeline_mode<synchronous>, transform_indices = @transform_14, window_bounds = array<i64: 32, 48>}]} {
    %c0 = arith.constant 0 : index
    %c0_0 = arith.constant 0 : index
    %0 = vector.load %arg1[%c0, %c0_0] : memref<32x48xf32, #tpu.memory_space<vmem>>, vector<32x48xf32>
    %cst = arith.constant 0.000000e+00 : f32
    %1 = vector.broadcast %cst : f32 to vector<16x64xf32>
    %c0_1 = arith.constant 0 : index
    %c0_2 = arith.constant 0 : index
    %c0_3 = arith.constant 0 : index
    %2 = vector.load %arg2[%c0_1, %c0_2, %c0_3] : memref<5x16x32xf32, #tpu.memory_space<vmem>>, vector<1x16x32xf32>
    %3 = vector.shape_cast %2 : vector<1x16x32xf32> to vector<16x32xf32>
    %cst_4 = arith.constant dense<0.000000e+00> : vector<16x48xf32>
    %4 = tpu.matmul %3, %0, %cst_4 {dimension_numbers = #tpu.dot_dimension_numbers<[1], [0], [0], [1], [0, 0, 1, 1], [], []>} : vector<16x32xf32>, vector<32x48xf32>, vector<16x48xf32> -> vector<16x48xf32>
    %c0_5 = arith.constant 0 : index
    %c0_6 = arith.constant 0 : index
    %c0_7 = arith.constant 0 : index
    %5 = vector.load %arg3[%c0_5, %c0_6, %c0_7] : memref<5x48x64xf32, #tpu.memory_space<vmem>>, vector<1x48x64xf32>
    %6 = vector.shape_cast %5 : vector<1x48x64xf32> to vector<48x64xf32>
    %cst_8 = arith.constant dense<0.000000e+00> : vector<16x64xf32>
    %7 = tpu.matmul %4, %6, %cst_8 {dimension_numbers = #tpu.dot_dimension_numbers<[1], [0], [0], [1], [0, 0, 1, 1], [], []>} : vector<16x48xf32>, vector<48x64xf32>, vector<16x64xf32> -> vector<16x64xf32>
    %8 = arith.addf %1, %7 : vector<16x64xf32>
    %c1 = arith.constant 1 : index
    %c0_9 = arith.constant 0 : index
    %c0_10 = arith.constant 0 : index
    %9 = vector.load %arg2[%c1, %c0_9, %c0_10] : memref<5x16x32xf32, #tpu.memory_space<vmem>>, vector<1x16x32xf32>
    %10 = vector.shape_cast %9 : vector<1x16x32xf32> to vector<16x32xf32>
    %cst_11 = arith.constant dense<0.000000e+00> : vector<16x48xf32>
    %11 = tpu.matmul %10, %0, %cst_11 {dimension_numbers = #tpu.dot_dimension_numbers<[1], [0], [0], [1], [0, 0, 1, 1], [], []>} : vector<16x32xf32>, vector<32x48xf32>, vector<16x48xf32> -> vector<16x48xf32>
    %c1_12 = arith.constant 1 : index
    %c0_13 = arith.constant 0 : index
    %c0_14 = arith.constant 0 : index
    %12 = vector.load %arg3[%c1_12, %c0_13, %c0_14] : memref<5x48x64xf32, #tpu.memory_space<vmem>>, vector<1x48x64xf32>
    %13 = vector.shape_cast %12 : vector<1x48x64xf32> to vector<48x64xf32>
    %cst_15 = arith.constant dense<0.000000e+00> : vector<16x64xf32>
    %14 = tpu.matmul %11, %13, %cst_15 {dimension_numbers = #tpu.dot_dimension_numbers<[1], [0], [0], [1], [0, 0, 1, 1], [], []>} : vector<16x48xf32>, vector<48x64xf32>, vector<16x64xf32> -> vector<16x64xf32>
    %15 = arith.addf %8, %14 : vector<16x64xf32>
    %c2 = arith.constant 2 : index
    %c0_16 = arith.constant 0 : index
    %c0_17 = arith.constant 0 : index
    %16 = vector.load %arg2[%c2, %c0_16, %c0_17] : memref<5x16x32xf32, #tpu.memory_space<vmem>>, vector<1x16x32xf32>
    %17 = vector.shape_cast %16 : vector<1x16x32xf32> to vector<16x32xf32>
    %cst_18 = arith.constant dense<0.000000e+00> : vector<16x48xf32>
    %18 = tpu.matmul %17, %0, %cst_18 {dimension_numbers = #tpu.dot_dimension_numbers<[1], [0], [0], [1], [0, 0, 1, 1], [], []>} : vector<16x32xf32>, vector<32x48xf32>, vector<16x48xf32> -> vector<16x48xf32>
    %c2_19 = arith.constant 2 : index
    %c0_20 = arith.constant 0 : index
    %c0_21 = arith.constant 0 : index
    %19 = vector.load %arg3[%c2_19, %c0_20, %c0_21] : memref<5x48x64xf32, #tpu.memory_space<vmem>>, vector<1x48x64xf32>
    %20 = vector.shape_cast %19 : vector<1x48x64xf32> to vector<48x64xf32>
    %cst_22 = arith.constant dense<0.000000e+00> : vector<16x64xf32>
    %21 = tpu.matmul %18, %20, %cst_22 {dimension_numbers = #tpu.dot_dimension_numbers<[1], [0], [0], [1], [0, 0, 1, 1], [], []>} : vector<16x48xf32>, vector<48x64xf32>, vector<16x64xf32> -> vector<16x64xf32>
    %22 = arith.addf %15, %21 : vector<16x64xf32>
    %c3 = arith.constant 3 : index
    %c0_23 = arith.constant 0 : index
    %c0_24 = arith.constant 0 : index
    %23 = vector.load %arg2[%c3, %c0_23, %c0_24] : memref<5x16x32xf32, #tpu.memory_space<vmem>>, vector<1x16x32xf32>
    %24 = vector.shape_cast %23 : vector<1x16x32xf32> to vector<16x32xf32>
    %cst_25 = arith.constant dense<0.000000e+00> : vector<16x48xf32>
    %25 = tpu.matmul %24, %0, %cst_25 {dimension_numbers = #tpu.dot_dimension_numbers<[1], [0], [0], [1], [0, 0, 1, 1], [], []>} : vector<16x32xf32>, vector<32x48xf32>, vector<16x48xf32> -> vector<16x48xf32>
    %c3_26 = arith.constant 3 : index
    %c0_27 = arith.constant 0 : index
    %c0_28 = arith.constant 0 : index
    %26 = vector.load %arg3[%c3_26, %c0_27, %c0_28] : memref<5x48x64xf32, #tpu.memory_space<vmem>>, vector<1x48x64xf32>
    %27 = vector.shape_cast %26 : vector<1x48x64xf32> to vector<48x64xf32>
    %cst_29 = arith.constant dense<0.000000e+00> : vector<16x64xf32>
    %28 = tpu.matmul %25, %27, %cst_29 {dimension_numbers = #tpu.dot_dimension_numbers<[1], [0], [0], [1], [0, 0, 1, 1], [], []>} : vector<16x48xf32>, vector<48x64xf32>, vector<16x64xf32> -> vector<16x64xf32>
    %29 = arith.addf %22, %28 : vector<16x64xf32>
    %c4 = arith.constant 4 : index
    %c0_30 = arith.constant 0 : index
    %c0_31 = arith.constant 0 : index
    %30 = vector.load %arg2[%c4, %c0_30, %c0_31] : memref<5x16x32xf32, #tpu.memory_space<vmem>>, vector<1x16x32xf32>
    %31 = vector.shape_cast %30 : vector<1x16x32xf32> to vector<16x32xf32>
    %cst_32 = arith.constant dense<0.000000e+00> : vector<16x48xf32>
    %32 = tpu.matmul %31, %0, %cst_32 {dimension_numbers = #tpu.dot_dimension_numbers<[1], [0], [0], [1], [0, 0, 1, 1], [], []>} : vector<16x32xf32>, vector<32x48xf32>, vector<16x48xf32> -> vector<16x48xf32>
    %c4_33 = arith.constant 4 : index
    %c0_34 = arith.constant 0 : index
    %c0_35 = arith.constant 0 : index
    %33 = vector.load %arg3[%c4_33, %c0_34, %c0_35] : memref<5x48x64xf32, #tpu.memory_space<vmem>>, vector<1x48x64xf32>
    %34 = vector.shape_cast %33 : vector<1x48x64xf32> to vector<48x64xf32>
    %cst_36 = arith.constant dense<0.000000e+00> : vector<16x64xf32>
    %35 = tpu.matmul %32, %34, %cst_36 {dimension_numbers = #tpu.dot_dimension_numbers<[1], [0], [0], [1], [0, 0, 1, 1], [], []>} : vector<16x48xf32>, vector<48x64xf32>, vector<16x64xf32> -> vector<16x64xf32>
    %36 = arith.addf %29, %35 : vector<16x64xf32>
    %c0_37 = arith.constant 0 : index
    %c0_38 = arith.constant 0 : index
    %37 = vector.load %arg4[%c0_37, %c0_38] : memref<1x64xf32, #tpu.memory_space<vmem>>, vector<1x64xf32>
    %38 = vector.broadcast %37 : vector<1x64xf32> to vector<16x64xf32>
    %39 = arith.addf %36, %38 : vector<16x64xf32>
    %c0_39 = arith.constant 0 : index
    %40 = memref.load %arg14[%c0_39] : memref<3xf32, #tpu.memory_space<smem>>
    %cst_40 = arith.constant 0.000000e+00 : f32
    %41 = vector.broadcast %cst_40 : f32 to vector<16x64xf32>
    %42 = arith.cmpf oge, %39, %41 : vector<16x64xf32>
    %43 = vector.broadcast %40 : f32 to vector<16x64xf32>
    %44 = arith.mulf %43, %39 : vector<16x64xf32>
    %45 = arith.select %42, %39, %44 : vector<16x64xi1>, vector<16x64xf32>
    %cst_41 = arith.constant 0.000000e+00 : f32
    %46 = vector.broadcast %cst_41 : f32 to vector<8x32xf32>
    %c0_42 = arith.constant 0 : index
    %c0_43 = arith.constant 0 : index
    %c0_44 = arith.constant 0 : index
    %47 = vector.load %arg5[%c0_42, %c0_43, %c0_44] : memref<5x8x16xf32, #tpu.memory_space<vmem>>, vector<1x8x16xf32>
    %48 = vector.shape_cast %47 : vector<1x8x16xf32> to vector<8x16xf32>
    %cst_45 = arith.constant dense<0.000000e+00> : vector<8x64xf32>
    %49 = tpu.matmul %48, %45, %cst_45 {dimension_numbers = #tpu.dot_dimension_numbers<[1], [0], [0], [1], [0, 0, 1, 1], [], []>} : vector<8x16xf32>, vector<16x64xf32>, vector<8x64xf32> -> vector<8x64xf32>
    %c0_46 = arith.constant 0 : index
    %c0_47 = arith.constant 0 : index
    %c0_48 = arith.constant 0 : index
    %50 = vector.load %arg6[%c0_46, %c0_47, %c0_48] : memref<5x64x32xf32, #tpu.memory_space<vmem>>, vector<1x64x32xf32>
    %51 = vector.shape_cast %50 : vector<1x64x32xf32> to vector<64x32xf32>
    %cst_49 = arith.constant dense<0.000000e+00> : vector<8x32xf32>
    %52 = tpu.matmul %49, %51, %cst_49 {dimension_numbers = #tpu.dot_dimension_numbers<[1], [0], [0], [1], [0, 0, 1, 1], [], []>} : vector<8x64xf32>, vector<64x32xf32>, vector<8x32xf32> -> vector<8x32xf32>
    %53 = arith.addf %46, %52 : vector<8x32xf32>
    %c1_50 = arith.constant 1 : index
    %c0_51 = arith.constant 0 : index
    %c0_52 = arith.constant 0 : index
    %54 = vector.load %arg5[%c1_50, %c0_51, %c0_52] : memref<5x8x16xf32, #tpu.memory_space<vmem>>, vector<1x8x16xf32>
    %55 = vector.shape_cast %54 : vector<1x8x16xf32> to vector<8x16xf32>
    %cst_53 = arith.constant dense<0.000000e+00> : vector<8x64xf32>
    %56 = tpu.matmul %55, %45, %cst_53 {dimension_numbers = #tpu.dot_dimension_numbers<[1], [0], [0], [1], [0, 0, 1, 1], [], []>} : vector<8x16xf32>, vector<16x64xf32>, vector<8x64xf32> -> vector<8x64xf32>
    %c1_54 = arith.constant 1 : index
    %c0_55 = arith.constant 0 : index
    %c0_56 = arith.constant 0 : index
    %57 = vector.load %arg6[%c1_54, %c0_55, %c0_56] : memref<5x64x32xf32, #tpu.memory_space<vmem>>, vector<1x64x32xf32>
    %58 = vector.shape_cast %57 : vector<1x64x32xf32> to vector<64x32xf32>
    %cst_57 = arith.constant dense<0.000000e+00> : vector<8x32xf32>
    %59 = tpu.matmul %56, %58, %cst_57 {dimension_numbers = #tpu.dot_dimension_numbers<[1], [0], [0], [1], [0, 0, 1, 1], [], []>} : vector<8x64xf32>, vector<64x32xf32>, vector<8x32xf32> -> vector<8x32xf32>
    %60 = arith.addf %53, %59 : vector<8x32xf32>
    %c2_58 = arith.constant 2 : index
    %c0_59 = arith.constant 0 : index
    %c0_60 = arith.constant 0 : index
    %61 = vector.load %arg5[%c2_58, %c0_59, %c0_60] : memref<5x8x16xf32, #tpu.memory_space<vmem>>, vector<1x8x16xf32>
    %62 = vector.shape_cast %61 : vector<1x8x16xf32> to vector<8x16xf32>
    %cst_61 = arith.constant dense<0.000000e+00> : vector<8x64xf32>
    %63 = tpu.matmul %62, %45, %cst_61 {dimension_numbers = #tpu.dot_dimension_numbers<[1], [0], [0], [1], [0, 0, 1, 1], [], []>} : vector<8x16xf32>, vector<16x64xf32>, vector<8x64xf32> -> vector<8x64xf32>
    %c2_62 = arith.constant 2 : index
    %c0_63 = arith.constant 0 : index
    %c0_64 = arith.constant 0 : index
    %64 = vector.load %arg6[%c2_62, %c0_63, %c0_64] : memref<5x64x32xf32, #tpu.memory_space<vmem>>, vector<1x64x32xf32>
    %65 = vector.shape_cast %64 : vector<1x64x32xf32> to vector<64x32xf32>
    %cst_65 = arith.constant dense<0.000000e+00> : vector<8x32xf32>
    %66 = tpu.matmul %63, %65, %cst_65 {dimension_numbers = #tpu.dot_dimension_numbers<[1], [0], [0], [1], [0, 0, 1, 1], [], []>} : vector<8x64xf32>, vector<64x32xf32>, vector<8x32xf32> -> vector<8x32xf32>
    %67 = arith.addf %60, %66 : vector<8x32xf32>
    %c3_66 = arith.constant 3 : index
    %c0_67 = arith.constant 0 : index
    %c0_68 = arith.constant 0 : index
    %68 = vector.load %arg5[%c3_66, %c0_67, %c0_68] : memref<5x8x16xf32, #tpu.memory_space<vmem>>, vector<1x8x16xf32>
    %69 = vector.shape_cast %68 : vector<1x8x16xf32> to vector<8x16xf32>
    %cst_69 = arith.constant dense<0.000000e+00> : vector<8x64xf32>
    %70 = tpu.matmul %69, %45, %cst_69 {dimension_numbers = #tpu.dot_dimension_numbers<[1], [0], [0], [1], [0, 0, 1, 1], [], []>} : vector<8x16xf32>, vector<16x64xf32>, vector<8x64xf32> -> vector<8x64xf32>
    %c3_70 = arith.constant 3 : index
    %c0_71 = arith.constant 0 : index
    %c0_72 = arith.constant 0 : index
    %71 = vector.load %arg6[%c3_70, %c0_71, %c0_72] : memref<5x64x32xf32, #tpu.memory_space<vmem>>, vector<1x64x32xf32>
    %72 = vector.shape_cast %71 : vector<1x64x32xf32> to vector<64x32xf32>
    %cst_73 = arith.constant dense<0.000000e+00> : vector<8x32xf32>
    %73 = tpu.matmul %70, %72, %cst_73 {dimension_numbers = #tpu.dot_dimension_numbers<[1], [0], [0], [1], [0, 0, 1, 1], [], []>} : vector<8x64xf32>, vector<64x32xf32>, vector<8x32xf32> -> vector<8x32xf32>
    %74 = arith.addf %67, %73 : vector<8x32xf32>
    %c4_74 = arith.constant 4 : index
    %c0_75 = arith.constant 0 : index
    %c0_76 = arith.constant 0 : index
    %75 = vector.load %arg5[%c4_74, %c0_75, %c0_76] : memref<5x8x16xf32, #tpu.memory_space<vmem>>, vector<1x8x16xf32>
    %76 = vector.shape_cast %75 : vector<1x8x16xf32> to vector<8x16xf32>
    %cst_77 = arith.constant dense<0.000000e+00> : vector<8x64xf32>
    %77 = tpu.matmul %76, %45, %cst_77 {dimension_numbers = #tpu.dot_dimension_numbers<[1], [0], [0], [1], [0, 0, 1, 1], [], []>} : vector<8x16xf32>, vector<16x64xf32>, vector<8x64xf32> -> vector<8x64xf32>
    %c4_78 = arith.constant 4 : index
    %c0_79 = arith.constant 0 : index
    %c0_80 = arith.constant 0 : index
    %78 = vector.load %arg6[%c4_78, %c0_79, %c0_80] : memref<5x64x32xf32, #tpu.memory_space<vmem>>, vector<1x64x32xf32>
    %79 = vector.shape_cast %78 : vector<1x64x32xf32> to vector<64x32xf32>
    %cst_81 = arith.constant dense<0.000000e+00> : vector<8x32xf32>
    %80 = tpu.matmul %77, %79, %cst_81 {dimension_numbers = #tpu.dot_dimension_numbers<[1], [0], [0], [1], [0, 0, 1, 1], [], []>} : vector<8x64xf32>, vector<64x32xf32>, vector<8x32xf32> -> vector<8x32xf32>
    %81 = arith.addf %74, %80 : vector<8x32xf32>
    %c0_82 = arith.constant 0 : index
    %c0_83 = arith.constant 0 : index
    %82 = vector.load %arg7[%c0_82, %c0_83] : memref<1x32xf32, #tpu.memory_space<vmem>>, vector<1x32xf32>
    %83 = vector.broadcast %82 : vector<1x32xf32> to vector<8x32xf32>
    %84 = arith.addf %81, %83 : vector<8x32xf32>
    %c1_84 = arith.constant 1 : index
    %85 = memref.load %arg14[%c1_84] : memref<3xf32, #tpu.memory_space<smem>>
    %cst_85 = arith.constant 0.000000e+00 : f32
    %86 = vector.broadcast %cst_85 : f32 to vector<8x32xf32>
    %87 = arith.cmpf oge, %84, %86 : vector<8x32xf32>
    %88 = vector.broadcast %85 : f32 to vector<8x32xf32>
    %89 = arith.mulf %88, %84 : vector<8x32xf32>
    %90 = arith.select %87, %84, %89 : vector<8x32xi1>, vector<8x32xf32>
    %cst_86 = arith.constant 0.000000e+00 : f32
    %91 = vector.broadcast %cst_86 : f32 to vector<16x64xf32>
    %c0_87 = arith.constant 0 : index
    %c0_88 = arith.constant 0 : index
    %c0_89 = arith.constant 0 : index
    %92 = vector.load %arg8[%c0_87, %c0_88, %c0_89] : memref<6x16x8xf32, #tpu.memory_space<vmem>>, vector<1x16x8xf32>
    %93 = vector.shape_cast %92 : vector<1x16x8xf32> to vector<16x8xf32>
    %cst_90 = arith.constant dense<0.000000e+00> : vector<16x32xf32>
    %94 = tpu.matmul %93, %90, %cst_90 {dimension_numbers = #tpu.dot_dimension_numbers<[1], [0], [0], [1], [0, 0, 1, 1], [], []>} : vector<16x8xf32>, vector<8x32xf32>, vector<16x32xf32> -> vector<16x32xf32>
    %c0_91 = arith.constant 0 : index
    %c0_92 = arith.constant 0 : index
    %c0_93 = arith.constant 0 : index
    %95 = vector.load %arg9[%c0_91, %c0_92, %c0_93] : memref<6x32x64xf32, #tpu.memory_space<vmem>>, vector<1x32x64xf32>
    %96 = vector.shape_cast %95 : vector<1x32x64xf32> to vector<32x64xf32>
    %cst_94 = arith.constant dense<0.000000e+00> : vector<16x64xf32>
    %97 = tpu.matmul %94, %96, %cst_94 {dimension_numbers = #tpu.dot_dimension_numbers<[1], [0], [0], [1], [0, 0, 1, 1], [], []>} : vector<16x32xf32>, vector<32x64xf32>, vector<16x64xf32> -> vector<16x64xf32>
    %98 = arith.addf %91, %97 : vector<16x64xf32>
    %c1_95 = arith.constant 1 : index
    %c0_96 = arith.constant 0 : index
    %c0_97 = arith.constant 0 : index
    %99 = vector.load %arg8[%c1_95, %c0_96, %c0_97] : memref<6x16x8xf32, #tpu.memory_space<vmem>>, vector<1x16x8xf32>
    %100 = vector.shape_cast %99 : vector<1x16x8xf32> to vector<16x8xf32>
    %cst_98 = arith.constant dense<0.000000e+00> : vector<16x32xf32>
    %101 = tpu.matmul %100, %90, %cst_98 {dimension_numbers = #tpu.dot_dimension_numbers<[1], [0], [0], [1], [0, 0, 1, 1], [], []>} : vector<16x8xf32>, vector<8x32xf32>, vector<16x32xf32> -> vector<16x32xf32>
    %c1_99 = arith.constant 1 : index
    %c0_100 = arith.constant 0 : index
    %c0_101 = arith.constant 0 : index
    %102 = vector.load %arg9[%c1_99, %c0_100, %c0_101] : memref<6x32x64xf32, #tpu.memory_space<vmem>>, vector<1x32x64xf32>
    %103 = vector.shape_cast %102 : vector<1x32x64xf32> to vector<32x64xf32>
    %cst_102 = arith.constant dense<0.000000e+00> : vector<16x64xf32>
    %104 = tpu.matmul %101, %103, %cst_102 {dimension_numbers = #tpu.dot_dimension_numbers<[1], [0], [0], [1], [0, 0, 1, 1], [], []>} : vector<16x32xf32>, vector<32x64xf32>, vector<16x64xf32> -> vector<16x64xf32>
    %105 = arith.addf %98, %104 : vector<16x64xf32>
    %c2_103 = arith.constant 2 : index
    %c0_104 = arith.constant 0 : index
    %c0_105 = arith.constant 0 : index
    %106 = vector.load %arg8[%c2_103, %c0_104, %c0_105] : memref<6x16x8xf32, #tpu.memory_space<vmem>>, vector<1x16x8xf32>
    %107 = vector.shape_cast %106 : vector<1x16x8xf32> to vector<16x8xf32>
    %cst_106 = arith.constant dense<0.000000e+00> : vector<16x32xf32>
    %108 = tpu.matmul %107, %90, %cst_106 {dimension_numbers = #tpu.dot_dimension_numbers<[1], [0], [0], [1], [0, 0, 1, 1], [], []>} : vector<16x8xf32>, vector<8x32xf32>, vector<16x32xf32> -> vector<16x32xf32>
    %c2_107 = arith.constant 2 : index
    %c0_108 = arith.constant 0 : index
    %c0_109 = arith.constant 0 : index
    %109 = vector.load %arg9[%c2_107, %c0_108, %c0_109] : memref<6x32x64xf32, #tpu.memory_space<vmem>>, vector<1x32x64xf32>
    %110 = vector.shape_cast %109 : vector<1x32x64xf32> to vector<32x64xf32>
    %cst_110 = arith.constant dense<0.000000e+00> : vector<16x64xf32>
    %111 = tpu.matmul %108, %110, %cst_110 {dimension_numbers = #tpu.dot_dimension_numbers<[1], [0], [0], [1], [0, 0, 1, 1], [], []>} : vector<16x32xf32>, vector<32x64xf32>, vector<16x64xf32> -> vector<16x64xf32>
    %112 = arith.addf %105, %111 : vector<16x64xf32>
    %c3_111 = arith.constant 3 : index
    %c0_112 = arith.constant 0 : index
    %c0_113 = arith.constant 0 : index
    %113 = vector.load %arg8[%c3_111, %c0_112, %c0_113] : memref<6x16x8xf32, #tpu.memory_space<vmem>>, vector<1x16x8xf32>
    %114 = vector.shape_cast %113 : vector<1x16x8xf32> to vector<16x8xf32>
    %cst_114 = arith.constant dense<0.000000e+00> : vector<16x32xf32>
    %115 = tpu.matmul %114, %90, %cst_114 {dimension_numbers = #tpu.dot_dimension_numbers<[1], [0], [0], [1], [0, 0, 1, 1], [], []>} : vector<16x8xf32>, vector<8x32xf32>, vector<16x32xf32> -> vector<16x32xf32>
    %c3_115 = arith.constant 3 : index
    %c0_116 = arith.constant 0 : index
    %c0_117 = arith.constant 0 : index
    %116 = vector.load %arg9[%c3_115, %c0_116, %c0_117] : memref<6x32x64xf32, #tpu.memory_space<vmem>>, vector<1x32x64xf32>
    %117 = vector.shape_cast %116 : vector<1x32x64xf32> to vector<32x64xf32>
    %cst_118 = arith.constant dense<0.000000e+00> : vector<16x64xf32>
    %118 = tpu.matmul %115, %117, %cst_118 {dimension_numbers = #tpu.dot_dimension_numbers<[1], [0], [0], [1], [0, 0, 1, 1], [], []>} : vector<16x32xf32>, vector<32x64xf32>, vector<16x64xf32> -> vector<16x64xf32>
    %119 = arith.addf %112, %118 : vector<16x64xf32>
    %c4_119 = arith.constant 4 : index
    %c0_120 = arith.constant 0 : index
    %c0_121 = arith.constant 0 : index
    %120 = vector.load %arg8[%c4_119, %c0_120, %c0_121] : memref<6x16x8xf32, #tpu.memory_space<vmem>>, vector<1x16x8xf32>
    %121 = vector.shape_cast %120 : vector<1x16x8xf32> to vector<16x8xf32>
    %cst_122 = arith.constant dense<0.000000e+00> : vector<16x32xf32>
    %122 = tpu.matmul %121, %90, %cst_122 {dimension_numbers = #tpu.dot_dimension_numbers<[1], [0], [0], [1], [0, 0, 1, 1], [], []>} : vector<16x8xf32>, vector<8x32xf32>, vector<16x32xf32> -> vector<16x32xf32>
    %c4_123 = arith.constant 4 : index
    %c0_124 = arith.constant 0 : index
    %c0_125 = arith.constant 0 : index
    %123 = vector.load %arg9[%c4_123, %c0_124, %c0_125] : memref<6x32x64xf32, #tpu.memory_space<vmem>>, vector<1x32x64xf32>
    %124 = vector.shape_cast %123 : vector<1x32x64xf32> to vector<32x64xf32>
    %cst_126 = arith.constant dense<0.000000e+00> : vector<16x64xf32>
    %125 = tpu.matmul %122, %124, %cst_126 {dimension_numbers = #tpu.dot_dimension_numbers<[1], [0], [0], [1], [0, 0, 1, 1], [], []>} : vector<16x32xf32>, vector<32x64xf32>, vector<16x64xf32> -> vector<16x64xf32>
    %126 = arith.addf %119, %125 : vector<16x64xf32>
    %c5 = arith.constant 5 : index
    %c0_127 = arith.constant 0 : index
    %c0_128 = arith.constant 0 : index
    %127 = vector.load %arg8[%c5, %c0_127, %c0_128] : memref<6x16x8xf32, #tpu.memory_space<vmem>>, vector<1x16x8xf32>
    %128 = vector.shape_cast %127 : vector<1x16x8xf32> to vector<16x8xf32>
    %cst_129 = arith.constant dense<0.000000e+00> : vector<16x32xf32>
    %129 = tpu.matmul %128, %90, %cst_129 {dimension_numbers = #tpu.dot_dimension_numbers<[1], [0], [0], [1], [0, 0, 1, 1], [], []>} : vector<16x8xf32>, vector<8x32xf32>, vector<16x32xf32> -> vector<16x32xf32>
    %c5_130 = arith.constant 5 : index
    %c0_131 = arith.constant 0 : index
    %c0_132 = arith.constant 0 : index
    %130 = vector.load %arg9[%c5_130, %c0_131, %c0_132] : memref<6x32x64xf32, #tpu.memory_space<vmem>>, vector<1x32x64xf32>
    %131 = vector.shape_cast %130 : vector<1x32x64xf32> to vector<32x64xf32>
    %cst_133 = arith.constant dense<0.000000e+00> : vector<16x64xf32>
    %132 = tpu.matmul %129, %131, %cst_133 {dimension_numbers = #tpu.dot_dimension_numbers<[1], [0], [0], [1], [0, 0, 1, 1], [], []>} : vector<16x32xf32>, vector<32x64xf32>, vector<16x64xf32> -> vector<16x64xf32>
    %133 = arith.addf %126, %132 : vector<16x64xf32>
    %c0_134 = arith.constant 0 : index
    %c0_135 = arith.constant 0 : index
    %134 = vector.load %arg10[%c0_134, %c0_135] : memref<1x64xf32, #tpu.memory_space<vmem>>, vector<1x64xf32>
    %135 = vector.broadcast %134 : vector<1x64xf32> to vector<16x64xf32>
    %136 = arith.addf %133, %135 : vector<16x64xf32>
    %c2_136 = arith.constant 2 : index
    %137 = memref.load %arg14[%c2_136] : memref<3xf32, #tpu.memory_space<smem>>
    %cst_137 = arith.constant 0.000000e+00 : f32
    %138 = vector.broadcast %cst_137 : f32 to vector<16x64xf32>
    %139 = arith.cmpf oge, %136, %138 : vector<16x64xf32>
    %140 = vector.broadcast %137 : f32 to vector<16x64xf32>
    %141 = arith.mulf %140, %136 : vector<16x64xf32>
    %142 = arith.select %139, %136, %141 : vector<16x64xi1>, vector<16x64xf32>
    %cst_138 = arith.constant 0.000000e+00 : f32
    %143 = vector.broadcast %cst_138 : f32 to vector<32x48xf32>
    %c0_139 = arith.constant 0 : index
    %c0_140 = arith.constant 0 : index
    %c0_141 = arith.constant 0 : index
    %144 = vector.load %arg11[%c0_139, %c0_140, %c0_141] : memref<6x32x16xf32, #tpu.memory_space<vmem>>, vector<1x32x16xf32>
    %145 = vector.shape_cast %144 : vector<1x32x16xf32> to vector<32x16xf32>
    %cst_142 = arith.constant dense<0.000000e+00> : vector<32x64xf32>
    %146 = tpu.matmul %145, %142, %cst_142 {dimension_numbers = #tpu.dot_dimension_numbers<[1], [0], [0], [1], [0, 0, 1, 1], [], []>} : vector<32x16xf32>, vector<16x64xf32>, vector<32x64xf32> -> vector<32x64xf32>
    %c0_143 = arith.constant 0 : index
    %c0_144 = arith.constant 0 : index
    %c0_145 = arith.constant 0 : index
    %147 = vector.load %arg12[%c0_143, %c0_144, %c0_145] : memref<6x64x48xf32, #tpu.memory_space<vmem>>, vector<1x64x48xf32>
    %148 = vector.shape_cast %147 : vector<1x64x48xf32> to vector<64x48xf32>
    %cst_146 = arith.constant dense<0.000000e+00> : vector<32x48xf32>
    %149 = tpu.matmul %146, %148, %cst_146 {dimension_numbers = #tpu.dot_dimension_numbers<[1], [0], [0], [1], [0, 0, 1, 1], [], []>} : vector<32x64xf32>, vector<64x48xf32>, vector<32x48xf32> -> vector<32x48xf32>
    %150 = arith.addf %143, %149 : vector<32x48xf32>
    %c1_147 = arith.constant 1 : index
    %c0_148 = arith.constant 0 : index
    %c0_149 = arith.constant 0 : index
    %151 = vector.load %arg11[%c1_147, %c0_148, %c0_149] : memref<6x32x16xf32, #tpu.memory_space<vmem>>, vector<1x32x16xf32>
    %152 = vector.shape_cast %151 : vector<1x32x16xf32> to vector<32x16xf32>
    %cst_150 = arith.constant dense<0.000000e+00> : vector<32x64xf32>
    %153 = tpu.matmul %152, %142, %cst_150 {dimension_numbers = #tpu.dot_dimension_numbers<[1], [0], [0], [1], [0, 0, 1, 1], [], []>} : vector<32x16xf32>, vector<16x64xf32>, vector<32x64xf32> -> vector<32x64xf32>
    %c1_151 = arith.constant 1 : index
    %c0_152 = arith.constant 0 : index
    %c0_153 = arith.constant 0 : index
    %154 = vector.load %arg12[%c1_151, %c0_152, %c0_153] : memref<6x64x48xf32, #tpu.memory_space<vmem>>, vector<1x64x48xf32>
    %155 = vector.shape_cast %154 : vector<1x64x48xf32> to vector<64x48xf32>
    %cst_154 = arith.constant dense<0.000000e+00> : vector<32x48xf32>
    %156 = tpu.matmul %153, %155, %cst_154 {dimension_numbers = #tpu.dot_dimension_numbers<[1], [0], [0], [1], [0, 0, 1, 1], [], []>} : vector<32x64xf32>, vector<64x48xf32>, vector<32x48xf32> -> vector<32x48xf32>
    %157 = arith.addf %150, %156 : vector<32x48xf32>
    %c2_155 = arith.constant 2 : index
    %c0_156 = arith.constant 0 : index
    %c0_157 = arith.constant 0 : index
    %158 = vector.load %arg11[%c2_155, %c0_156, %c0_157] : memref<6x32x16xf32, #tpu.memory_space<vmem>>, vector<1x32x16xf32>
    %159 = vector.shape_cast %158 : vector<1x32x16xf32> to vector<32x16xf32>
    %cst_158 = arith.constant dense<0.000000e+00> : vector<32x64xf32>
    %160 = tpu.matmul %159, %142, %cst_158 {dimension_numbers = #tpu.dot_dimension_numbers<[1], [0], [0], [1], [0, 0, 1, 1], [], []>} : vector<32x16xf32>, vector<16x64xf32>, vector<32x64xf32> -> vector<32x64xf32>
    %c2_159 = arith.constant 2 : index
    %c0_160 = arith.constant 0 : index
    %c0_161 = arith.constant 0 : index
    %161 = vector.load %arg12[%c2_159, %c0_160, %c0_161] : memref<6x64x48xf32, #tpu.memory_space<vmem>>, vector<1x64x48xf32>
    %162 = vector.shape_cast %161 : vector<1x64x48xf32> to vector<64x48xf32>
    %cst_162 = arith.constant dense<0.000000e+00> : vector<32x48xf32>
    %163 = tpu.matmul %160, %162, %cst_162 {dimension_numbers = #tpu.dot_dimension_numbers<[1], [0], [0], [1], [0, 0, 1, 1], [], []>} : vector<32x64xf32>, vector<64x48xf32>, vector<32x48xf32> -> vector<32x48xf32>
    %164 = arith.addf %157, %163 : vector<32x48xf32>
    %c3_163 = arith.constant 3 : index
    %c0_164 = arith.constant 0 : index
    %c0_165 = arith.constant 0 : index
    %165 = vector.load %arg11[%c3_163, %c0_164, %c0_165] : memref<6x32x16xf32, #tpu.memory_space<vmem>>, vector<1x32x16xf32>
    %166 = vector.shape_cast %165 : vector<1x32x16xf32> to vector<32x16xf32>
    %cst_166 = arith.constant dense<0.000000e+00> : vector<32x64xf32>
    %167 = tpu.matmul %166, %142, %cst_166 {dimension_numbers = #tpu.dot_dimension_numbers<[1], [0], [0], [1], [0, 0, 1, 1], [], []>} : vector<32x16xf32>, vector<16x64xf32>, vector<32x64xf32> -> vector<32x64xf32>
    %c3_167 = arith.constant 3 : index
    %c0_168 = arith.constant 0 : index
    %c0_169 = arith.constant 0 : index
    %168 = vector.load %arg12[%c3_167, %c0_168, %c0_169] : memref<6x64x48xf32, #tpu.memory_space<vmem>>, vector<1x64x48xf32>
    %169 = vector.shape_cast %168 : vector<1x64x48xf32> to vector<64x48xf32>
    %cst_170 = arith.constant dense<0.000000e+00> : vector<32x48xf32>
    %170 = tpu.matmul %167, %169, %cst_170 {dimension_numbers = #tpu.dot_dimension_numbers<[1], [0], [0], [1], [0, 0, 1, 1], [], []>} : vector<32x64xf32>, vector<64x48xf32>, vector<32x48xf32> -> vector<32x48xf32>
    %171 = arith.addf %164, %170 : vector<32x48xf32>
    %c4_171 = arith.constant 4 : index
    %c0_172 = arith.constant 0 : index
    %c0_173 = arith.constant 0 : index
    %172 = vector.load %arg11[%c4_171, %c0_172, %c0_173] : memref<6x32x16xf32, #tpu.memory_space<vmem>>, vector<1x32x16xf32>
    %173 = vector.shape_cast %172 : vector<1x32x16xf32> to vector<32x16xf32>
    %cst_174 = arith.constant dense<0.000000e+00> : vector<32x64xf32>
    %174 = tpu.matmul %173, %142, %cst_174 {dimension_numbers = #tpu.dot_dimension_numbers<[1], [0], [0], [1], [0, 0, 1, 1], [], []>} : vector<32x16xf32>, vector<16x64xf32>, vector<32x64xf32> -> vector<32x64xf32>
    %c4_175 = arith.constant 4 : index
    %c0_176 = arith.constant 0 : index
    %c0_177 = arith.constant 0 : index
    %175 = vector.load %arg12[%c4_175, %c0_176, %c0_177] : memref<6x64x48xf32, #tpu.memory_space<vmem>>, vector<1x64x48xf32>
    %176 = vector.shape_cast %175 : vector<1x64x48xf32> to vector<64x48xf32>
    %cst_178 = arith.constant dense<0.000000e+00> : vector<32x48xf32>
    %177 = tpu.matmul %174, %176, %cst_178 {dimension_numbers = #tpu.dot_dimension_numbers<[1], [0], [0], [1], [0, 0, 1, 1], [], []>} : vector<32x64xf32>, vector<64x48xf32>, vector<32x48xf32> -> vector<32x48xf32>
    %178 = arith.addf %171, %177 : vector<32x48xf32>
    %c5_179 = arith.constant 5 : index
    %c0_180 = arith.constant 0 : index
    %c0_181 = arith.constant 0 : index
    %179 = vector.load %arg11[%c5_179, %c0_180, %c0_181] : memref<6x32x16xf32, #tpu.memory_space<vmem>>, vector<1x32x16xf32>
    %180 = vector.shape_cast %179 : vector<1x32x16xf32> to vector<32x16xf32>
    %cst_182 = arith.constant dense<0.000000e+00> : vector<32x64xf32>
    %181 = tpu.matmul %180, %142, %cst_182 {dimension_numbers = #tpu.dot_dimension_numbers<[1], [0], [0], [1], [0, 0, 1, 1], [], []>} : vector<32x16xf32>, vector<16x64xf32>, vector<32x64xf32> -> vector<32x64xf32>
    %c5_183 = arith.constant 5 : index
    %c0_184 = arith.constant 0 : index
    %c0_185 = arith.constant 0 : index
    %182 = vector.load %arg12[%c5_183, %c0_184, %c0_185] : memref<6x64x48xf32, #tpu.memory_space<vmem>>, vector<1x64x48xf32>
    %183 = vector.shape_cast %182 : vector<1x64x48xf32> to vector<64x48xf32>
    %cst_186 = arith.constant dense<0.000000e+00> : vector<32x48xf32>
    %184 = tpu.matmul %181, %183, %cst_186 {dimension_numbers = #tpu.dot_dimension_numbers<[1], [0], [0], [1], [0, 0, 1, 1], [], []>} : vector<32x64xf32>, vector<64x48xf32>, vector<32x48xf32> -> vector<32x48xf32>
    %185 = arith.addf %178, %184 : vector<32x48xf32>
    %c0_187 = arith.constant 0 : index
    %c0_188 = arith.constant 0 : index
    %186 = vector.load %arg13[%c0_187, %c0_188] : memref<1x48xf32, #tpu.memory_space<vmem>>, vector<1x48xf32>
    %187 = vector.broadcast %186 : vector<1x48xf32> to vector<32x48xf32>
    %188 = arith.addf %185, %187 : vector<32x48xf32>
    %cst_189 = arith.constant 0.000000e+00 : f32
    %189 = vector.broadcast %cst_189 : f32 to vector<32x48xf32>
    %190 = arith.subf %189, %188 : vector<32x48xf32>
    %191 = math.exp %190 : vector<32x48xf32>
    %cst_190 = arith.constant 1.000000e+00 : f32
    %192 = vector.broadcast %cst_190 : f32 to vector<32x48xf32>
    %193 = arith.addf %192, %191 : vector<32x48xf32>
    %cst_191 = arith.constant 1.000000e+00 : f32
    %194 = vector.broadcast %cst_191 : f32 to vector<32x48xf32>
    %195 = arith.divf %194, %193 : vector<32x48xf32>
    %c0_192 = arith.constant 0 : index
    %c0_193 = arith.constant 0 : index
    %196 = vector.load %arg15[%c0_192, %c0_193] : memref<32x48xf32, #tpu.memory_space<vmem>>, vector<32x48xf32>
    tpu.vector_store %arg15[%c0_192, %c0_193], %195 {strides = array<i32>} : memref<32x48xf32, #tpu.memory_space<vmem>>, vector<32x48xf32>,
    return
  }
  func.func @transform_0(%arg0: i32) -> (i32, i32) {
    %c0_i32 = arith.constant 0 : i32
    %c0_i32_0 = arith.constant 0 : i32
    %c0_i32_1 = arith.constant 0 : i32
    return %c0_i32, %c0_i32_0 : i32, i32
  }
  func.func @transform_1(%arg0: i32) -> (i32, i32, i32) {
    %c0_i32 = arith.constant 0 : i32
    %c0_i32_0 = arith.constant 0 : i32
    %c0_i32_1 = arith.constant 0 : i32
    %c0_i32_2 = arith.constant 0 : i32
    return %c0_i32, %c0_i32_0, %c0_i32_1 : i32, i32, i32
  }
  func.func @transform_2(%arg0: i32) -> (i32, i32, i32) {
    %c0_i32 = arith.constant 0 : i32
    %c0_i32_0 = arith.constant 0 : i32
    %c0_i32_1 = arith.constant 0 : i32
    %c0_i32_2 = arith.constant 0 : i32
    return %c0_i32, %c0_i32_0, %c0_i32_1 : i32, i32, i32
  }
  func.func @transform_3(%arg0: i32) -> (i32, i32) {
    %c0_i32 = arith.constant 0 : i32
    %c0_i32_0 = arith.constant 0 : i32
    %c0_i32_1 = arith.constant 0 : i32
    return %c0_i32, %c0_i32_0 : i32, i32
  }
  func.func @transform_4(%arg0: i32) -> (i32, i32, i32) {
    %c0_i32 = arith.constant 0 : i32
    %c0_i32_0 = arith.constant 0 : i32
    %c0_i32_1 = arith.constant 0 : i32
    %c0_i32_2 = arith.constant 0 : i32
    return %c0_i32, %c0_i32_0, %c0_i32_1 : i32, i32, i32
  }
  func.func @transform_5(%arg0: i32) -> (i32, i32, i32) {
    %c0_i32 = arith.constant 0 : i32
    %c0_i32_0 = arith.constant 0 : i32
    %c0_i32_1 = arith.constant 0 : i32
    %c0_i32_2 = arith.constant 0 : i32
    return %c0_i32, %c0_i32_0, %c0_i32_1 : i32, i32, i32
  }
  func.func @transform_6(%arg0: i32) -> (i32, i32) {
    %c0_i32 = arith.constant 0 : i32
    %c0_i32_0 = arith.constant 0 : i32
    %c0_i32_1 = arith.constant 0 : i32
    return %c0_i32, %c0_i32_0 : i32, i32
  }
  func.func @transform_7(%arg0: i32) -> (i32, i32, i32) {
    %c0_i32 = arith.constant 0 : i32
    %c0_i32_0 = arith.constant 0 : i32
    %c0_i32_1 = arith.constant 0 : i32
    %c0_i32_2 = arith.constant 0 : i32
    return %c0_i32, %c0_i32_0, %c0_i32_1 : i32, i32, i32
  }
  func.func @transform_8(%arg0: i32) -> (i32, i32, i32) {
    %c0_i32 = arith.constant 0 : i32
    %c0_i32_0 = arith.constant 0 : i32
    %c0_i32_1 = arith.constant 0 : i32
    %c0_i32_2 = arith.constant 0 : i32
    return %c0_i32, %c0_i32_0, %c0_i32_1 : i32, i32, i32
  }
  func.func @transform_9(%arg0: i32) -> (i32, i32) {
    %c0_i32 = arith.constant 0 : i32
    %c0_i32_0 = arith.constant 0 : i32
    %c0_i32_1 = arith.constant 0 : i32
    return %c0_i32, %c0_i32_0 : i32, i32
  }
  func.func @transform_10(%arg0: i32) -> (i32, i32, i32) {
    %c0_i32 = arith.constant 0 : i32
    %c0_i32_0 = arith.constant 0 : i32
    %c0_i32_1 = arith.constant 0 : i32
    %c0_i32_2 = arith.constant 0 : i32
    return %c0_i32, %c0_i32_0, %c0_i32_1 : i32, i32, i32
  }
  func.func @transform_11(%arg0: i32) -> (i32, i32, i32) {
    %c0_i32 = arith.constant 0 : i32
    %c0_i32_0 = arith.constant 0 : i32
    %c0_i32_1 = arith.constant 0 : i32
    %c0_i32_2 = arith.constant 0 : i32
    return %c0_i32, %c0_i32_0, %c0_i32_1 : i32, i32, i32
  }
  func.func @transform_12(%arg0: i32) -> (i32, i32) {
    %c0_i32 = arith.constant 0 : i32
    %c0_i32_0 = arith.constant 0 : i32
    %c0_i32_1 = arith.constant 0 : i32
    return %c0_i32, %c0_i32_0 : i32, i32
  }
  func.func @transform_13(%arg0: i32) -> i32 {
    %c0_i32 = arith.constant 0 : i32
    %c0_i32_0 = arith.constant 0 : i32
    return %c0_i32 : i32
  }
  func.func @transform_14(%arg0: i32) -> (i32, i32) {
    %c0_i32 = arith.constant 0 : i32
    %c0_i32_0 = arith.constant 0 : i32
    %c0_i32_1 = arith.constant 0 : i32
    return %c0_i32, %c0_i32_0 : i32, i32
  }
}

</mosaic_0001>

<llo_original>
// kernel: autoencoder_forward.1
$region0: #{autoencoder_forward.1}
  #allocation0 [shape = 'u32[]', space=smem, size = 0x4, offset = 0x4, fixed_abs, tag = 'smem constant byte address 0x4 - core index']
  #allocation1 [shape = 'u32[144,128]{1,0:T(1,128)}', space=vmem, size = 0x12000, scoped, tag = 'internal scratch']
  %s0 = inlined_call_operand.vmem [shape: f32[32,48], index: 0, kind: input, shape index: {}]
  %s1 = inlined_call_operand.vmem [shape: f32[5,16,32], index: 1, kind: input, shape index: {}]
  %s2 = inlined_call_operand.vmem [shape: f32[5,48,64], index: 2, kind: input, shape index: {}]
  %s3 = inlined_call_operand.vmem [shape: f32[1,64], index: 3, kind: input, shape index: {}]
  %s4 = inlined_call_operand.vmem [shape: f32[5,8,16], index: 4, kind: input, shape index: {}]
  %s5 = inlined_call_operand.vmem [shape: f32[5,64,32], index: 5, kind: input, shape index: {}]
  %s6 = inlined_call_operand.vmem [shape: f32[1,32], index: 6, kind: input, shape index: {}]
  %s7 = inlined_call_operand.vmem [shape: f32[6,16,8], index: 7, kind: input, shape index: {}]
  %s8 = inlined_call_operand.vmem [shape: f32[6,32,64], index: 8, kind: input, shape index: {}]
  %s9 = inlined_call_operand.vmem [shape: f32[1,64], index: 9, kind: input, shape index: {}]
  %s10 = inlined_call_operand.vmem [shape: f32[6,32,16], index: 10, kind: input, shape index: {}]
  %s11 = inlined_call_operand.vmem [shape: f32[6,64,48], index: 11, kind: input, shape index: {}]
  %s12 = inlined_call_operand.vmem [shape: f32[1,48], index: 12, kind: input, shape index: {}]
  %s13 = inlined_call_operand.vmem [shape: f32[3], index: 13, kind: input, shape index: {}]
  %s14 = inlined_call_operand.vmem [shape: f32[32,48], index: 14, kind: output, shape index: {}]
  %s15 = sld [smem:[#allocation0]]
  $region70: #{autoencoder_forward.1} parent=0
    _
  %s17 = ssub.s32 1, %s15
  %s18 = scalar_select 0, %s17, %s15
  $region1: #{autoencoder_forward.1} parent=0
    #allocation2 [shape = 'u8[512]{0}', space=smem, size = 0x200, scoped, tag = 'input window, operand 13, single buffered']
    #allocation3 [shape = 's32[1]{0}', space=sflag, size = 0x4, scoped, tag = 'scoped memory for autoencoder_forward.1']
    %19 = vsyncpa [#allocation3], 0
    // Predicated region
    $region2: #{autoencoder_forward.1} parent=1 // pred_check
      _
    $region3: #{autoencoder_forward.1} parent=1 // pred_check_branch
      %21 = sbr.rel (0) target = $region5
    $region4: #{autoencoder_forward.1} parent=1 // pred_region
      _
    $region5: #{autoencoder_forward.1} parent=1 // pred_fallthru
      _
    // Predicated region
    $region6: #{autoencoder_forward.1} parent=1 // pred_check
      _
    $region7: #{autoencoder_forward.1} parent=1 // pred_check_branch
      %23 = sbr.rel (0) target = $region9
    $region8: #{autoencoder_forward.1} parent=1 // pred_region
      _
    $region9: #{autoencoder_forward.1} parent=1 // pred_fallthru
      _
    // Predicated region
    $region10: #{autoencoder_forward.1} parent=1 // pred_check
      _
    $region11: #{autoencoder_forward.1} parent=1 // pred_check_branch
      %25 = sbr.rel (0) target = $region13
    $region12: #{autoencoder_forward.1} parent=1 // pred_region
      _
    $region13: #{autoencoder_forward.1} parent=1 // pred_fallthru
      _
    // Predicated region
    $region14: #{autoencoder_forward.1} parent=1 // pred_check
      _
    $region15: #{autoencoder_forward.1} parent=1 // pred_check_branch
      %27 = sbr.rel (0) target = $region17
    $region16: #{autoencoder_forward.1} parent=1 // pred_region
      _
    $region17: #{autoencoder_forward.1} parent=1 // pred_fallthru
      _
    // Predicated region
    $region18: #{autoencoder_forward.1} parent=1 // pred_check
      _
    $region19: #{autoencoder_forward.1} parent=1 // pred_check_branch
      %29 = sbr.rel (0) target = $region21
    $region20: #{autoencoder_forward.1} parent=1 // pred_region
      _
    $region21: #{autoencoder_forward.1} parent=1 // pred_fallthru
      _
    // Predicated region
    $region22: #{autoencoder_forward.1} parent=1 // pred_check
      _
    $region23: #{autoencoder_forward.1} parent=1 // pred_check_branch
      %31 = sbr.rel (0) target = $region25
    $region24: #{autoencoder_forward.1} parent=1 // pred_region
      _
    $region25: #{autoencoder_forward.1} parent=1 // pred_fallthru
      _
    // Predicated region
    $region26: #{autoencoder_forward.1} parent=1 // pred_check
      _
    $region27: #{autoencoder_forward.1} parent=1 // pred_check_branch
      %33 = sbr.rel (0) target = $region29
    $region28: #{autoencoder_forward.1} parent=1 // pred_region
      _
    $region29: #{autoencoder_forward.1} parent=1 // pred_fallthru
      _
    // Predicated region
    $region30: #{autoencoder_forward.1} parent=1 // pred_check
      _
    $region31: #{autoencoder_forward.1} parent=1 // pred_check_branch
      %35 = sbr.rel (0) target = $region33
    $region32: #{autoencoder_forward.1} parent=1 // pred_region
      _
    $region33: #{autoencoder_forward.1} parent=1 // pred_fallthru
      _
    // Predicated region
    $region34: #{autoencoder_forward.1} parent=1 // pred_check
      _
    $region35: #{autoencoder_forward.1} parent=1 // pred_check_branch
      %37 = sbr.rel (0) target = $region37
    $region36: #{autoencoder_forward.1} parent=1 // pred_region
      _
    $region37: #{autoencoder_forward.1} parent=1 // pred_fallthru
      _
    // Predicated region
    $region38: #{autoencoder_forward.1} parent=1 // pred_check
      _
    $region39: #{autoencoder_forward.1} parent=1 // pred_check_branch
      %39 = sbr.rel (0) target = $region41
    $region40: #{autoencoder_forward.1} parent=1 // pred_region
      _
    $region41: #{autoencoder_forward.1} parent=1 // pred_fallthru
      _
    // Predicated region
    $region42: #{autoencoder_forward.1} parent=1 // pred_check
      _
    $region43: #{autoencoder_forward.1} parent=1 // pred_check_branch
      %41 = sbr.rel (0) target = $region45
    $region44: #{autoencoder_forward.1} parent=1 // pred_region
      _
    $region45: #{autoencoder_forward.1} parent=1 // pred_fallthru
      _
    // Predicated region
    $region46: #{autoencoder_forward.1} parent=1 // pred_check
      _
    $region47: #{autoencoder_forward.1} parent=1 // pred_check_branch
      %43 = sbr.rel (0) target = $region49
    $region48: #{autoencoder_forward.1} parent=1 // pred_region
      _
    $region49: #{autoencoder_forward.1} parent=1 // pred_fallthru
      _
    // Predicated region
    $region50: #{autoencoder_forward.1} parent=1 // pred_check
      _
    $region51: #{autoencoder_forward.1} parent=1 // pred_check_branch
      %45 = sbr.rel (0) target = $region53
    $region52: #{autoencoder_forward.1} parent=1 // pred_region
      _
    $region53: #{autoencoder_forward.1} parent=1 // pred_fallthru
      _
    // Predicated region
    $region54: #{autoencoder_forward.1} parent=1 // pred_check
      _
    $region55: #{autoencoder_forward.1} parent=1 // pred_check_branch
      %47 = sbr.rel (0) target = $region57
    $region56: #{autoencoder_forward.1} parent=1 // pred_region
      %s49 = ssub.s32 16, 16
      %50 = vsyncadd [#allocation3], %s49
      %s52 = sshll.u32 %s13, 4
      %s53 = int_to_ptr.vmem [resolvable:$true] %s52
      %55 = dma.vmem_to_smem %s53, 16, [#allocation2], [#allocation3]
    $region57: #{autoencoder_forward.1} parent=1 // pred_fallthru
      _
    // Predicated region
    $region58: #{autoencoder_forward.1} parent=1 // pred_check
      _
    $region59: #{autoencoder_forward.1} parent=1 // pred_check_branch
      %57 = sbr.rel (0) target = $region61
    $region60: #{autoencoder_forward.1} parent=1 // pred_region
      %58 = dma.done [#allocation3], 16
    $region61: #{autoencoder_forward.1} parent=1 // pred_fallthru
      _
    %59 = sfence
    %v60 = vld [vmem:[%s0] sm:$0xff]
    %v61 = vld [vmem:[%s0 + $0x8] sm:$0xff]
    %v62 = vld [vmem:[%s0 + $0x10] sm:$0xff]
    %v63 = vld [vmem:[%s0 + $0x18] sm:$0xff]
    %v64 = vld [vmem:[%s1] sm:$0xff]
    %v65 = vld [vmem:[%s1 + $0x8] sm:$0xff]
    %vm66 = vcmask 261120
    %v68 = vsel %vm66, %v64, 0
    %v71 = vsel %vm66, %v65, 0
    %73 = vmatprep.subr.mxu0 0.0
    %74 = vmatpush1.msra.mxu0 %v60
    %75 = vmatprep.subr.mxu0 0.0
    %76 = vmatpush1.msra.mxu0 %v61
    %77 = vmatprep.subr.mxu0 0.0
    %78 = vmatpush1.msra.mxu0 %v62
    %79 = vmatprep.subr.mxu0 0.0
    %80 = vmatpush1.msra.mxu0 %v63
    %81 = vmatprep.subr.mxu0 0.0
    %82 = vmatpush1.msra.mxu0 0.0
    %83 = vmatprep.subr.mxu0 0.0
    %84 = vmatpush1.msra.mxu0 0.0
    %85 = vmatprep.subr.mxu0 0.0
    %86 = vmatpush1.msra.mxu0 0.0
    %87 = vmatprep.subr.mxu0 0.0
    %88 = vmatpush1.msra.mxu0 0.0
    %89 = vmatprep.subr.mxu0 0.0
    %90 = vmatpush1.msra.mxu0 0.0
    %91 = vmatprep.subr.mxu0 0.0
    %92 = vmatpush1.msra.mxu0 0.0
    %93 = vmatprep.subr.mxu0 0.0
    %94 = vmatpush1.msra.mxu0 0.0
    %95 = vmatprep.subr.mxu0 0.0
    %96 = vmatpush1.msra.mxu0 0.0
    %97 = vmatprep.subr.mxu0 0.0
    %98 = vmatpush1.msra.mxu0 0.0
    %99 = vmatprep.subr.mxu0 0.0
    %100 = vmatpush1.msra.mxu0 0.0
    %101 = vmatprep.subr.mxu0 0.0
    %102 = vmatpush1.msra.mxu0 0.0
    %103 = vmatprep.subr.mxu0 0.0
    %104 = vmatpush1.msra.mxu0 0.0
    %105 = vmatprep.subr.mxu0 0.0
    %106 = vmatpush1.msra.mxu0 0.0
    %107 = vmatprep.subr.mxu0 0.0
    %108 = vmatpush1.msra.mxu0 0.0
    %109 = vmatprep.subr.mxu0 0.0
    %110 = vmatpush1.msra.mxu0 0.0
    %111 = vmatprep.subr.mxu0 0.0
    %112 = vmatpush1.msra.mxu0 0.0
    %113 = vmatprep.subr.mxu0 0.0
    %114 = vmatpush1.msra.mxu0 0.0
    %115 = vmatprep.subr.mxu0 0.0
    %116 = vmatpush1.msra.mxu0 0.0
    %117 = vmatprep.subr.mxu0 0.0
    %118 = vmatpush1.msra.mxu0 0.0
    %119 = vmatprep.subr.mxu0 0.0
    %120 = vmatpush1.msra.mxu0 0.0
    %121 = vmatprep.subr.mxu0 0.0
    %122 = vmatpush1.msra.mxu0 0.0
    %123 = vmatprep.subr.mxu0 0.0
    %124 = vmatpush1.msra.mxu0 0.0
    %125 = vmatprep.subr.mxu0 0.0
    %126 = vmatpush1.msra.mxu0 0.0
    %127 = vmatprep.subr.mxu0 0.0
    %128 = vmatpush1.msra.mxu0 0.0
    %129 = vmatprep.subr.mxu0 0.0
    %130 = vmatpush1.msra.mxu0 0.0
    %131 = vmatprep.subr.mxu0 0.0
    %132 = vmatpush1.msra.mxu0 0.0
    %133 = vmatprep.subr.mxu0 0.0
    %134 = vmatpush1.msra.mxu0 0.0
    %135 = vmatprep.subr.mxu0 0.0
    %136 = vmatpush1.msra.mxu0 0.0
    %137 = vmatprep.mubr.f32.mxu0 0.0
    %138 = vmatmul.mubr.f32.gmra.mrb[0].mxu0 %v68
    %v139 = vpop.f32.mrb[0].mxu0
    %v140 = vadd.f32 0.0, %v139
    %v141 = vpop.f32.mrb[0].mxu0
    %142 = vmatprep.mubr.f32.mxu0 0.0
    %143 = vmatmul.mubr.f32.gmra.mrb[0].mxu0 %v71
    %v144 = vpop.f32.mrb[0].mxu0
    %v145 = vadd.f32 0.0, %v144
    %v146 = vpop.f32.mrb[0].mxu0
    %147 = vdwg.mxu0
    %v148 = vld [vmem:[%s2] sm:$0xff]
    %v149 = vld [vmem:[%s2 + $0x8] sm:$0xff]
    %v150 = vld [vmem:[%s2 + $0x10] sm:$0xff]
    %v151 = vld [vmem:[%s2 + $0x18] sm:$0xff]
    %v152 = vld [vmem:[%s2 + $0x20] sm:$0xff]
    %v153 = vld [vmem:[%s2 + $0x28] sm:$0xff]
    %s154 = scalar_lea.vmem %s1, 16
    %v155 = vld [vmem:[%s154] sm:$0xff]
    %v156 = vld [vmem:[%s154 + $0x8] sm:$0xff]
    %v158 = vsel %vm66, %v155, 0
    %v161 = vsel %vm66, %v156, 0
    %163 = vmatprep.subr.mxu0 0.0
    %164 = vmatpush1.msra.mxu0 %v60
    %165 = vmatprep.subr.mxu0 0.0
    %166 = vmatpush1.msra.mxu0 %v61
    %167 = vmatprep.subr.mxu0 0.0
    %168 = vmatpush1.msra.mxu0 %v62
    %169 = vmatprep.subr.mxu0 0.0
    %170 = vmatpush1.msra.mxu0 %v63
    %171 = vmatprep.subr.mxu0 0.0
    %172 = vmatpush1.msra.mxu0 0.0
    %173 = vmatprep.subr.mxu0 0.0
    %174 = vmatpush1.msra.mxu0 0.0
    %175 = vmatprep.subr.mxu0 0.0
    %176 = vmatpush1.msra.mxu0 0.0
    %177 = vmatprep.subr.mxu0 0.0
    %178 = vmatpush1.msra.mxu0 0.0
    %179 = vmatprep.subr.mxu0 0.0
    %180 = vmatpush1.msra.mxu0 0.0
    %181 = vmatprep.subr.mxu0 0.0
    %182 = vmatpush1.msra.mxu0 0.0
    %183 = vmatprep.subr.mxu0 0.0
    %184 = vmatpush1.msra.mxu0 0.0
    %185 = vmatprep.subr.mxu0 0.0
    %186 = vmatpush1.msra.mxu0 0.0
    %187 = vmatprep.subr.mxu0 0.0
    %188 = vmatpush1.msra.mxu0 0.0
    %189 = vmatprep.subr.mxu0 0.0
    %190 = vmatpush1.msra.mxu0 0.0
    %191 = vmatprep.subr.mxu0 0.0
    %192 = vmatpush1.msra.mxu0 0.0
    %193 = vmatprep.subr.mxu0 0.0
    %194 = vmatpush1.msra.mxu0 0.0
    %195 = vmatprep.subr.mxu0 0.0
    %196 = vmatpush1.msra.mxu0 0.0
    %197 = vmatprep.subr.mxu0 0.0
    %198 = vmatpush1.msra.mxu0 0.0
    %199 = vmatprep.subr.mxu0 0.0
    %200 = vmatpush1.msra.mxu0 0.0
    %201 = vmatprep.subr.mxu0 0.0
    %202 = vmatpush1.msra.mxu0 0.0
    %203 = vmatprep.subr.mxu0 0.0
    %204 = vmatpush1.msra.mxu0 0.0
    %205 = vmatprep.subr.mxu0 0.0
    %206 = vmatpush1.msra.mxu0 0.0
    %207 = vmatprep.subr.mxu0 0.0
    %208 = vmatpush1.msra.mxu0 0.0
    %209 = vmatprep.subr.mxu0 0.0
    %210 = vmatpush1.msra.mxu0 0.0
    %211 = vmatprep.subr.mxu0 0.0
    %212 = vmatpush1.msra.mxu0 0.0
    %213 = vmatprep.subr.mxu0 0.0
    %214 = vmatpush1.msra.mxu0 0.0
    %215 = vmatprep.subr.mxu0 0.0
    %216 = vmatpush1.msra.mxu0 0.0
    %217 = vmatprep.subr.mxu0 0.0
    %218 = vmatpush1.msra.mxu0 0.0
    %219 = vmatprep.subr.mxu0 0.0
    %220 = vmatpush1.msra.mxu0 0.0
    %221 = vmatprep.subr.mxu0 0.0
    %222 = vmatpush1.msra.mxu0 0.0
    %223 = vmatprep.subr.mxu0 0.0
    %224 = vmatpush1.msra.mxu0 0.0
    %225 = vmatprep.subr.mxu0 0.0
    %226 = vmatpush1.msra.mxu0 0.0
    %227 = vmatprep.mubr.f32.mxu0 0.0
    %228 = vmatmul.mubr.f32.gmra.mrb[0].mxu0 %v158
    %v229 = vpop.f32.mrb[0].mxu0
    %v230 = vadd.f32 0.0, %v229
    %v231 = vpop.f32.mrb[0].mxu0
    %232 = vmatprep.mubr.f32.mxu0 0.0
    %233 = vmatmul.mubr.f32.gmra.mrb[0].mxu0 %v161
    %v234 = vpop.f32.mrb[0].mxu0
    %v235 = vadd.f32 0.0, %v234
    %v236 = vpop.f32.mrb[0].mxu0
    %237 = vdwg.mxu0
    %s238 = scalar_lea.vmem %s2, 48
    %v239 = vld [vmem:[%s238] sm:$0xff]
    %v240 = vld [vmem:[%s238 + $0x8] sm:$0xff]
    %v241 = vld [vmem:[%s238 + $0x10] sm:$0xff]
    %v242 = vld [vmem:[%s238 + $0x18] sm:$0xff]
    %v243 = vld [vmem:[%s238 + $0x20] sm:$0xff]
    %v244 = vld [vmem:[%s238 + $0x28] sm:$0xff]
    %vm245 = vcmask 392192
    %v247 = vsel %vm245, %v230, 0
    %v250 = vsel %vm245, %v235, 0
    %252 = vmatprep.subr.mxu0 0.0
    %253 = vmatpush1.msra.mxu0 %v239
    %254 = vmatprep.subr.mxu0 0.0
    %255 = vmatpush1.msra.mxu0 %v240
    %256 = vmatprep.subr.mxu0 0.0
    %257 = vmatpush1.msra.mxu0 %v241
    %258 = vmatprep.subr.mxu0 0.0
    %259 = vmatpush1.msra.mxu0 %v242
    %260 = vmatprep.subr.mxu0 0.0
    %261 = vmatpush1.msra.mxu0 %v243
    %262 = vmatprep.subr.mxu0 0.0
    %263 = vmatpush1.msra.mxu0 %v244
    %264 = vmatprep.subr.mxu0 0.0
    %265 = vmatpush1.msra.mxu0 0.0
    %266 = vmatprep.subr.mxu0 0.0
    %267 = vmatpush1.msra.mxu0 0.0
    %268 = vmatprep.subr.mxu0 0.0
    %269 = vmatpush1.msra.mxu0 0.0
    %270 = vmatprep.subr.mxu0 0.0
    %271 = vmatpush1.msra.mxu0 0.0
    %272 = vmatprep.subr.mxu0 0.0
    %273 = vmatpush1.msra.mxu0 0.0
    %274 = vmatprep.subr.mxu0 0.0
    %275 = vmatpush1.msra.mxu0 0.0
    %276 = vmatprep.subr.mxu0 0.0
    %277 = vmatpush1.msra.mxu0 0.0
    %278 = vmatprep.subr.mxu0 0.0
    %279 = vmatpush1.msra.mxu0 0.0
    %280 = vmatprep.subr.mxu0 0.0
    %281 = vmatpush1.msra.mxu0 0.0
    %282 = vmatprep.subr.mxu0 0.0
    %283 = vmatpush1.msra.mxu0 0.0
    %284 = vmatprep.subr.mxu0 0.0
    %285 = vmatpush1.msra.mxu0 0.0
    %286 = vmatprep.subr.mxu0 0.0
    %287 = vmatpush1.msra.mxu0 0.0
    %288 = vmatprep.subr.mxu0 0.0
    %289 = vmatpush1.msra.mxu0 0.0
    %290 = vmatprep.subr.mxu0 0.0
    %291 = vmatpush1.msra.mxu0 0.0
    %292 = vmatprep.subr.mxu0 0.0
    %293 = vmatpush1.msra.mxu0 0.0
    %294 = vmatprep.subr.mxu0 0.0
    %295 = vmatpush1.msra.mxu0 0.0
    %296 = vmatprep.subr.mxu0 0.0
    %297 = vmatpush1.msra.mxu0 0.0
    %298 = vmatprep.subr.mxu0 0.0
    %299 = vmatpush1.msra.mxu0 0.0
    %300 = vmatprep.subr.mxu0 0.0
    %301 = vmatpush1.msra.mxu0 0.0
    %302 = vmatprep.subr.mxu0 0.0
    %303 = vmatpush1.msra.mxu0 0.0
    %304 = vmatprep.subr.mxu0 0.0
    %305 = vmatpush1.msra.mxu0 0.0
    %306 = vmatprep.subr.mxu0 0.0
    %307 = vmatpush1.msra.mxu0 0.0
    %308 = vmatprep.subr.mxu0 0.0
    %309 = vmatpush1.msra.mxu0 0.0
    %310 = vmatprep.subr.mxu0 0.0
    %311 = vmatpush1.msra.mxu0 0.0
    %312 = vmatprep.subr.mxu0 0.0
    %313 = vmatpush1.msra.mxu0 0.0
    %314 = vmatprep.subr.mxu0 0.0
    %315 = vmatpush1.msra.mxu0 0.0
    %316 = vmatprep.mubr.f32.mxu0 0.0
    %317 = vmatmul.mubr.f32.gmra.mrb[0].mxu0 %v247
    %v318 = vpop.f32.mrb[0].mxu0
    %v319 = vadd.f32 0.0, %v318
    %v320 = vpop.f32.mrb[0].mxu0
    %321 = vmatprep.mubr.f32.mxu0 0.0
    %322 = vmatmul.mubr.f32.gmra.mrb[0].mxu0 %v250
    %v323 = vpop.f32.mrb[0].mxu0
    %v324 = vadd.f32 0.0, %v323
    %v325 = vpop.f32.mrb[0].mxu0
    %326 = vdwg.mxu0
    %v328 = vsel %vm245, %v140, 0
    %v331 = vsel %vm245, %v145, 0
    %333 = vmatprep.subr.mxu0 0.0
    %334 = vmatpush1.msra.mxu0 %v148
    %335 = vmatprep.subr.mxu0 0.0
    %336 = vmatpush1.msra.mxu0 %v149
    %337 = vmatprep.subr.mxu0 0.0
    %338 = vmatpush1.msra.mxu0 %v150
    %339 = vmatprep.subr.mxu0 0.0
    %340 = vmatpush1.msra.mxu0 %v151
    %341 = vmatprep.subr.mxu0 0.0
    %342 = vmatpush1.msra.mxu0 %v152
    %343 = vmatprep.subr.mxu0 0.0
    %344 = vmatpush1.msra.mxu0 %v153
    %345 = vmatprep.subr.mxu0 0.0
    %346 = vmatpush1.msra.mxu0 0.0
    %347 = vmatprep.subr.mxu0 0.0
    %348 = vmatpush1.msra.mxu0 0.0
    %349 = vmatprep.subr.mxu0 0.0
    %350 = vmatpush1.msra.mxu0 0.0
    %351 = vmatprep.subr.mxu0 0.0
    %352 = vmatpush1.msra.mxu0 0.0
    %353 = vmatprep.subr.mxu0 0.0
    %354 = vmatpush1.msra.mxu0 0.0
    %355 = vmatprep.subr.mxu0 0.0
    %356 = vmatpush1.msra.mxu0 0.0
    %357 = vmatprep.subr.mxu0 0.0
    %358 = vmatpush1.msra.mxu0 0.0
    %359 = vmatprep.subr.mxu0 0.0
    %360 = vmatpush1.msra.mxu0 0.0
    %361 = vmatprep.subr.mxu0 0.0
    %362 = vmatpush1.msra.mxu0 0.0
    %363 = vmatprep.subr.mxu0 0.0
    %364 = vmatpush1.msra.mxu0 0.0
    %365 = vmatprep.subr.mxu0 0.0
    %366 = vmatpush1.msra.mxu0 0.0
    %367 = vmatprep.subr.mxu0 0.0
    %368 = vmatpush1.msra.mxu0 0.0
    %369 = vmatprep.subr.mxu0 0.0
    %370 = vmatpush1.msra.mxu0 0.0
    %371 = vmatprep.subr.mxu0 0.0
    %372 = vmatpush1.msra.mxu0 0.0
    %373 = vmatprep.subr.mxu0 0.0
    %374 = vmatpush1.msra.mxu0 0.0
    %375 = vmatprep.subr.mxu0 0.0
    %376 = vmatpush1.msra.mxu0 0.0
    %377 = vmatprep.subr.mxu0 0.0
    %378 = vmatpush1.msra.mxu0 0.0
    %379 = vmatprep.subr.mxu0 0.0
    %380 = vmatpush1.msra.mxu0 0.0
    %381 = vmatprep.subr.mxu0 0.0
    %382 = vmatpush1.msra.mxu0 0.0
    %383 = vmatprep.subr.mxu0 0.0
    %384 = vmatpush1.msra.mxu0 0.0
    %385 = vmatprep.subr.mxu0 0.0
    %386 = vmatpush1.msra.mxu0 0.0
    %387 = vmatprep.subr.mxu0 0.0
    %388 = vmatpush1.msra.mxu0 0.0
    %389 = vmatprep.subr.mxu0 0.0
    %390 = vmatpush1.msra.mxu0 0.0
    %391 = vmatprep.subr.mxu0 0.0
    %392 = vmatpush1.msra.mxu0 0.0
    %393 = vmatprep.subr.mxu0 0.0
    %394 = vmatpush1.msra.mxu0 0.0
    %395 = vmatprep.subr.mxu0 0.0
    %396 = vmatpush1.msra.mxu0 0.0
    %397 = vmatprep.mubr.f32.mxu0 0.0
    %398 = vmatmul.mubr.f32.gmra.mrb[0].mxu0 %v328
    %v399 = vpop.f32.mrb[0].mxu0
    %v400 = vadd.f32 %v319, %v399
    %v401 = vpop.f32.mrb[0].mxu0
    %402 = vmatprep.mubr.f32.mxu0 0.0
    %403 = vmatmul.mubr.f32.gmra.mrb[0].mxu0 %v331
    %v404 = vpop.f32.mrb[0].mxu0
    %v405 = vadd.f32 %v324, %v404
    %v406 = vpop.f32.mrb[0].mxu0
    %407 = vdwg.mxu0
    %s408 = scalar_lea.vmem %s1, 32
    %v409 = vld [vmem:[%s408] sm:$0xff]
    %v410 = vld [vmem:[%s408 + $0x8] sm:$0xff]
    %v412 = vsel %vm66, %v409, 0
    %v415 = vsel %vm66, %v410, 0
    %417 = vmatprep.subr.mxu0 0.0
    %418 = vmatpush1.msra.mxu0 %v60
    %419 = vmatprep.subr.mxu0 0.0
    %420 = vmatpush1.msra.mxu0 %v61
    %421 = vmatprep.subr.mxu0 0.0
    %422 = vmatpush1.msra.mxu0 %v62
    %423 = vmatprep.subr.mxu0 0.0
    %424 = vmatpush1.msra.mxu0 %v63
    %425 = vmatprep.subr.mxu0 0.0
    %426 = vmatpush1.msra.mxu0 0.0
    %427 = vmatprep.subr.mxu0 0.0
    %428 = vmatpush1.msra.mxu0 0.0
    %429 = vmatprep.subr.mxu0 0.0
    %430 = vmatpush1.msra.mxu0 0.0
    %431 = vmatprep.subr.mxu0 0.0
    %432 = vmatpush1.msra.mxu0 0.0
    %433 = vmatprep.subr.mxu0 0.0
    %434 = vmatpush1.msra.mxu0 0.0
    %435 = vmatprep.subr.mxu0 0.0
    %436 = vmatpush1.msra.mxu0 0.0
    %437 = vmatprep.subr.mxu0 0.0
    %438 = vmatpush1.msra.mxu0 0.0
    %439 = vmatprep.subr.mxu0 0.0
    %440 = vmatpush1.msra.mxu0 0.0
    %441 = vmatprep.subr.mxu0 0.0
    %442 = vmatpush1.msra.mxu0 0.0
    %443 = vmatprep.subr.mxu0 0.0
    %444 = vmatpush1.msra.mxu0 0.0
    %445 = vmatprep.subr.mxu0 0.0
    %446 = vmatpush1.msra.mxu0 0.0
    %447 = vmatprep.subr.mxu0 0.0
    %448 = vmatpush1.msra.mxu0 0.0
    %449 = vmatprep.subr.mxu0 0.0
    %450 = vmatpush1.msra.mxu0 0.0
    %451 = vmatprep.subr.mxu0 0.0
    %452 = vmatpush1.msra.mxu0 0.0
    %453 = vmatprep.subr.mxu0 0.0
    %454 = vmatpush1.msra.mxu0 0.0
    %455 = vmatprep.subr.mxu0 0.0
    %456 = vmatpush1.msra.mxu0 0.0
    %457 = vmatprep.subr.mxu0 0.0
    %458 = vmatpush1.msra.mxu0 0.0
    %459 = vmatprep.subr.mxu0 0.0
    %460 = vmatpush1.msra.mxu0 0.0
    %461 = vmatprep.subr.mxu0 0.0
    %462 = vmatpush1.msra.mxu0 0.0
    %463 = vmatprep.subr.mxu0 0.0
    %464 = vmatpush1.msra.mxu0 0.0
    %465 = vmatprep.subr.mxu0 0.0
    %466 = vmatpush1.msra.mxu0 0.0
    %467 = vmatprep.subr.mxu0 0.0
    %468 = vmatpush1.msra.mxu0 0.0
    %469 = vmatprep.subr.mxu0 0.0
    %470 = vmatpush1.msra.mxu0 0.0
    %471 = vmatprep.subr.mxu0 0.0
    %472 = vmatpush1.msra.mxu0 0.0
    %473 = vmatprep.subr.mxu0 0.0
    %474 = vmatpush1.msra.mxu0 0.0
    %475 = vmatprep.subr.mxu0 0.0
    %476 = vmatpush1.msra.mxu0 0.0
    %477 = vmatprep.subr.mxu0 0.0
    %478 = vmatpush1.msra.mxu0 0.0
    %479 = vmatprep.subr.mxu0 0.0
    %480 = vmatpush1.msra.mxu0 0.0
    %481 = vmatprep.mubr.f32.mxu0 0.0
    %482 = vmatmul.mubr.f32.gmra.mrb[0].mxu0 %v412
    %v483 = vpop.f32.mrb[0].mxu0
    %v484 = vadd.f32 0.0, %v483
    %v485 = vpop.f32.mrb[0].mxu0
    %486 = vmatprep.mubr.f32.mxu0 0.0
    %487 = vmatmul.mubr.f32.gmra.mrb[0].mxu0 %v415
    %v488 = vpop.f32.mrb[0].mxu0
    %v489 = vadd.f32 0.0, %v488
    %v490 = vpop.f32.mrb[0].mxu0
    %491 = vdwg.mxu0
    %s492 = scalar_lea.vmem %s2, 96
    %v493 = vld [vmem:[%s492] sm:$0xff]
    %v494 = vld [vmem:[%s492 + $0x8] sm:$0xff]
    %v495 = vld [vmem:[%s492 + $0x10] sm:$0xff]
    %v496 = vld [vmem:[%s492 + $0x18] sm:$0xff]
    %v497 = vld [vmem:[%s492 + $0x20] sm:$0xff]
    %v498 = vld [vmem:[%s492 + $0x28] sm:$0xff]
    %v500 = vsel %vm245, %v484, 0
    %v503 = vsel %vm245, %v489, 0
    %505 = vmatprep.subr.mxu0 0.0
    %506 = vmatpush1.msra.mxu0 %v493
    %507 = vmatprep.subr.mxu0 0.0
    %508 = vmatpush1.msra.mxu0 %v494
    %509 = vmatprep.subr.mxu0 0.0
    %510 = vmatpush1.msra.mxu0 %v495
    %511 = vmatprep.subr.mxu0 0.0
    %512 = vmatpush1.msra.mxu0 %v496
    %513 = vmatprep.subr.mxu0 0.0
    %514 = vmatpush1.msra.mxu0 %v497
    %515 = vmatprep.subr.mxu0 0.0
    %516 = vmatpush1.msra.mxu0 %v498
    %517 = vmatprep.subr.mxu0 0.0
    %518 = vmatpush1.msra.mxu0 0.0
    %519 = vmatprep.subr.mxu0 0.0
    %520 = vmatpush1.msra.mxu0 0.0
    %521 = vmatprep.subr.mxu0 0.0
    %522 = vmatpush1.msra.mxu0 0.0
    %523 = vmatprep.subr.mxu0 0.0
    %524 = vmatpush1.msra.mxu0 0.0
    %525 = vmatprep.subr.mxu0 0.0
    %526 = vmatpush1.msra.mxu0 0.0
    %527 = vmatprep.subr.mxu0 0.0
    %528 = vmatpush1.msra.mxu0 0.0
    %529 = vmatprep.subr.mxu0 0.0
    %530 = vmatpush1.msra.mxu0 0.0
    %531 = vmatprep.subr.mxu0 0.0
    %532 = vmatpush1.msra.mxu0 0.0
    %533 = vmatprep.subr.mxu0 0.0
    %534 = vmatpush1.msra.mxu0 0.0
    %535 = vmatprep.subr.mxu0 0.0
    %536 = vmatpush1.msra.mxu0 0.0
    %537 = vmatprep.subr.mxu0 0.0
    %538 = vmatpush1.msra.mxu0 0.0
    %539 = vmatprep.subr.mxu0 0.0
    %540 = vmatpush1.msra.mxu0 0.0
    %541 = vmatprep.subr.mxu0 0.0
    %542 = vmatpush1.msra.mxu0 0.0
    %543 = vmatprep.subr.mxu0 0.0
    %544 = vmatpush1.msra.mxu0 0.0
    %545 = vmatprep.subr.mxu0 0.0
    %546 = vmatpush1.msra.mxu0 0.0
    %547 = vmatprep.subr.mxu0 0.0
    %548 = vmatpush1.msra.mxu0 0.0
    %549 = vmatprep.subr.mxu0 0.0
    %550 = vmatpush1.msra.mxu0 0.0
    %551 = vmatprep.subr.mxu0 0.0
    %552 = vmatpush1.msra.mxu0 0.0
    %553 = vmatprep.subr.mxu0 0.0
    %554 = vmatpush1.msra.mxu0 0.0
    %555 = vmatprep.subr.mxu0 0.0
    %556 = vmatpush1.msra.mxu0 0.0
    %557 = vmatprep.subr.mxu0 0.0
    %558 = vmatpush1.msra.mxu0 0.0
    %559 = vmatprep.subr.mxu0 0.0
    %560 = vmatpush1.msra.mxu0 0.0
    %561 = vmatprep.subr.mxu0 0.0
    %562 = vmatpush1.msra.mxu0 0.0
    %563 = vmatprep.subr.mxu0 0.0
    %564 = vmatpush1.msra.mxu0 0.0
    %565 = vmatprep.subr.mxu0 0.0
    %566 = vmatpush1.msra.mxu0 0.0
    %567 = vmatprep.subr.mxu0 0.0
    %568 = vmatpush1.msra.mxu0 0.0
    %569 = vmatprep.mubr.f32.mxu0 0.0
    %570 = vmatmul.mubr.f32.gmra.mrb[0].mxu0 %v500
    %v571 = vpop.f32.mrb[0].mxu0
    %v572 = vadd.f32 0.0, %v571
    %v573 = vpop.f32.mrb[0].mxu0
    %574 = vmatprep.mubr.f32.mxu0 0.0
    %575 = vmatmul.mubr.f32.gmra.mrb[0].mxu0 %v503
    %v576 = vpop.f32.mrb[0].mxu0
    %v577 = vadd.f32 0.0, %v576
    %v578 = vpop.f32.mrb[0].mxu0
    %579 = vdwg.mxu0
    %v580 = vadd.f32 %v400, %v572
    %v581 = vadd.f32 %v405, %v577
    %s582 = scalar_lea.vmem %s1, 48
    %v583 = vld [vmem:[%s582] sm:$0xff]
    %v584 = vld [vmem:[%s582 + $0x8] sm:$0xff]
    %v586 = vsel %vm66, %v583, 0
    %v589 = vsel %vm66, %v584, 0
    %591 = vmatprep.subr.mxu0 0.0
    %592 = vmatpush1.msra.mxu0 %v60
    %593 = vmatprep.subr.mxu0 0.0
    %594 = vmatpush1.msra.mxu0 %v61
    %595 = vmatprep.subr.mxu0 0.0
    %596 = vmatpush1.msra.mxu0 %v62
    %597 = vmatprep.subr.mxu0 0.0
    %598 = vmatpush1.msra.mxu0 %v63
    %599 = vmatprep.subr.mxu0 0.0
    %600 = vmatpush1.msra.mxu0 0.0
    %601 = vmatprep.subr.mxu0 0.0
    %602 = vmatpush1.msra.mxu0 0.0
    %603 = vmatprep.subr.mxu0 0.0
    %604 = vmatpush1.msra.mxu0 0.0
    %605 = vmatprep.subr.mxu0 0.0
    %606 = vmatpush1.msra.mxu0 0.0
    %607 = vmatprep.subr.mxu0 0.0
    %608 = vmatpush1.msra.mxu0 0.0
    %609 = vmatprep.subr.mxu0 0.0
    %610 = vmatpush1.msra.mxu0 0.0
    %611 = vmatprep.subr.mxu0 0.0
    %612 = vmatpush1.msra.mxu0 0.0
    %613 = vmatprep.subr.mxu0 0.0
    %614 = vmatpush1.msra.mxu0 0.0
    %615 = vmatprep.subr.mxu0 0.0
    %616 = vmatpush1.msra.mxu0 0.0
    %617 = vmatprep.subr.mxu0 0.0
    %618 = vmatpush1.msra.mxu0 0.0
    %619 = vmatprep.subr.mxu0 0.0
    %620 = vmatpush1.msra.mxu0 0.0
    %621 = vmatprep.subr.mxu0 0.0
    %622 = vmatpush1.msra.mxu0 0.0
    %623 = vmatprep.subr.mxu0 0.0
    %624 = vmatpush1.msra.mxu0 0.0
    %625 = vmatprep.subr.mxu0 0.0
    %626 = vmatpush1.msra.mxu0 0.0
    %627 = vmatprep.subr.mxu0 0.0
    %628 = vmatpush1.msra.mxu0 0.0
    %629 = vmatprep.subr.mxu0 0.0
    %630 = vmatpush1.msra.mxu0 0.0
    %631 = vmatprep.subr.mxu0 0.0
    %632 = vmatpush1.msra.mxu0 0.0
    %633 = vmatprep.subr.mxu0 0.0
    %634 = vmatpush1.msra.mxu0 0.0
    %635 = vmatprep.subr.mxu0 0.0
    %636 = vmatpush1.msra.mxu0 0.0
    %637 = vmatprep.subr.mxu0 0.0
    %638 = vmatpush1.msra.mxu0 0.0
    %639 = vmatprep.subr.mxu0 0.0
    %640 = vmatpush1.msra.mxu0 0.0
    %641 = vmatprep.subr.mxu0 0.0
    %642 = vmatpush1.msra.mxu0 0.0
    %643 = vmatprep.subr.mxu0 0.0
    %644 = vmatpush1.msra.mxu0 0.0
    %645 = vmatprep.subr.mxu0 0.0
    %646 = vmatpush1.msra.mxu0 0.0
    %647 = vmatprep.subr.mxu0 0.0
    %648 = vmatpush1.msra.mxu0 0.0
    %649 = vmatprep.subr.mxu0 0.0
    %650 = vmatpush1.msra.mxu0 0.0
    %651 = vmatprep.subr.mxu0 0.0
    %652 = vmatpush1.msra.mxu0 0.0
    %653 = vmatprep.subr.mxu0 0.0
    %654 = vmatpush1.msra.mxu0 0.0
    %655 = vmatprep.mubr.f32.mxu0 0.0
    %656 = vmatmul.mubr.f32.gmra.mrb[0].mxu0 %v586
    %v657 = vpop.f32.mrb[0].mxu0
    %v658 = vadd.f32 0.0, %v657
    %v659 = vpop.f32.mrb[0].mxu0
    %660 = vmatprep.mubr.f32.mxu0 0.0
    %661 = vmatmul.mubr.f32.gmra.mrb[0].mxu0 %v589
    %v662 = vpop.f32.mrb[0].mxu0
    %v663 = vadd.f32 0.0, %v662
    %v664 = vpop.f32.mrb[0].mxu0
    %665 = vdwg.mxu0
    %s666 = scalar_lea.vmem %s2, 144
    %v667 = vld [vmem:[%s666] sm:$0xff]
    %v668 = vld [vmem:[%s666 + $0x8] sm:$0xff]
    %v669 = vld [vmem:[%s666 + $0x10] sm:$0xff]
    %v670 = vld [vmem:[%s666 + $0x18] sm:$0xff]
    %v671 = vld [vmem:[%s666 + $0x20] sm:$0xff]
    %v672 = vld [vmem:[%s666 + $0x28] sm:$0xff]
    %v674 = vsel %vm245, %v658, 0
    %v677 = vsel %vm245, %v663, 0
    %679 = vmatprep.subr.mxu0 0.0
    %680 = vmatpush1.msra.mxu0 %v667
    %681 = vmatprep.subr.mxu0 0.0
    %682 = vmatpush1.msra.mxu0 %v668
    %683 = vmatprep.subr.mxu0 0.0
    %684 = vmatpush1.msra.mxu0 %v669
    %685 = vmatprep.subr.mxu0 0.0
    %686 = vmatpush1.msra.mxu0 %v670
    %687 = vmatprep.subr.mxu0 0.0
    %688 = vmatpush1.msra.mxu0 %v671
    %689 = vmatprep.subr.mxu0 0.0
    %690 = vmatpush1.msra.mxu0 %v672
    %691 = vmatprep.subr.mxu0 0.0
    %692 = vmatpush1.msra.mxu0 0.0
    %693 = vmatprep.subr.mxu0 0.0
    %694 = vmatpush1.msra.mxu0 0.0
    %695 = vmatprep.subr.mxu0 0.0
    %696 = vmatpush1.msra.mxu0 0.0
    %697 = vmatprep.subr.mxu0 0.0
    %698 = vmatpush1.msra.mxu0 0.0
    %699 = vmatprep.subr.mxu0 0.0
    %700 = vmatpush1.msra.mxu0 0.0
    %701 = vmatprep.subr.mxu0 0.0
    %702 = vmatpush1.msra.mxu0 0.0
    %703 = vmatprep.subr.mxu0 0.0
    %704 = vmatpush1.msra.mxu0 0.0
    %705 = vmatprep.subr.mxu0 0.0
    %706 = vmatpush1.msra.mxu0 0.0
    %707 = vmatprep.subr.mxu0 0.0
    %708 = vmatpush1.msra.mxu0 0.0
    %709 = vmatprep.subr.mxu0 0.0
    %710 = vmatpush1.msra.mxu0 0.0
    %711 = vmatprep.subr.mxu0 0.0
    %712 = vmatpush1.msra.mxu0 0.0
    %713 = vmatprep.subr.mxu0 0.0
    %714 = vmatpush1.msra.mxu0 0.0
    %715 = vmatprep.subr.mxu0 0.0
    %716 = vmatpush1.msra.mxu0 0.0
    %717 = vmatprep.subr.mxu0 0.0
    %718 = vmatpush1.msra.mxu0 0.0
    %719 = vmatprep.subr.mxu0 0.0
    %720 = vmatpush1.msra.mxu0 0.0
    %721 = vmatprep.subr.mxu0 0.0
    %722 = vmatpush1.msra.mxu0 0.0
    %723 = vmatprep.subr.mxu0 0.0
    %724 = vmatpush1.msra.mxu0 0.0
    %725 = vmatprep.subr.mxu0 0.0
    %726 = vmatpush1.msra.mxu0 0.0
    %727 = vmatprep.subr.mxu0 0.0
    %728 = vmatpush1.msra.mxu0 0.0
    %729 = vmatprep.subr.mxu0 0.0
    %730 = vmatpush1.msra.mxu0 0.0
    %731 = vmatprep.subr.mxu0 0.0
    %732 = vmatpush1.msra.mxu0 0.0
    %733 = vmatprep.subr.mxu0 0.0
    %734 = vmatpush1.msra.mxu0 0.0
    %735 = vmatprep.subr.mxu0 0.0
    %736 = vmatpush1.msra.mxu0 0.0
    %737 = vmatprep.subr.mxu0 0.0
    %738 = vmatpush1.msra.mxu0 0.0
    %739 = vmatprep.subr.mxu0 0.0
    %740 = vmatpush1.msra.mxu0 0.0
    %741 = vmatprep.subr.mxu0 0.0
    %742 = vmatpush1.msra.mxu0 0.0
    %743 = vmatprep.mubr.f32.mxu0 0.0
    %744 = vmatmul.mubr.f32.gmra.mrb[0].mxu0 %v674
    %v745 = vpop.f32.mrb[0].mxu0
    %v746 = vadd.f32 0.0, %v745
    %v747 = vpop.f32.mrb[0].mxu0
    %748 = vmatprep.mubr.f32.mxu0 0.0
    %749 = vmatmul.mubr.f32.gmra.mrb[0].mxu0 %v677
    %v750 = vpop.f32.mrb[0].mxu0
    %v751 = vadd.f32 0.0, %v750
    %v752 = vpop.f32.mrb[0].mxu0
    %753 = vdwg.mxu0
    %v754 = vadd.f32 %v580, %v746
    %v755 = vadd.f32 %v581, %v751
    %s756 = scalar_lea.vmem %s1, 64
    %v757 = vld [vmem:[%s756] sm:$0xff]
    %v758 = vld [vmem:[%s756 + $0x8] sm:$0xff]
    %v760 = vsel %vm66, %v757, 0
    %v763 = vsel %vm66, %v758, 0
    %765 = vmatprep.subr.mxu0 0.0
    %766 = vmatpush1.msra.mxu0 %v60
    %767 = vmatprep.subr.mxu0 0.0
    %768 = vmatpush1.msra.mxu0 %v61
    %769 = vmatprep.subr.mxu0 0.0
    %770 = vmatpush1.msra.mxu0 %v62
    %771 = vmatprep.subr.mxu0 0.0
    %772 = vmatpush1.msra.mxu0 %v63
    %773 = vmatprep.subr.mxu0 0.0
    %774 = vmatpush1.msra.mxu0 0.0
    %775 = vmatprep.subr.mxu0 0.0
    %776 = vmatpush1.msra.mxu0 0.0
    %777 = vmatprep.subr.mxu0 0.0
    %778 = vmatpush1.msra.mxu0 0.0
    %779 = vmatprep.subr.mxu0 0.0
    %780 = vmatpush1.msra.mxu0 0.0
    %781 = vmatprep.subr.mxu0 0.0
    %782 = vmatpush1.msra.mxu0 0.0
    %783 = vmatprep.subr.mxu0 0.0
    %784 = vmatpush1.msra.mxu0 0.0
    %785 = vmatprep.subr.mxu0 0.0
    %786 = vmatpush1.msra.mxu0 0.0
    %787 = vmatprep.subr.mxu0 0.0
    %788 = vmatpush1.msra.mxu0 0.0
    %789 = vmatprep.subr.mxu0 0.0
    %790 = vmatpush1.msra.mxu0 0.0
    %791 = vmatprep.subr.mxu0 0.0
    %792 = vmatpush1.msra.mxu0 0.0
    %793 = vmatprep.subr.mxu0 0.0
    %794 = vmatpush1.msra.mxu0 0.0
    %795 = vmatprep.subr.mxu0 0.0
    %796 = vmatpush1.msra.mxu0 0.0
    %797 = vmatprep.subr.mxu0 0.0
    %798 = vmatpush1.msra.mxu0 0.0
    %799 = vmatprep.subr.mxu0 0.0
    %800 = vmatpush1.msra.mxu0 0.0
    %801 = vmatprep.subr.mxu0 0.0
    %802 = vmatpush1.msra.mxu0 0.0
    %803 = vmatprep.subr.mxu0 0.0
    %804 = vmatpush1.msra.mxu0 0.0
    %805 = vmatprep.subr.mxu0 0.0
    %806 = vmatpush1.msra.mxu0 0.0
    %807 = vmatprep.subr.mxu0 0.0
    %808 = vmatpush1.msra.mxu0 0.0
    %809 = vmatprep.subr.mxu0 0.0
    %810 = vmatpush1.msra.mxu0 0.0
    %811 = vmatprep.subr.mxu0 0.0
    %812 = vmatpush1.msra.mxu0 0.0
    %813 = vmatprep.subr.mxu0 0.0
    %814 = vmatpush1.msra.mxu0 0.0
    %815 = vmatprep.subr.mxu0 0.0
    %816 = vmatpush1.msra.mxu0 0.0
    %817 = vmatprep.subr.mxu0 0.0
    %818 = vmatpush1.msra.mxu0 0.0
    %819 = vmatprep.subr.mxu0 0.0
    %820 = vmatpush1.msra.mxu0 0.0
    %821 = vmatprep.subr.mxu0 0.0
    %822 = vmatpush1.msra.mxu0 0.0
    %823 = vmatprep.subr.mxu0 0.0
    %824 = vmatpush1.msra.mxu0 0.0
    %825 = vmatprep.subr.mxu0 0.0
    %826 = vmatpush1.msra.mxu0 0.0
    %827 = vmatprep.subr.mxu0 0.0
    %828 = vmatpush1.msra.mxu0 0.0
    %829 = vmatprep.mubr.f32.mxu0 0.0
    %830 = vmatmul.mubr.f32.gmra.mrb[0].mxu0 %v760
    %v831 = vpop.f32.mrb[0].mxu0
    %v832 = vadd.f32 0.0, %v831
    %v833 = vpop.f32.mrb[0].mxu0
    %834 = vmatprep.mubr.f32.mxu0 0.0
    %835 = vmatmul.mubr.f32.gmra.mrb[0].mxu0 %v763
    %v836 = vpop.f32.mrb[0].mxu0
    %v837 = vadd.f32 0.0, %v836
    %v838 = vpop.f32.mrb[0].mxu0
    %839 = vdwg.mxu0
    %s840 = scalar_lea.vmem %s2, 192
    %v841 = vld [vmem:[%s840] sm:$0xff]
    %v842 = vld [vmem:[%s840 + $0x8] sm:$0xff]
    %v843 = vld [vmem:[%s840 + $0x10] sm:$0xff]
    %v844 = vld [vmem:[%s840 + $0x18] sm:$0xff]
    %v845 = vld [vmem:[%s840 + $0x20] sm:$0xff]
    %v846 = vld [vmem:[%s840 + $0x28] sm:$0xff]
    %v848 = vsel %vm245, %v832, 0
    %v851 = vsel %vm245, %v837, 0
    %853 = vmatprep.subr.mxu0 0.0
    %854 = vmatpush1.msra.mxu0 %v841
    %855 = vmatprep.subr.mxu0 0.0
    %856 = vmatpush1.msra.mxu0 %v842
    %857 = vmatprep.subr.mxu0 0.0
    %858 = vmatpush1.msra.mxu0 %v843
    %859 = vmatprep.subr.mxu0 0.0
    %860 = vmatpush1.msra.mxu0 %v844
    %861 = vmatprep.subr.mxu0 0.0
    %862 = vmatpush1.msra.mxu0 %v845
    %863 = vmatprep.subr.mxu0 0.0
    %864 = vmatpush1.msra.mxu0 %v846
    %865 = vmatprep.subr.mxu0 0.0
    %866 = vmatpush1.msra.mxu0 0.0
    %867 = vmatprep.subr.mxu0 0.0
    %868 = vmatpush1.msra.mxu0 0.0
    %869 = vmatprep.subr.mxu0 0.0
    %870 = vmatpush1.msra.mxu0 0.0
    %871 = vmatprep.subr.mxu0 0.0
    %872 = vmatpush1.msra.mxu0 0.0
    %873 = vmatprep.subr.mxu0 0.0
    %874 = vmatpush1.msra.mxu0 0.0
    %875 = vmatprep.subr.mxu0 0.0
    %876 = vmatpush1.msra.mxu0 0.0
    %877 = vmatprep.subr.mxu0 0.0
    %878 = vmatpush1.msra.mxu0 0.0
    %879 = vmatprep.subr.mxu0 0.0
    %880 = vmatpush1.msra.mxu0 0.0
    %881 = vmatprep.subr.mxu0 0.0
    %882 = vmatpush1.msra.mxu0 0.0
    %883 = vmatprep.subr.mxu0 0.0
    %884 = vmatpush1.msra.mxu0 0.0
    %885 = vmatprep.subr.mxu0 0.0
    %886 = vmatpush1.msra.mxu0 0.0
    %887 = vmatprep.subr.mxu0 0.0
    %888 = vmatpush1.msra.mxu0 0.0
    %889 = vmatprep.subr.mxu0 0.0
    %890 = vmatpush1.msra.mxu0 0.0
    %891 = vmatprep.subr.mxu0 0.0
    %892 = vmatpush1.msra.mxu0 0.0
    %893 = vmatprep.subr.mxu0 0.0
    %894 = vmatpush1.msra.mxu0 0.0
    %895 = vmatprep.subr.mxu0 0.0
    %896 = vmatpush1.msra.mxu0 0.0
    %897 = vmatprep.subr.mxu0 0.0
    %898 = vmatpush1.msra.mxu0 0.0
    %899 = vmatprep.subr.mxu0 0.0
    %900 = vmatpush1.msra.mxu0 0.0
    %901 = vmatprep.subr.mxu0 0.0
    %902 = vmatpush1.msra.mxu0 0.0
    %903 = vmatprep.subr.mxu0 0.0
    %904 = vmatpush1.msra.mxu0 0.0
    %905 = vmatprep.subr.mxu0 0.0
    %906 = vmatpush1.msra.mxu0 0.0
    %907 = vmatprep.subr.mxu0 0.0
    %908 = vmatpush1.msra.mxu0 0.0
    %909 = vmatprep.subr.mxu0 0.0
    %910 = vmatpush1.msra.mxu0 0.0
    %911 = vmatprep.subr.mxu0 0.0
    %912 = vmatpush1.msra.mxu0 0.0
    %913 = vmatprep.subr.mxu0 0.0
    %914 = vmatpush1.msra.mxu0 0.0
    %915 = vmatprep.subr.mxu0 0.0
    %916 = vmatpush1.msra.mxu0 0.0
    %917 = vmatprep.mubr.f32.mxu0 0.0
    %918 = vmatmul.mubr.f32.gmra.mrb[0].mxu0 %v848
    %v919 = vpop.f32.mrb[0].mxu0
    %v920 = vadd.f32 0.0, %v919
    %v921 = vpop.f32.mrb[0].mxu0
    %922 = vmatprep.mubr.f32.mxu0 0.0
    %923 = vmatmul.mubr.f32.gmra.mrb[0].mxu0 %v851
    %v924 = vpop.f32.mrb[0].mxu0
    %v925 = vadd.f32 0.0, %v924
    %v926 = vpop.f32.mrb[0].mxu0
    %927 = vdwg.mxu0
    %v928 = vadd.f32 %v754, %v920
    %v929 = vadd.f32 %v755, %v925
    %v930 = vld [vmem:[%s3] sm:$0x1]
    %v932 = vlaneseq
    %v933 = vshrl.u32 %v932, 7
    %v934 = vsub.s32 0, %v933
    %v935 = vrot.slane %v930, %v934
    %v937 = vadd.f32 %v928, %v935
    %v938 = vadd.f32 %v929, %v935
    %s939 = sld [smem:[#allocation2]]
    %vm940 = vcmp.ge.f32.partialorder %v937, 0.0
    %vm941 = vcmp.ge.f32.partialorder %v938, 0.0
    %v942 = vstv %s939
    %v943 = vmul.f32 %v942, %v937
    %v944 = vmul.f32 %v942, %v938
    %v945 = vsel %vm940, %v937, %v943
    %v946 = vsel %vm941, %v938, %v944
    %v947 = vld [vmem:[%s4] sm:$0xff]
    %vm948 = vcmask 130048
    %v950 = vsel %vm948, %v947, 0
    %952 = vmatprep.subr.mxu0 0.0
    %953 = vmatpush1.msra.mxu0 %v945
    %954 = vmatprep.subr.mxu0 0.0
    %955 = vmatpush1.msra.mxu0 %v946
    %956 = vmatprep.subr.mxu0 0.0
    %957 = vmatpush1.msra.mxu0 0.0
    %958 = vmatprep.subr.mxu0 0.0
    %959 = vmatpush1.msra.mxu0 0.0
    %960 = vmatprep.subr.mxu0 0.0
    %961 = vmatpush1.msra.mxu0 0.0
    %962 = vmatprep.subr.mxu0 0.0
    %963 = vmatpush1.msra.mxu0 0.0
    %964 = vmatprep.subr.mxu0 0.0
    %965 = vmatpush1.msra.mxu0 0.0
    %966 = vmatprep.subr.mxu0 0.0
    %967 = vmatpush1.msra.mxu0 0.0
    %968 = vmatprep.subr.mxu0 0.0
    %969 = vmatpush1.msra.mxu0 0.0
    %970 = vmatprep.subr.mxu0 0.0
    %971 = vmatpush1.msra.mxu0 0.0
    %972 = vmatprep.subr.mxu0 0.0
    %973 = vmatpush1.msra.mxu0 0.0
    %974 = vmatprep.subr.mxu0 0.0
    %975 = vmatpush1.msra.mxu0 0.0
    %976 = vmatprep.subr.mxu0 0.0
    %977 = vmatpush1.msra.mxu0 0.0
    %978 = vmatprep.subr.mxu0 0.0
    %979 = vmatpush1.msra.mxu0 0.0
    %980 = vmatprep.subr.mxu0 0.0
    %981 = vmatpush1.msra.mxu0 0.0
    %982 = vmatprep.subr.mxu0 0.0
    %983 = vmatpush1.msra.mxu0 0.0
    %984 = vmatprep.subr.mxu0 0.0
    %985 = vmatpush1.msra.mxu0 0.0
    %986 = vmatprep.subr.mxu0 0.0
    %987 = vmatpush1.msra.mxu0 0.0
    %988 = vmatprep.subr.mxu0 0.0
    %989 = vmatpush1.msra.mxu0 0.0
    %990 = vmatprep.subr.mxu0 0.0
    %991 = vmatpush1.msra.mxu0 0.0
    %992 = vmatprep.subr.mxu0 0.0
    %993 = vmatpush1.msra.mxu0 0.0
    %994 = vmatprep.subr.mxu0 0.0
    %995 = vmatpush1.msra.mxu0 0.0
    %996 = vmatprep.subr.mxu0 0.0
    %997 = vmatpush1.msra.mxu0 0.0
    %998 = vmatprep.subr.mxu0 0.0
    %999 = vmatpush1.msra.mxu0 0.0
    %1000 = vmatprep.subr.mxu0 0.0
    %1001 = vmatpush1.msra.mxu0 0.0
    %1002 = vmatprep.subr.mxu0 0.0
    %1003 = vmatpush1.msra.mxu0 0.0
    %1004 = vmatprep.subr.mxu0 0.0
    %1005 = vmatpush1.msra.mxu0 0.0
    %1006 = vmatprep.subr.mxu0 0.0
    %1007 = vmatpush1.msra.mxu0 0.0
    %1008 = vmatprep.subr.mxu0 0.0
    %1009 = vmatpush1.msra.mxu0 0.0
    %1010 = vmatprep.subr.mxu0 0.0
    %1011 = vmatpush1.msra.mxu0 0.0
    %1012 = vmatprep.subr.mxu0 0.0
    %1013 = vmatpush1.msra.mxu0 0.0
    %1014 = vmatprep.subr.mxu0 0.0
    %1015 = vmatpush1.msra.mxu0 0.0
    %1016 = vmatprep.mubr.f32.mxu0 0.0
    %1017 = vmatmul.mubr.f32.gmra.mrb[0].mxu0 %v950
    %v1018 = vpop.f32.mrb[0].mxu0
    %v1019 = vadd.f32 0.0, %v1018
    %v1020 = vpop.f32.mrb[0].mxu0
    %1021 = vdwg.mxu0
    %v1022 = vld [vmem:[%s5] sm:$0xff]
    %v1023 = vld [vmem:[%s5 + $0x8] sm:$0xff]
    %v1024 = vld [vmem:[%s5 + $0x10] sm:$0xff]
    %v1025 = vld [vmem:[%s5 + $0x18] sm:$0xff]
    %v1026 = vld [vmem:[%s5 + $0x20] sm:$0xff]
    %v1027 = vld [vmem:[%s5 + $0x28] sm:$0xff]
    %v1028 = vld [vmem:[%s5 + $0x30] sm:$0xff]
    %v1029 = vld [vmem:[%s5 + $0x38] sm:$0xff]
    %s1030 = scalar_lea.vmem %s4, 8
    %v1031 = vld [vmem:[%s1030] sm:$0xff]
    %v1033 = vsel %vm948, %v1031, 0
    %1035 = vmatprep.subr.mxu0 0.0
    %1036 = vmatpush1.msra.mxu0 %v945
    %1037 = vmatprep.subr.mxu0 0.0
    %1038 = vmatpush1.msra.mxu0 %v946
    %1039 = vmatprep.subr.mxu0 0.0
    %1040 = vmatpush1.msra.mxu0 0.0
    %1041 = vmatprep.subr.mxu0 0.0
    %1042 = vmatpush1.msra.mxu0 0.0
    %1043 = vmatprep.subr.mxu0 0.0
    %1044 = vmatpush1.msra.mxu0 0.0
    %1045 = vmatprep.subr.mxu0 0.0
    %1046 = vmatpush1.msra.mxu0 0.0
    %1047 = vmatprep.subr.mxu0 0.0
    %1048 = vmatpush1.msra.mxu0 0.0
    %1049 = vmatprep.subr.mxu0 0.0
    %1050 = vmatpush1.msra.mxu0 0.0
    %1051 = vmatprep.subr.mxu0 0.0
    %1052 = vmatpush1.msra.mxu0 0.0
    %1053 = vmatprep.subr.mxu0 0.0
    %1054 = vmatpush1.msra.mxu0 0.0
    %1055 = vmatprep.subr.mxu0 0.0
    %1056 = vmatpush1.msra.mxu0 0.0
    %1057 = vmatprep.subr.mxu0 0.0
    %1058 = vmatpush1.msra.mxu0 0.0
    %1059 = vmatprep.subr.mxu0 0.0
    %1060 = vmatpush1.msra.mxu0 0.0
    %1061 = vmatprep.subr.mxu0 0.0
    %1062 = vmatpush1.msra.mxu0 0.0
    %1063 = vmatprep.subr.mxu0 0.0
    %1064 = vmatpush1.msra.mxu0 0.0
    %1065 = vmatprep.subr.mxu0 0.0
    %1066 = vmatpush1.msra.mxu0 0.0
    %1067 = vmatprep.subr.mxu0 0.0
    %1068 = vmatpush1.msra.mxu0 0.0
    %1069 = vmatprep.subr.mxu0 0.0
    %1070 = vmatpush1.msra.mxu0 0.0
    %1071 = vmatprep.subr.mxu0 0.0
    %1072 = vmatpush1.msra.mxu0 0.0
    %1073 = vmatprep.subr.mxu0 0.0
    %1074 = vmatpush1.msra.mxu0 0.0
    %1075 = vmatprep.subr.mxu0 0.0
    %1076 = vmatpush1.msra.mxu0 0.0
    %1077 = vmatprep.subr.mxu0 0.0
    %1078 = vmatpush1.msra.mxu0 0.0
    %1079 = vmatprep.subr.mxu0 0.0
    %1080 = vmatpush1.msra.mxu0 0.0
    %1081 = vmatprep.subr.mxu0 0.0
    %1082 = vmatpush1.msra.mxu0 0.0
    %1083 = vmatprep.subr.mxu0 0.0
    %1084 = vmatpush1.msra.mxu0 0.0
    %1085 = vmatprep.subr.mxu0 0.0
    %1086 = vmatpush1.msra.mxu0 0.0
    %1087 = vmatprep.subr.mxu0 0.0
    %1088 = vmatpush1.msra.mxu0 0.0
    %1089 = vmatprep.subr.mxu0 0.0
    %1090 = vmatpush1.msra.mxu0 0.0
    %1091 = vmatprep.subr.mxu0 0.0
    %1092 = vmatpush1.msra.mxu0 0.0
    %1093 = vmatprep.subr.mxu0 0.0
    %1094 = vmatpush1.msra.mxu0 0.0
    %1095 = vmatprep.subr.mxu0 0.0
    %1096 = vmatpush1.msra.mxu0 0.0
    %1097 = vmatprep.subr.mxu0 0.0
    %1098 = vmatpush1.msra.mxu0 0.0
    %1099 = vmatprep.mubr.f32.mxu0 0.0
    %1100 = vmatmul.mubr.f32.gmra.mrb[0].mxu0 %v1033
    %v1101 = vpop.f32.mrb[0].mxu0
    %v1102 = vadd.f32 0.0, %v1101
    %v1103 = vpop.f32.mrb[0].mxu0
    %1104 = vdwg.mxu0
    %s1105 = scalar_lea.vmem %s5, 64
    %v1106 = vld [vmem:[%s1105] sm:$0xff]
    %v1107 = vld [vmem:[%s1105 + $0x8] sm:$0xff]
    %v1108 = vld [vmem:[%s1105 + $0x10] sm:$0xff]
    %v1109 = vld [vmem:[%s1105 + $0x18] sm:$0xff]
    %v1110 = vld [vmem:[%s1105 + $0x20] sm:$0xff]
    %v1111 = vld [vmem:[%s1105 + $0x28] sm:$0xff]
    %v1112 = vld [vmem:[%s1105 + $0x30] sm:$0xff]
    %v1113 = vld [vmem:[%s1105 + $0x38] sm:$0xff]
    %vm1114 = vcmask 523264
    %v1116 = vsel %vm1114, %v1102, 0
    %1118 = vmatprep.subr.mxu0 0.0
    %1119 = vmatpush1.msra.mxu0 %v1106
    %1120 = vmatprep.subr.mxu0 0.0
    %1121 = vmatpush1.msra.mxu0 %v1107
    %1122 = vmatprep.subr.mxu0 0.0
    %1123 = vmatpush1.msra.mxu0 %v1108
    %1124 = vmatprep.subr.mxu0 0.0
    %1125 = vmatpush1.msra.mxu0 %v1109
    %1126 = vmatprep.subr.mxu0 0.0
    %1127 = vmatpush1.msra.mxu0 %v1110
    %1128 = vmatprep.subr.mxu0 0.0
    %1129 = vmatpush1.msra.mxu0 %v1111
    %1130 = vmatprep.subr.mxu0 0.0
    %1131 = vmatpush1.msra.mxu0 %v1112
    %1132 = vmatprep.subr.mxu0 0.0
    %1133 = vmatpush1.msra.mxu0 %v1113
    %1134 = vmatprep.subr.mxu0 0.0
    %1135 = vmatpush1.msra.mxu0 0.0
    %1136 = vmatprep.subr.mxu0 0.0
    %1137 = vmatpush1.msra.mxu0 0.0
    %1138 = vmatprep.subr.mxu0 0.0
    %1139 = vmatpush1.msra.mxu0 0.0
    %1140 = vmatprep.subr.mxu0 0.0
    %1141 = vmatpush1.msra.mxu0 0.0
    %1142 = vmatprep.subr.mxu0 0.0
    %1143 = vmatpush1.msra.mxu0 0.0
    %1144 = vmatprep.subr.mxu0 0.0
    %1145 = vmatpush1.msra.mxu0 0.0
    %1146 = vmatprep.subr.mxu0 0.0
    %1147 = vmatpush1.msra.mxu0 0.0
    %1148 = vmatprep.subr.mxu0 0.0
    %1149 = vmatpush1.msra.mxu0 0.0
    %1150 = vmatprep.subr.mxu0 0.0
    %1151 = vmatpush1.msra.mxu0 0.0
    %1152 = vmatprep.subr.mxu0 0.0
    %1153 = vmatpush1.msra.mxu0 0.0
    %1154 = vmatprep.subr.mxu0 0.0
    %1155 = vmatpush1.msra.mxu0 0.0
    %1156 = vmatprep.subr.mxu0 0.0
    %1157 = vmatpush1.msra.mxu0 0.0
    %1158 = vmatprep.subr.mxu0 0.0
    %1159 = vmatpush1.msra.mxu0 0.0
    %1160 = vmatprep.subr.mxu0 0.0
    %1161 = vmatpush1.msra.mxu0 0.0
    %1162 = vmatprep.subr.mxu0 0.0
    %1163 = vmatpush1.msra.mxu0 0.0
    %1164 = vmatprep.subr.mxu0 0.0
    %1165 = vmatpush1.msra.mxu0 0.0
    %1166 = vmatprep.subr.mxu0 0.0
    %1167 = vmatpush1.msra.mxu0 0.0
    %1168 = vmatprep.subr.mxu0 0.0
    %1169 = vmatpush1.msra.mxu0 0.0
    %1170 = vmatprep.subr.mxu0 0.0
    %1171 = vmatpush1.msra.mxu0 0.0
    %1172 = vmatprep.subr.mxu0 0.0
    %1173 = vmatpush1.msra.mxu0 0.0
    %1174 = vmatprep.subr.mxu0 0.0
    %1175 = vmatpush1.msra.mxu0 0.0
    %1176 = vmatprep.subr.mxu0 0.0
    %1177 = vmatpush1.msra.mxu0 0.0
    %1178 = vmatprep.subr.mxu0 0.0
    %1179 = vmatpush1.msra.mxu0 0.0
    %1180 = vmatprep.subr.mxu0 0.0
    %1181 = vmatpush1.msra.mxu0 0.0
    %1182 = vmatprep.mubr.f32.mxu0 0.0
    %1183 = vmatmul.mubr.f32.gmra.mrb[0].mxu0 %v1116
    %v1184 = vpop.f32.mrb[0].mxu0
    %v1185 = vadd.f32 0.0, %v1184
    %v1186 = vpop.f32.mrb[0].mxu0
    %1187 = vdwg.mxu0
    %v1189 = vsel %vm1114, %v1019, 0
    %1191 = vmatprep.subr.mxu0 0.0
    %1192 = vmatpush1.msra.mxu0 %v1022
    %1193 = vmatprep.subr.mxu0 0.0
    %1194 = vmatpush1.msra.mxu0 %v1023
    %1195 = vmatprep.subr.mxu0 0.0
    %1196 = vmatpush1.msra.mxu0 %v1024
    %1197 = vmatprep.subr.mxu0 0.0
    %1198 = vmatpush1.msra.mxu0 %v1025
    %1199 = vmatprep.subr.mxu0 0.0
    %1200 = vmatpush1.msra.mxu0 %v1026
    %1201 = vmatprep.subr.mxu0 0.0
    %1202 = vmatpush1.msra.mxu0 %v1027
    %1203 = vmatprep.subr.mxu0 0.0
    %1204 = vmatpush1.msra.mxu0 %v1028
    %1205 = vmatprep.subr.mxu0 0.0
    %1206 = vmatpush1.msra.mxu0 %v1029
    %1207 = vmatprep.subr.mxu0 0.0
    %1208 = vmatpush1.msra.mxu0 0.0
    %1209 = vmatprep.subr.mxu0 0.0
    %1210 = vmatpush1.msra.mxu0 0.0
    %1211 = vmatprep.subr.mxu0 0.0
    %1212 = vmatpush1.msra.mxu0 0.0
    %1213 = vmatprep.subr.mxu0 0.0
    %1214 = vmatpush1.msra.mxu0 0.0
    %1215 = vmatprep.subr.mxu0 0.0
    %1216 = vmatpush1.msra.mxu0 0.0
    %1217 = vmatprep.subr.mxu0 0.0
    %1218 = vmatpush1.msra.mxu0 0.0
    %1219 = vmatprep.subr.mxu0 0.0
    %1220 = vmatpush1.msra.mxu0 0.0
    %1221 = vmatprep.subr.mxu0 0.0
    %1222 = vmatpush1.msra.mxu0 0.0
    %1223 = vmatprep.subr.mxu0 0.0
    %1224 = vmatpush1.msra.mxu0 0.0
    %1225 = vmatprep.subr.mxu0 0.0
    %1226 = vmatpush1.msra.mxu0 0.0
    %1227 = vmatprep.subr.mxu0 0.0
    %1228 = vmatpush1.msra.mxu0 0.0
    %1229 = vmatprep.subr.mxu0 0.0
    %1230 = vmatpush1.msra.mxu0 0.0
    %1231 = vmatprep.subr.mxu0 0.0
    %1232 = vmatpush1.msra.mxu0 0.0
    %1233 = vmatprep.subr.mxu0 0.0
    %1234 = vmatpush1.msra.mxu0 0.0
    %1235 = vmatprep.subr.mxu0 0.0
    %1236 = vmatpush1.msra.mxu0 0.0
    %1237 = vmatprep.subr.mxu0 0.0
    %1238 = vmatpush1.msra.mxu0 0.0
    %1239 = vmatprep.subr.mxu0 0.0
    %1240 = vmatpush1.msra.mxu0 0.0
    %1241 = vmatprep.subr.mxu0 0.0
    %1242 = vmatpush1.msra.mxu0 0.0
    %1243 = vmatprep.subr.mxu0 0.0
    %1244 = vmatpush1.msra.mxu0 0.0
    %1245 = vmatprep.subr.mxu0 0.0
    %1246 = vmatpush1.msra.mxu0 0.0
    %1247 = vmatprep.subr.mxu0 0.0
    %1248 = vmatpush1.msra.mxu0 0.0
    %1249 = vmatprep.subr.mxu0 0.0
    %1250 = vmatpush1.msra.mxu0 0.0
    %1251 = vmatprep.subr.mxu0 0.0
    %1252 = vmatpush1.msra.mxu0 0.0
    %1253 = vmatprep.subr.mxu0 0.0
    %1254 = vmatpush1.msra.mxu0 0.0
    %1255 = vmatprep.mubr.f32.mxu0 0.0
    %1256 = vmatmul.mubr.f32.gmra.mrb[0].mxu0 %v1189
    %v1257 = vpop.f32.mrb[0].mxu0
    %v1258 = vadd.f32 %v1185, %v1257
    %v1259 = vpop.f32.mrb[0].mxu0
    %1260 = vdwg.mxu0
    %s1261 = scalar_lea.vmem %s4, 16
    %v1262 = vld [vmem:[%s1261] sm:$0xff]
    %v1264 = vsel %vm948, %v1262, 0
    %1266 = vmatprep.subr.mxu0 0.0
    %1267 = vmatpush1.msra.mxu0 %v945
    %1268 = vmatprep.subr.mxu0 0.0
    %1269 = vmatpush1.msra.mxu0 %v946
    %1270 = vmatprep.subr.mxu0 0.0
    %1271 = vmatpush1.msra.mxu0 0.0
    %1272 = vmatprep.subr.mxu0 0.0
    %1273 = vmatpush1.msra.mxu0 0.0
    %1274 = vmatprep.subr.mxu0 0.0
    %1275 = vmatpush1.msra.mxu0 0.0
    %1276 = vmatprep.subr.mxu0 0.0
    %1277 = vmatpush1.msra.mxu0 0.0
    %1278 = vmatprep.subr.mxu0 0.0
    %1279 = vmatpush1.msra.mxu0 0.0
    %1280 = vmatprep.subr.mxu0 0.0
    %1281 = vmatpush1.msra.mxu0 0.0
    %1282 = vmatprep.subr.mxu0 0.0
    %1283 = vmatpush1.msra.mxu0 0.0
    %1284 = vmatprep.subr.mxu0 0.0
    %1285 = vmatpush1.msra.mxu0 0.0
    %1286 = vmatprep.subr.mxu0 0.0
    %1287 = vmatpush1.msra.mxu0 0.0
    %1288 = vmatprep.subr.mxu0 0.0
    %1289 = vmatpush1.msra.mxu0 0.0
    %1290 = vmatprep.subr.mxu0 0.0
    %1291 = vmatpush1.msra.mxu0 0.0
    %1292 = vmatprep.subr.mxu0 0.0
    %1293 = vmatpush1.msra.mxu0 0.0
    %1294 = vmatprep.subr.mxu0 0.0
    %1295 = vmatpush1.msra.mxu0 0.0
    %1296 = vmatprep.subr.mxu0 0.0
    %1297 = vmatpush1.msra.mxu0 0.0
    %1298 = vmatprep.subr.mxu0 0.0
    %1299 = vmatpush1.msra.mxu0 0.0
    %1300 = vmatprep.subr.mxu0 0.0
    %1301 = vmatpush1.msra.mxu0 0.0
    %1302 = vmatprep.subr.mxu0 0.0
    %1303 = vmatpush1.msra.mxu0 0.0
    %1304 = vmatprep.subr.mxu0 0.0
    %1305 = vmatpush1.msra.mxu0 0.0
    %1306 = vmatprep.subr.mxu0 0.0
    %1307 = vmatpush1.msra.mxu0 0.0
    %1308 = vmatprep.subr.mxu0 0.0
    %1309 = vmatpush1.msra.mxu0 0.0
    %1310 = vmatprep.subr.mxu0 0.0
    %1311 = vmatpush1.msra.mxu0 0.0
    %1312 = vmatprep.subr.mxu0 0.0
    %1313 = vmatpush1.msra.mxu0 0.0
    %1314 = vmatprep.subr.mxu0 0.0
    %1315 = vmatpush1.msra.mxu0 0.0
    %1316 = vmatprep.subr.mxu0 0.0
    %1317 = vmatpush1.msra.mxu0 0.0
    %1318 = vmatprep.subr.mxu0 0.0
    %1319 = vmatpush1.msra.mxu0 0.0
    %1320 = vmatprep.subr.mxu0 0.0
    %1321 = vmatpush1.msra.mxu0 0.0
    %1322 = vmatprep.subr.mxu0 0.0
    %1323 = vmatpush1.msra.mxu0 0.0
    %1324 = vmatprep.subr.mxu0 0.0
    %1325 = vmatpush1.msra.mxu0 0.0
    %1326 = vmatprep.subr.mxu0 0.0
    %1327 = vmatpush1.msra.mxu0 0.0
    %1328 = vmatprep.subr.mxu0 0.0
    %1329 = vmatpush1.msra.mxu0 0.0
    %1330 = vmatprep.mubr.f32.mxu0 0.0
    %1331 = vmatmul.mubr.f32.gmra.mrb[0].mxu0 %v1264
    %v1332 = vpop.f32.mrb[0].mxu0
    %v1333 = vadd.f32 0.0, %v1332
    %v1334 = vpop.f32.mrb[0].mxu0
    %1335 = vdwg.mxu0
    %s1336 = scalar_lea.vmem %s5, 128
    %v1337 = vld [vmem:[%s1336] sm:$0xff]
    %v1338 = vld [vmem:[%s1336 + $0x8] sm:$0xff]
    %v1339 = vld [vmem:[%s1336 + $0x10] sm:$0xff]
    %v1340 = vld [vmem:[%s1336 + $0x18] sm:$0xff]
    %v1341 = vld [vmem:[%s1336 + $0x20] sm:$0xff]
    %v1342 = vld [vmem:[%s1336 + $0x28] sm:$0xff]
    %v1343 = vld [vmem:[%s1336 + $0x30] sm:$0xff]
    %v1344 = vld [vmem:[%s1336 + $0x38] sm:$0xff]
    %v1346 = vsel %vm1114, %v1333, 0
    %1348 = vmatprep.subr.mxu0 0.0
    %1349 = vmatpush1.msra.mxu0 %v1337
    %1350 = vmatprep.subr.mxu0 0.0
    %1351 = vmatpush1.msra.mxu0 %v1338
    %1352 = vmatprep.subr.mxu0 0.0
    %1353 = vmatpush1.msra.mxu0 %v1339
    %1354 = vmatprep.subr.mxu0 0.0
    %1355 = vmatpush1.msra.mxu0 %v1340
    %1356 = vmatprep.subr.mxu0 0.0
    %1357 = vmatpush1.msra.mxu0 %v1341
    %1358 = vmatprep.subr.mxu0 0.0
    %1359 = vmatpush1.msra.mxu0 %v1342
    %1360 = vmatprep.subr.mxu0 0.0
    %1361 = vmatpush1.msra.mxu0 %v1343
    %1362 = vmatprep.subr.mxu0 0.0
    %1363 = vmatpush1.msra.mxu0 %v1344
    %1364 = vmatprep.subr.mxu0 0.0
    %1365 = vmatpush1.msra.mxu0 0.0
    %1366 = vmatprep.subr.mxu0 0.0
    %1367 = vmatpush1.msra.mxu0 0.0
    %1368 = vmatprep.subr.mxu0 0.0
    %1369 = vmatpush1.msra.mxu0 0.0
    %1370 = vmatprep.subr.mxu0 0.0
    %1371 = vmatpush1.msra.mxu0 0.0
    %1372 = vmatprep.subr.mxu0 0.0
    %1373 = vmatpush1.msra.mxu0 0.0
    %1374 = vmatprep.subr.mxu0 0.0
    %1375 = vmatpush1.msra.mxu0 0.0
    %1376 = vmatprep.subr.mxu0 0.0
    %1377 = vmatpush1.msra.mxu0 0.0
    %1378 = vmatprep.subr.mxu0 0.0
    %1379 = vmatpush1.msra.mxu0 0.0
    %1380 = vmatprep.subr.mxu0 0.0
    %1381 = vmatpush1.msra.mxu0 0.0
    %1382 = vmatprep.subr.mxu0 0.0
    %1383 = vmatpush1.msra.mxu0 0.0
    %1384 = vmatprep.subr.mxu0 0.0
    %1385 = vmatpush1.msra.mxu0 0.0
    %1386 = vmatprep.subr.mxu0 0.0
    %1387 = vmatpush1.msra.mxu0 0.0
    %1388 = vmatprep.subr.mxu0 0.0
    %1389 = vmatpush1.msra.mxu0 0.0
    %1390 = vmatprep.subr.mxu0 0.0
    %1391 = vmatpush1.msra.mxu0 0.0
    %1392 = vmatprep.subr.mxu0 0.0
    %1393 = vmatpush1.msra.mxu0 0.0
    %1394 = vmatprep.subr.mxu0 0.0
    %1395 = vmatpush1.msra.mxu0 0.0
    %1396 = vmatprep.subr.mxu0 0.0
    %1397 = vmatpush1.msra.mxu0 0.0
    %1398 = vmatprep.subr.mxu0 0.0
    %1399 = vmatpush1.msra.mxu0 0.0
    %1400 = vmatprep.subr.mxu0 0.0
    %1401 = vmatpush1.msra.mxu0 0.0
    %1402 = vmatprep.subr.mxu0 0.0
    %1403 = vmatpush1.msra.mxu0 0.0
    %1404 = vmatprep.subr.mxu0 0.0
    %1405 = vmatpush1.msra.mxu0 0.0
    %1406 = vmatprep.subr.mxu0 0.0
    %1407 = vmatpush1.msra.mxu0 0.0
    %1408 = vmatprep.subr.mxu0 0.0
    %1409 = vmatpush1.msra.mxu0 0.0
    %1410 = vmatprep.subr.mxu0 0.0
    %1411 = vmatpush1.msra.mxu0 0.0
    %1412 = vmatprep.mubr.f32.mxu0 0.0
    %1413 = vmatmul.mubr.f32.gmra.mrb[0].mxu0 %v1346
    %v1414 = vpop.f32.mrb[0].mxu0
    %v1415 = vadd.f32 0.0, %v1414
    %v1416 = vpop.f32.mrb[0].mxu0
    %1417 = vdwg.mxu0
    %v1418 = vadd.f32 %v1258, %v1415
    %s1419 = scalar_lea.vmem %s4, 24
    %v1420 = vld [vmem:[%s1419] sm:$0xff]
    %v1422 = vsel %vm948, %v1420, 0
    %1424 = vmatprep.subr.mxu0 0.0
    %1425 = vmatpush1.msra.mxu0 %v945
    %1426 = vmatprep.subr.mxu0 0.0
    %1427 = vmatpush1.msra.mxu0 %v946
    %1428 = vmatprep.subr.mxu0 0.0
    %1429 = vmatpush1.msra.mxu0 0.0
    %1430 = vmatprep.subr.mxu0 0.0
    %1431 = vmatpush1.msra.mxu0 0.0
    %1432 = vmatprep.subr.mxu0 0.0
    %1433 = vmatpush1.msra.mxu0 0.0
    %1434 = vmatprep.subr.mxu0 0.0
    %1435 = vmatpush1.msra.mxu0 0.0
    %1436 = vmatprep.subr.mxu0 0.0
    %1437 = vmatpush1.msra.mxu0 0.0
    %1438 = vmatprep.subr.mxu0 0.0
    %1439 = vmatpush1.msra.mxu0 0.0
    %1440 = vmatprep.subr.mxu0 0.0
    %1441 = vmatpush1.msra.mxu0 0.0
    %1442 = vmatprep.subr.mxu0 0.0
    %1443 = vmatpush1.msra.mxu0 0.0
    %1444 = vmatprep.subr.mxu0 0.0
    %1445 = vmatpush1.msra.mxu0 0.0
    %1446 = vmatprep.subr.mxu0 0.0
    %1447 = vmatpush1.msra.mxu0 0.0
    %1448 = vmatprep.subr.mxu0 0.0
    %1449 = vmatpush1.msra.mxu0 0.0
    %1450 = vmatprep.subr.mxu0 0.0
    %1451 = vmatpush1.msra.mxu0 0.0
    %1452 = vmatprep.subr.mxu0 0.0
    %1453 = vmatpush1.msra.mxu0 0.0
    %1454 = vmatprep.subr.mxu0 0.0
    %1455 = vmatpush1.msra.mxu0 0.0
    %1456 = vmatprep.subr.mxu0 0.0
    %1457 = vmatpush1.msra.mxu0 0.0
    %1458 = vmatprep.subr.mxu0 0.0
    %1459 = vmatpush1.msra.mxu0 0.0
    %1460 = vmatprep.subr.mxu0 0.0
    %1461 = vmatpush1.msra.mxu0 0.0
    %1462 = vmatprep.subr.mxu0 0.0
    %1463 = vmatpush1.msra.mxu0 0.0
    %1464 = vmatprep.subr.mxu0 0.0
    %1465 = vmatpush1.msra.mxu0 0.0
    %1466 = vmatprep.subr.mxu0 0.0
    %1467 = vmatpush1.msra.mxu0 0.0
    %1468 = vmatprep.subr.mxu0 0.0
    %1469 = vmatpush1.msra.mxu0 0.0
    %1470 = vmatprep.subr.mxu0 0.0
    %1471 = vmatpush1.msra.mxu0 0.0
    %1472 = vmatprep.subr.mxu0 0.0
    %1473 = vmatpush1.msra.mxu0 0.0
    %1474 = vmatprep.subr.mxu0 0.0
    %1475 = vmatpush1.msra.mxu0 0.0
    %1476 = vmatprep.subr.mxu0 0.0
    %1477 = vmatpush1.msra.mxu0 0.0
    %1478 = vmatprep.subr.mxu0 0.0
    %1479 = vmatpush1.msra.mxu0 0.0
    %1480 = vmatprep.subr.mxu0 0.0
    %1481 = vmatpush1.msra.mxu0 0.0
    %1482 = vmatprep.subr.mxu0 0.0
    %1483 = vmatpush1.msra.mxu0 0.0
    %1484 = vmatprep.subr.mxu0 0.0
    %1485 = vmatpush1.msra.mxu0 0.0
    %1486 = vmatprep.subr.mxu0 0.0
    %1487 = vmatpush1.msra.mxu0 0.0
    %1488 = vmatprep.mubr.f32.mxu0 0.0
    %1489 = vmatmul.mubr.f32.gmra.mrb[0].mxu0 %v1422
    %v1490 = vpop.f32.mrb[0].mxu0
    %v1491 = vadd.f32 0.0, %v1490
    %v1492 = vpop.f32.mrb[0].mxu0
    %1493 = vdwg.mxu0
    %s1494 = scalar_lea.vmem %s5, 192
    %v1495 = vld [vmem:[%s1494] sm:$0xff]
    %v1496 = vld [vmem:[%s1494 + $0x8] sm:$0xff]
    %v1497 = vld [vmem:[%s1494 + $0x10] sm:$0xff]
    %v1498 = vld [vmem:[%s1494 + $0x18] sm:$0xff]
    %v1499 = vld [vmem:[%s1494 + $0x20] sm:$0xff]
    %v1500 = vld [vmem:[%s1494 + $0x28] sm:$0xff]
    %v1501 = vld [vmem:[%s1494 + $0x30] sm:$0xff]
    %v1502 = vld [vmem:[%s1494 + $0x38] sm:$0xff]
    %v1504 = vsel %vm1114, %v1491, 0
    %1506 = vmatprep.subr.mxu0 0.0
    %1507 = vmatpush1.msra.mxu0 %v1495
    %1508 = vmatprep.subr.mxu0 0.0
    %1509 = vmatpush1.msra.mxu0 %v1496
    %1510 = vmatprep.subr.mxu0 0.0
    %1511 = vmatpush1.msra.mxu0 %v1497
    %1512 = vmatprep.subr.mxu0 0.0
    %1513 = vmatpush1.msra.mxu0 %v1498
    %1514 = vmatprep.subr.mxu0 0.0
    %1515 = vmatpush1.msra.mxu0 %v1499
    %1516 = vmatprep.subr.mxu0 0.0
    %1517 = vmatpush1.msra.mxu0 %v1500
    %1518 = vmatprep.subr.mxu0 0.0
    %1519 = vmatpush1.msra.mxu0 %v1501
    %1520 = vmatprep.subr.mxu0 0.0
    %1521 = vmatpush1.msra.mxu0 %v1502
    %1522 = vmatprep.subr.mxu0 0.0
    %1523 = vmatpush1.msra.mxu0 0.0
    %1524 = vmatprep.subr.mxu0 0.0
    %1525 = vmatpush1.msra.mxu0 0.0
    %1526 = vmatprep.subr.mxu0 0.0
    %1527 = vmatpush1.msra.mxu0 0.0
    %1528 = vmatprep.subr.mxu0 0.0
    %1529 = vmatpush1.msra.mxu0 0.0
    %1530 = vmatprep.subr.mxu0 0.0
    %1531 = vmatpush1.msra.mxu0 0.0
    %1532 = vmatprep.subr.mxu0 0.0
    %1533 = vmatpush1.msra.mxu0 0.0
    %1534 = vmatprep.subr.mxu0 0.0
    %1535 = vmatpush1.msra.mxu0 0.0
    %1536 = vmatprep.subr.mxu0 0.0
    %1537 = vmatpush1.msra.mxu0 0.0
    %1538 = vmatprep.subr.mxu0 0.0
    %1539 = vmatpush1.msra.mxu0 0.0
    %1540 = vmatprep.subr.mxu0 0.0
    %1541 = vmatpush1.msra.mxu0 0.0
    %1542 = vmatprep.subr.mxu0 0.0
    %1543 = vmatpush1.msra.mxu0 0.0
    %1544 = vmatprep.subr.mxu0 0.0
    %1545 = vmatpush1.msra.mxu0 0.0
    %1546 = vmatprep.subr.mxu0 0.0
    %1547 = vmatpush1.msra.mxu0 0.0
    %1548 = vmatprep.subr.mxu0 0.0
    %1549 = vmatpush1.msra.mxu0 0.0
    %1550 = vmatprep.subr.mxu0 0.0
    %1551 = vmatpush1.msra.mxu0 0.0
    %1552 = vmatprep.subr.mxu0 0.0
    %1553 = vmatpush1.msra.mxu0 0.0
    %1554 = vmatprep.subr.mxu0 0.0
    %1555 = vmatpush1.msra.mxu0 0.0
    %1556 = vmatprep.subr.mxu0 0.0
    %1557 = vmatpush1.msra.mxu0 0.0
    %1558 = vmatprep.subr.mxu0 0.0
    %1559 = vmatpush1.msra.mxu0 0.0
    %1560 = vmatprep.subr.mxu0 0.0
    %1561 = vmatpush1.msra.mxu0 0.0
    %1562 = vmatprep.subr.mxu0 0.0
    %1563 = vmatpush1.msra.mxu0 0.0
    %1564 = vmatprep.subr.mxu0 0.0
    %1565 = vmatpush1.msra.mxu0 0.0
    %1566 = vmatprep.subr.mxu0 0.0
    %1567 = vmatpush1.msra.mxu0 0.0
    %1568 = vmatprep.subr.mxu0 0.0
    %1569 = vmatpush1.msra.mxu0 0.0
    %1570 = vmatprep.mubr.f32.mxu0 0.0
    %1571 = vmatmul.mubr.f32.gmra.mrb[0].mxu0 %v1504
    %v1572 = vpop.f32.mrb[0].mxu0
    %v1573 = vadd.f32 0.0, %v1572
    %v1574 = vpop.f32.mrb[0].mxu0
    %1575 = vdwg.mxu0
    %v1576 = vadd.f32 %v1418, %v1573
    %s1577 = scalar_lea.vmem %s4, 32
    %v1578 = vld [vmem:[%s1577] sm:$0xff]
    %v1580 = vsel %vm948, %v1578, 0
    %1582 = vmatprep.subr.mxu0 0.0
    %1583 = vmatpush1.msra.mxu0 %v945
    %1584 = vmatprep.subr.mxu0 0.0
    %1585 = vmatpush1.msra.mxu0 %v946
    %1586 = vmatprep.subr.mxu0 0.0
    %1587 = vmatpush1.msra.mxu0 0.0
    %1588 = vmatprep.subr.mxu0 0.0
    %1589 = vmatpush1.msra.mxu0 0.0
    %1590 = vmatprep.subr.mxu0 0.0
    %1591 = vmatpush1.msra.mxu0 0.0
    %1592 = vmatprep.subr.mxu0 0.0
    %1593 = vmatpush1.msra.mxu0 0.0
    %1594 = vmatprep.subr.mxu0 0.0
    %1595 = vmatpush1.msra.mxu0 0.0
    %1596 = vmatprep.subr.mxu0 0.0
    %1597 = vmatpush1.msra.mxu0 0.0
    %1598 = vmatprep.subr.mxu0 0.0
    %1599 = vmatpush1.msra.mxu0 0.0
    %1600 = vmatprep.subr.mxu0 0.0
    %1601 = vmatpush1.msra.mxu0 0.0
    %1602 = vmatprep.subr.mxu0 0.0
    %1603 = vmatpush1.msra.mxu0 0.0
    %1604 = vmatprep.subr.mxu0 0.0
    %1605 = vmatpush1.msra.mxu0 0.0
    %1606 = vmatprep.subr.mxu0 0.0
    %1607 = vmatpush1.msra.mxu0 0.0
    %1608 = vmatprep.subr.mxu0 0.0
    %1609 = vmatpush1.msra.mxu0 0.0
    %1610 = vmatprep.subr.mxu0 0.0
    %1611 = vmatpush1.msra.mxu0 0.0
    %1612 = vmatprep.subr.mxu0 0.0
    %1613 = vmatpush1.msra.mxu0 0.0
    %1614 = vmatprep.subr.mxu0 0.0
    %1615 = vmatpush1.msra.mxu0 0.0
    %1616 = vmatprep.subr.mxu0 0.0
    %1617 = vmatpush1.msra.mxu0 0.0
    %1618 = vmatprep.subr.mxu0 0.0
    %1619 = vmatpush1.msra.mxu0 0.0
    %1620 = vmatprep.subr.mxu0 0.0
    %1621 = vmatpush1.msra.mxu0 0.0
    %1622 = vmatprep.subr.mxu0 0.0
    %1623 = vmatpush1.msra.mxu0 0.0
    %1624 = vmatprep.subr.mxu0 0.0
    %1625 = vmatpush1.msra.mxu0 0.0
    %1626 = vmatprep.subr.mxu0 0.0
    %1627 = vmatpush1.msra.mxu0 0.0
    %1628 = vmatprep.subr.mxu0 0.0
    %1629 = vmatpush1.msra.mxu0 0.0
    %1630 = vmatprep.subr.mxu0 0.0
    %1631 = vmatpush1.msra.mxu0 0.0
    %1632 = vmatprep.subr.mxu0 0.0
    %1633 = vmatpush1.msra.mxu0 0.0
    %1634 = vmatprep.subr.mxu0 0.0
    %1635 = vmatpush1.msra.mxu0 0.0
    %1636 = vmatprep.subr.mxu0 0.0
    %1637 = vmatpush1.msra.mxu0 0.0
    %1638 = vmatprep.subr.mxu0 0.0
    %1639 = vmatpush1.msra.mxu0 0.0
    %1640 = vmatprep.subr.mxu0 0.0
    %1641 = vmatpush1.msra.mxu0 0.0
    %1642 = vmatprep.subr.mxu0 0.0
    %1643 = vmatpush1.msra.mxu0 0.0
    %1644 = vmatprep.subr.mxu0 0.0
    %1645 = vmatpush1.msra.mxu0 0.0
    %1646 = vmatprep.mubr.f32.mxu0 0.0
    %1647 = vmatmul.mubr.f32.gmra.mrb[0].mxu0 %v1580
    %v1648 = vpop.f32.mrb[0].mxu0
    %v1649 = vadd.f32 0.0, %v1648
    %v1650 = vpop.f32.mrb[0].mxu0
    %1651 = vdwg.mxu0
    %s1652 = scalar_lea.vmem %s5, 256
    %v1653 = vld [vmem:[%s1652] sm:$0xff]
    %v1654 = vld [vmem:[%s1652 + $0x8] sm:$0xff]
    %v1655 = vld [vmem:[%s1652 + $0x10] sm:$0xff]
    %v1656 = vld [vmem:[%s1652 + $0x18] sm:$0xff]
    %v1657 = vld [vmem:[%s1652 + $0x20] sm:$0xff]
    %v1658 = vld [vmem:[%s1652 + $0x28] sm:$0xff]
    %v1659 = vld [vmem:[%s1652 + $0x30] sm:$0xff]
    %v1660 = vld [vmem:[%s1652 + $0x38] sm:$0xff]
    %v1662 = vsel %vm1114, %v1649, 0
    %1664 = vmatprep.subr.mxu0 0.0
    %1665 = vmatpush1.msra.mxu0 %v1653
    %1666 = vmatprep.subr.mxu0 0.0
    %1667 = vmatpush1.msra.mxu0 %v1654
    %1668 = vmatprep.subr.mxu0 0.0
    %1669 = vmatpush1.msra.mxu0 %v1655
    %1670 = vmatprep.subr.mxu0 0.0
    %1671 = vmatpush1.msra.mxu0 %v1656
    %1672 = vmatprep.subr.mxu0 0.0
    %1673 = vmatpush1.msra.mxu0 %v1657
    %1674 = vmatprep.subr.mxu0 0.0
    %1675 = vmatpush1.msra.mxu0 %v1658
    %1676 = vmatprep.subr.mxu0 0.0
    %1677 = vmatpush1.msra.mxu0 %v1659
    %1678 = vmatprep.subr.mxu0 0.0
    %1679 = vmatpush1.msra.mxu0 %v1660
    %1680 = vmatprep.subr.mxu0 0.0
    %1681 = vmatpush1.msra.mxu0 0.0
    %1682 = vmatprep.subr.mxu0 0.0
    %1683 = vmatpush1.msra.mxu0 0.0
    %1684 = vmatprep.subr.mxu0 0.0
    %1685 = vmatpush1.msra.mxu0 0.0
    %1686 = vmatprep.subr.mxu0 0.0
    %1687 = vmatpush1.msra.mxu0 0.0
    %1688 = vmatprep.subr.mxu0 0.0
    %1689 = vmatpush1.msra.mxu0 0.0
    %1690 = vmatprep.subr.mxu0 0.0
    %1691 = vmatpush1.msra.mxu0 0.0
    %1692 = vmatprep.subr.mxu0 0.0
    %1693 = vmatpush1.msra.mxu0 0.0
    %1694 = vmatprep.subr.mxu0 0.0
    %1695 = vmatpush1.msra.mxu0 0.0
    %1696 = vmatprep.subr.mxu0 0.0
    %1697 = vmatpush1.msra.mxu0 0.0
    %1698 = vmatprep.subr.mxu0 0.0
    %1699 = vmatpush1.msra.mxu0 0.0
    %1700 = vmatprep.subr.mxu0 0.0
    %1701 = vmatpush1.msra.mxu0 0.0
    %1702 = vmatprep.subr.mxu0 0.0
    %1703 = vmatpush1.msra.mxu0 0.0
    %1704 = vmatprep.subr.mxu0 0.0
    %1705 = vmatpush1.msra.mxu0 0.0
    %1706 = vmatprep.subr.mxu0 0.0
    %1707 = vmatpush1.msra.mxu0 0.0
    %1708 = vmatprep.subr.mxu0 0.0
    %1709 = vmatpush1.msra.mxu0 0.0
    %1710 = vmatprep.subr.mxu0 0.0
    %1711 = vmatpush1.msra.mxu0 0.0
    %1712 = vmatprep.subr.mxu0 0.0
    %1713 = vmatpush1.msra.mxu0 0.0
    %1714 = vmatprep.subr.mxu0 0.0
    %1715 = vmatpush1.msra.mxu0 0.0
    %1716 = vmatprep.subr.mxu0 0.0
    %1717 = vmatpush1.msra.mxu0 0.0
    %1718 = vmatprep.subr.mxu0 0.0
    %1719 = vmatpush1.msra.mxu0 0.0
    %1720 = vmatprep.subr.mxu0 0.0
    %1721 = vmatpush1.msra.mxu0 0.0
    %1722 = vmatprep.subr.mxu0 0.0
    %1723 = vmatpush1.msra.mxu0 0.0
    %1724 = vmatprep.subr.mxu0 0.0
    %1725 = vmatpush1.msra.mxu0 0.0
    %1726 = vmatprep.subr.mxu0 0.0
    %1727 = vmatpush1.msra.mxu0 0.0
    %1728 = vmatprep.mubr.f32.mxu0 0.0
    %1729 = vmatmul.mubr.f32.gmra.mrb[0].mxu0 %v1662
    %v1730 = vpop.f32.mrb[0].mxu0
    %v1731 = vadd.f32 0.0, %v1730
    %v1732 = vpop.f32.mrb[0].mxu0
    %1733 = vdwg.mxu0
    %v1734 = vadd.f32 %v1576, %v1731
    %v1735 = vld [vmem:[%s6] sm:$0x1]
    %v1737 = vlaneseq
    %v1738 = vshrl.u32 %v1737, 7
    %v1739 = vsub.s32 0, %v1738
    %v1740 = vrot.slane %v1735, %v1739
    %v1742 = vadd.f32 %v1734, %v1740
    %s1743 = sld [smem:[#allocation2 + $0x1]]
    %vm1744 = vcmp.ge.f32.partialorder %v1742, 0.0
    %v1745 = vstv %s1743
    %v1746 = vmul.f32 %v1745, %v1742
    %v1747 = vsel %vm1744, %v1742, %v1746
    %v1748 = vld [vmem:[%s7] sm:$0xff]
    %v1749 = vld [vmem:[%s7 + $0x8] sm:$0xff]
    %vm1750 = vcmask 64512
    %v1752 = vsel %vm1750, %v1748, 0
    %v1755 = vsel %vm1750, %v1749, 0
    %1757 = vmatprep.subr.mxu0 0.0
    %1758 = vmatpush1.msra.mxu0 %v1747
    %1759 = vmatprep.subr.mxu0 0.0
    %1760 = vmatpush1.msra.mxu0 0.0
    %1761 = vmatprep.subr.mxu0 0.0
    %1762 = vmatpush1.msra.mxu0 0.0
    %1763 = vmatprep.subr.mxu0 0.0
    %1764 = vmatpush1.msra.mxu0 0.0
    %1765 = vmatprep.subr.mxu0 0.0
    %1766 = vmatpush1.msra.mxu0 0.0
    %1767 = vmatprep.subr.mxu0 0.0
    %1768 = vmatpush1.msra.mxu0 0.0
    %1769 = vmatprep.subr.mxu0 0.0
    %1770 = vmatpush1.msra.mxu0 0.0
    %1771 = vmatprep.subr.mxu0 0.0
    %1772 = vmatpush1.msra.mxu0 0.0
    %1773 = vmatprep.subr.mxu0 0.0
    %1774 = vmatpush1.msra.mxu0 0.0
    %1775 = vmatprep.subr.mxu0 0.0
    %1776 = vmatpush1.msra.mxu0 0.0
    %1777 = vmatprep.subr.mxu0 0.0
    %1778 = vmatpush1.msra.mxu0 0.0
    %1779 = vmatprep.subr.mxu0 0.0
    %1780 = vmatpush1.msra.mxu0 0.0
    %1781 = vmatprep.subr.mxu0 0.0
    %1782 = vmatpush1.msra.mxu0 0.0
    %1783 = vmatprep.subr.mxu0 0.0
    %1784 = vmatpush1.msra.mxu0 0.0
    %1785 = vmatprep.subr.mxu0 0.0
    %1786 = vmatpush1.msra.mxu0 0.0
    %1787 = vmatprep.subr.mxu0 0.0
    %1788 = vmatpush1.msra.mxu0 0.0
    %1789 = vmatprep.subr.mxu0 0.0
    %1790 = vmatpush1.msra.mxu0 0.0
    %1791 = vmatprep.subr.mxu0 0.0
    %1792 = vmatpush1.msra.mxu0 0.0
    %1793 = vmatprep.subr.mxu0 0.0
    %1794 = vmatpush1.msra.mxu0 0.0
    %1795 = vmatprep.subr.mxu0 0.0
    %1796 = vmatpush1.msra.mxu0 0.0
    %1797 = vmatprep.subr.mxu0 0.0
    %1798 = vmatpush1.msra.mxu0 0.0
    %1799 = vmatprep.subr.mxu0 0.0
    %1800 = vmatpush1.msra.mxu0 0.0
    %1801 = vmatprep.subr.mxu0 0.0
    %1802 = vmatpush1.msra.mxu0 0.0
    %1803 = vmatprep.subr.mxu0 0.0
    %1804 = vmatpush1.msra.mxu0 0.0
    %1805 = vmatprep.subr.mxu0 0.0
    %1806 = vmatpush1.msra.mxu0 0.0
    %1807 = vmatprep.subr.mxu0 0.0
    %1808 = vmatpush1.msra.mxu0 0.0
    %1809 = vmatprep.subr.mxu0 0.0
    %1810 = vmatpush1.msra.mxu0 0.0
    %1811 = vmatprep.subr.mxu0 0.0
    %1812 = vmatpush1.msra.mxu0 0.0
    %1813 = vmatprep.subr.mxu0 0.0
    %1814 = vmatpush1.msra.mxu0 0.0
    %1815 = vmatprep.subr.mxu0 0.0
    %1816 = vmatpush1.msra.mxu0 0.0
    %1817 = vmatprep.subr.mxu0 0.0
    %1818 = vmatpush1.msra.mxu0 0.0
    %1819 = vmatprep.subr.mxu0 0.0
    %1820 = vmatpush1.msra.mxu0 0.0
    %1821 = vmatprep.mubr.f32.mxu0 0.0
    %1822 = vmatmul.mubr.f32.gmra.mrb[0].mxu0 %v1752
    %v1823 = vpop.f32.mrb[0].mxu0
    %v1824 = vadd.f32 0.0, %v1823
    %v1825 = vpop.f32.mrb[0].mxu0
    %1826 = vmatprep.mubr.f32.mxu0 0.0
    %1827 = vmatmul.mubr.f32.gmra.mrb[0].mxu0 %v1755
    %v1828 = vpop.f32.mrb[0].mxu0
    %v1829 = vadd.f32 0.0, %v1828
    %v1830 = vpop.f32.mrb[0].mxu0
    %1831 = vdwg.mxu0
    %v1832 = vld [vmem:[%s8] sm:$0xff]
    %v1833 = vld [vmem:[%s8 + $0x8] sm:$0xff]
    %v1834 = vld [vmem:[%s8 + $0x10] sm:$0xff]
    %v1835 = vld [vmem:[%s8 + $0x18] sm:$0xff]
    %s1836 = scalar_lea.vmem %s7, 16
    %v1837 = vld [vmem:[%s1836] sm:$0xff]
    %v1838 = vld [vmem:[%s1836 + $0x8] sm:$0xff]
    %v1840 = vsel %vm1750, %v1837, 0
    %v1843 = vsel %vm1750, %v1838, 0
    %1845 = vmatprep.subr.mxu0 0.0
    %1846 = vmatpush1.msra.mxu0 %v1747
    %1847 = vmatprep.subr.mxu0 0.0
    %1848 = vmatpush1.msra.mxu0 0.0
    %1849 = vmatprep.subr.mxu0 0.0
    %1850 = vmatpush1.msra.mxu0 0.0
    %1851 = vmatprep.subr.mxu0 0.0
    %1852 = vmatpush1.msra.mxu0 0.0
    %1853 = vmatprep.subr.mxu0 0.0
    %1854 = vmatpush1.msra.mxu0 0.0
    %1855 = vmatprep.subr.mxu0 0.0
    %1856 = vmatpush1.msra.mxu0 0.0
    %1857 = vmatprep.subr.mxu0 0.0
    %1858 = vmatpush1.msra.mxu0 0.0
    %1859 = vmatprep.subr.mxu0 0.0
    %1860 = vmatpush1.msra.mxu0 0.0
    %1861 = vmatprep.subr.mxu0 0.0
    %1862 = vmatpush1.msra.mxu0 0.0
    %1863 = vmatprep.subr.mxu0 0.0
    %1864 = vmatpush1.msra.mxu0 0.0
    %1865 = vmatprep.subr.mxu0 0.0
    %1866 = vmatpush1.msra.mxu0 0.0
    %1867 = vmatprep.subr.mxu0 0.0
    %1868 = vmatpush1.msra.mxu0 0.0
    %1869 = vmatprep.subr.mxu0 0.0
    %1870 = vmatpush1.msra.mxu0 0.0
    %1871 = vmatprep.subr.mxu0 0.0
    %1872 = vmatpush1.msra.mxu0 0.0
    %1873 = vmatprep.subr.mxu0 0.0
    %1874 = vmatpush1.msra.mxu0 0.0
    %1875 = vmatprep.subr.mxu0 0.0
    %1876 = vmatpush1.msra.mxu0 0.0
    %1877 = vmatprep.subr.mxu0 0.0
    %1878 = vmatpush1.msra.mxu0 0.0
    %1879 = vmatprep.subr.mxu0 0.0
    %1880 = vmatpush1.msra.mxu0 0.0
    %1881 = vmatprep.subr.mxu0 0.0
    %1882 = vmatpush1.msra.mxu0 0.0
    %1883 = vmatprep.subr.mxu0 0.0
    %1884 = vmatpush1.msra.mxu0 0.0
    %1885 = vmatprep.subr.mxu0 0.0
    %1886 = vmatpush1.msra.mxu0 0.0
    %1887 = vmatprep.subr.mxu0 0.0
    %1888 = vmatpush1.msra.mxu0 0.0
    %1889 = vmatprep.subr.mxu0 0.0
    %1890 = vmatpush1.msra.mxu0 0.0
    %1891 = vmatprep.subr.mxu0 0.0
    %1892 = vmatpush1.msra.mxu0 0.0
    %1893 = vmatprep.subr.mxu0 0.0
    %1894 = vmatpush1.msra.mxu0 0.0
    %1895 = vmatprep.subr.mxu0 0.0
    %1896 = vmatpush1.msra.mxu0 0.0
    %1897 = vmatprep.subr.mxu0 0.0
    %1898 = vmatpush1.msra.mxu0 0.0
    %1899 = vmatprep.subr.mxu0 0.0
    %1900 = vmatpush1.msra.mxu0 0.0
    %1901 = vmatprep.subr.mxu0 0.0
    %1902 = vmatpush1.msra.mxu0 0.0
    %1903 = vmatprep.subr.mxu0 0.0
    %1904 = vmatpush1.msra.mxu0 0.0
    %1905 = vmatprep.subr.mxu0 0.0
    %1906 = vmatpush1.msra.mxu0 0.0
    %1907 = vmatprep.subr.mxu0 0.0
    %1908 = vmatpush1.msra.mxu0 0.0
    %1909 = vmatprep.mubr.f32.mxu0 0.0
    %1910 = vmatmul.mubr.f32.gmra.mrb[0].mxu0 %v1840
    %v1911 = vpop.f32.mrb[0].mxu0
    %v1912 = vadd.f32 0.0, %v1911
    %v1913 = vpop.f32.mrb[0].mxu0
    %1914 = vmatprep.mubr.f32.mxu0 0.0
    %1915 = vmatmul.mubr.f32.gmra.mrb[0].mxu0 %v1843
    %v1916 = vpop.f32.mrb[0].mxu0
    %v1917 = vadd.f32 0.0, %v1916
    %v1918 = vpop.f32.mrb[0].mxu0
    %1919 = vdwg.mxu0
    %s1920 = scalar_lea.vmem %s8, 32
    %v1921 = vld [vmem:[%s1920] sm:$0xff]
    %v1922 = vld [vmem:[%s1920 + $0x8] sm:$0xff]
    %v1923 = vld [vmem:[%s1920 + $0x10] sm:$0xff]
    %v1924 = vld [vmem:[%s1920 + $0x18] sm:$0xff]
    %v1926 = vsel %vm66, %v1912, 0
    %v1929 = vsel %vm66, %v1917, 0
    %1931 = vmatprep.subr.mxu0 0.0
    %1932 = vmatpush1.msra.mxu0 %v1921
    %1933 = vmatprep.subr.mxu0 0.0
    %1934 = vmatpush1.msra.mxu0 %v1922
    %1935 = vmatprep.subr.mxu0 0.0
    %1936 = vmatpush1.msra.mxu0 %v1923
    %1937 = vmatprep.subr.mxu0 0.0
    %1938 = vmatpush1.msra.mxu0 %v1924
    %1939 = vmatprep.subr.mxu0 0.0
    %1940 = vmatpush1.msra.mxu0 0.0
    %1941 = vmatprep.subr.mxu0 0.0
    %1942 = vmatpush1.msra.mxu0 0.0
    %1943 = vmatprep.subr.mxu0 0.0
    %1944 = vmatpush1.msra.mxu0 0.0
    %1945 = vmatprep.subr.mxu0 0.0
    %1946 = vmatpush1.msra.mxu0 0.0
    %1947 = vmatprep.subr.mxu0 0.0
    %1948 = vmatpush1.msra.mxu0 0.0
    %1949 = vmatprep.subr.mxu0 0.0
    %1950 = vmatpush1.msra.mxu0 0.0
    %1951 = vmatprep.subr.mxu0 0.0
    %1952 = vmatpush1.msra.mxu0 0.0
    %1953 = vmatprep.subr.mxu0 0.0
    %1954 = vmatpush1.msra.mxu0 0.0
    %1955 = vmatprep.subr.mxu0 0.0
    %1956 = vmatpush1.msra.mxu0 0.0
    %1957 = vmatprep.subr.mxu0 0.0
    %1958 = vmatpush1.msra.mxu0 0.0
    %1959 = vmatprep.subr.mxu0 0.0
    %1960 = vmatpush1.msra.mxu0 0.0
    %1961 = vmatprep.subr.mxu0 0.0
    %1962 = vmatpush1.msra.mxu0 0.0
    %1963 = vmatprep.subr.mxu0 0.0
    %1964 = vmatpush1.msra.mxu0 0.0
    %1965 = vmatprep.subr.mxu0 0.0
    %1966 = vmatpush1.msra.mxu0 0.0
    %1967 = vmatprep.subr.mxu0 0.0
    %1968 = vmatpush1.msra.mxu0 0.0
    %1969 = vmatprep.subr.mxu0 0.0
    %1970 = vmatpush1.msra.mxu0 0.0
    %1971 = vmatprep.subr.mxu0 0.0
    %1972 = vmatpush1.msra.mxu0 0.0
    %1973 = vmatprep.subr.mxu0 0.0
    %1974 = vmatpush1.msra.mxu0 0.0
    %1975 = vmatprep.subr.mxu0 0.0
    %1976 = vmatpush1.msra.mxu0 0.0
    %1977 = vmatprep.subr.mxu0 0.0
    %1978 = vmatpush1.msra.mxu0 0.0
    %1979 = vmatprep.subr.mxu0 0.0
    %1980 = vmatpush1.msra.mxu0 0.0
    %1981 = vmatprep.subr.mxu0 0.0
    %1982 = vmatpush1.msra.mxu0 0.0
    %1983 = vmatprep.subr.mxu0 0.0
    %1984 = vmatpush1.msra.mxu0 0.0
    %1985 = vmatprep.subr.mxu0 0.0
    %1986 = vmatpush1.msra.mxu0 0.0
    %1987 = vmatprep.subr.mxu0 0.0
    %1988 = vmatpush1.msra.mxu0 0.0
    %1989 = vmatprep.subr.mxu0 0.0
    %1990 = vmatpush1.msra.mxu0 0.0
    %1991 = vmatprep.subr.mxu0 0.0
    %1992 = vmatpush1.msra.mxu0 0.0
    %1993 = vmatprep.subr.mxu0 0.0
    %1994 = vmatpush1.msra.mxu0 0.0
    %1995 = vmatprep.mubr.f32.mxu0 0.0
    %1996 = vmatmul.mubr.f32.gmra.mrb[0].mxu0 %v1926
    %v1997 = vpop.f32.mrb[0].mxu0
    %v1998 = vadd.f32 0.0, %v1997
    %v1999 = vpop.f32.mrb[0].mxu0
    %2000 = vmatprep.mubr.f32.mxu0 0.0
    %2001 = vmatmul.mubr.f32.gmra.mrb[0].mxu0 %v1929
    %v2002 = vpop.f32.mrb[0].mxu0
    %v2003 = vadd.f32 0.0, %v2002
    %v2004 = vpop.f32.mrb[0].mxu0
    %2005 = vdwg.mxu0
    %v2007 = vsel %vm66, %v1824, 0
    %v2010 = vsel %vm66, %v1829, 0
    %2012 = vmatprep.subr.mxu0 0.0
    %2013 = vmatpush1.msra.mxu0 %v1832
    %2014 = vmatprep.subr.mxu0 0.0
    %2015 = vmatpush1.msra.mxu0 %v1833
    %2016 = vmatprep.subr.mxu0 0.0
    %2017 = vmatpush1.msra.mxu0 %v1834
    %2018 = vmatprep.subr.mxu0 0.0
    %2019 = vmatpush1.msra.mxu0 %v1835
    %2020 = vmatprep.subr.mxu0 0.0
    %2021 = vmatpush1.msra.mxu0 0.0
    %2022 = vmatprep.subr.mxu0 0.0
    %2023 = vmatpush1.msra.mxu0 0.0
    %2024 = vmatprep.subr.mxu0 0.0
    %2025 = vmatpush1.msra.mxu0 0.0
    %2026 = vmatprep.subr.mxu0 0.0
    %2027 = vmatpush1.msra.mxu0 0.0
    %2028 = vmatprep.subr.mxu0 0.0
    %2029 = vmatpush1.msra.mxu0 0.0
    %2030 = vmatprep.subr.mxu0 0.0
    %2031 = vmatpush1.msra.mxu0 0.0
    %2032 = vmatprep.subr.mxu0 0.0
    %2033 = vmatpush1.msra.mxu0 0.0
    %2034 = vmatprep.subr.mxu0 0.0
    %2035 = vmatpush1.msra.mxu0 0.0
    %2036 = vmatprep.subr.mxu0 0.0
    %2037 = vmatpush1.msra.mxu0 0.0
    %2038 = vmatprep.subr.mxu0 0.0
    %2039 = vmatpush1.msra.mxu0 0.0
    %2040 = vmatprep.subr.mxu0 0.0
    %2041 = vmatpush1.msra.mxu0 0.0
    %2042 = vmatprep.subr.mxu0 0.0
    %2043 = vmatpush1.msra.mxu0 0.0
    %2044 = vmatprep.subr.mxu0 0.0
    %2045 = vmatpush1.msra.mxu0 0.0
    %2046 = vmatprep.subr.mxu0 0.0
    %2047 = vmatpush1.msra.mxu0 0.0
    %2048 = vmatprep.subr.mxu0 0.0
    %2049 = vmatpush1.msra.mxu0 0.0
    %2050 = vmatprep.subr.mxu0 0.0
    %2051 = vmatpush1.msra.mxu0 0.0
    %2052 = vmatprep.subr.mxu0 0.0
    %2053 = vmatpush1.msra.mxu0 0.0
    %2054 = vmatprep.subr.mxu0 0.0
    %2055 = vmatpush1.msra.mxu0 0.0
    %2056 = vmatprep.subr.mxu0 0.0
    %2057 = vmatpush1.msra.mxu0 0.0
    %2058 = vmatprep.subr.mxu0 0.0
    %2059 = vmatpush1.msra.mxu0 0.0
    %2060 = vmatprep.subr.mxu0 0.0
    %2061 = vmatpush1.msra.mxu0 0.0
    %2062 = vmatprep.subr.mxu0 0.0
    %2063 = vmatpush1.msra.mxu0 0.0
    %2064 = vmatprep.subr.mxu0 0.0
    %2065 = vmatpush1.msra.mxu0 0.0
    %2066 = vmatprep.subr.mxu0 0.0
    %2067 = vmatpush1.msra.mxu0 0.0
    %2068 = vmatprep.subr.mxu0 0.0
    %2069 = vmatpush1.msra.mxu0 0.0
    %2070 = vmatprep.subr.mxu0 0.0
    %2071 = vmatpush1.msra.mxu0 0.0
    %2072 = vmatprep.subr.mxu0 0.0
    %2073 = vmatpush1.msra.mxu0 0.0
    %2074 = vmatprep.subr.mxu0 0.0
    %2075 = vmatpush1.msra.mxu0 0.0
    %2076 = vmatprep.mubr.f32.mxu0 0.0
    %2077 = vmatmul.mubr.f32.gmra.mrb[0].mxu0 %v2007
    %v2078 = vpop.f32.mrb[0].mxu0
    %v2079 = vadd.f32 %v1998, %v2078
    %v2080 = vpop.f32.mrb[0].mxu0
    %2081 = vmatprep.mubr.f32.mxu0 0.0
    %2082 = vmatmul.mubr.f32.gmra.mrb[0].mxu0 %v2010
    %v2083 = vpop.f32.mrb[0].mxu0
    %v2084 = vadd.f32 %v2003, %v2083
    %v2085 = vpop.f32.mrb[0].mxu0
    %2086 = vdwg.mxu0
    %s2087 = scalar_lea.vmem %s7, 32
    %v2088 = vld [vmem:[%s2087] sm:$0xff]
    %v2089 = vld [vmem:[%s2087 + $0x8] sm:$0xff]
    %v2091 = vsel %vm1750, %v2088, 0
    %v2094 = vsel %vm1750, %v2089, 0
    %2096 = vmatprep.subr.mxu0 0.0
    %2097 = vmatpush1.msra.mxu0 %v1747
    %2098 = vmatprep.subr.mxu0 0.0
    %2099 = vmatpush1.msra.mxu0 0.0
    %2100 = vmatprep.subr.mxu0 0.0
    %2101 = vmatpush1.msra.mxu0 0.0
    %2102 = vmatprep.subr.mxu0 0.0
    %2103 = vmatpush1.msra.mxu0 0.0
    %2104 = vmatprep.subr.mxu0 0.0
    %2105 = vmatpush1.msra.mxu0 0.0
    %2106 = vmatprep.subr.mxu0 0.0
    %2107 = vmatpush1.msra.mxu0 0.0
    %2108 = vmatprep.subr.mxu0 0.0
    %2109 = vmatpush1.msra.mxu0 0.0
    %2110 = vmatprep.subr.mxu0 0.0
    %2111 = vmatpush1.msra.mxu0 0.0
    %2112 = vmatprep.subr.mxu0 0.0
    %2113 = vmatpush1.msra.mxu0 0.0
    %2114 = vmatprep.subr.mxu0 0.0
    %2115 = vmatpush1.msra.mxu0 0.0
    %2116 = vmatprep.subr.mxu0 0.0
    %2117 = vmatpush1.msra.mxu0 0.0
    %2118 = vmatprep.subr.mxu0 0.0
    %2119 = vmatpush1.msra.mxu0 0.0
    %2120 = vmatprep.subr.mxu0 0.0
    %2121 = vmatpush1.msra.mxu0 0.0
    %2122 = vmatprep.subr.mxu0 0.0
    %2123 = vmatpush1.msra.mxu0 0.0
    %2124 = vmatprep.subr.mxu0 0.0
    %2125 = vmatpush1.msra.mxu0 0.0
    %2126 = vmatprep.subr.mxu0 0.0
    %2127 = vmatpush1.msra.mxu0 0.0
    %2128 = vmatprep.subr.mxu0 0.0
    %2129 = vmatpush1.msra.mxu0 0.0
    %2130 = vmatprep.subr.mxu0 0.0
    %2131 = vmatpush1.msra.mxu0 0.0
    %2132 = vmatprep.subr.mxu0 0.0
    %2133 = vmatpush1.msra.mxu0 0.0
    %2134 = vmatprep.subr.mxu0 0.0
    %2135 = vmatpush1.msra.mxu0 0.0
    %2136 = vmatprep.subr.mxu0 0.0
    %2137 = vmatpush1.msra.mxu0 0.0
    %2138 = vmatprep.subr.mxu0 0.0
    %2139 = vmatpush1.msra.mxu0 0.0
    %2140 = vmatprep.subr.mxu0 0.0
    %2141 = vmatpush1.msra.mxu0 0.0
    %2142 = vmatprep.subr.mxu0 0.0
    %2143 = vmatpush1.msra.mxu0 0.0
    %2144 = vmatprep.subr.mxu0 0.0
    %2145 = vmatpush1.msra.mxu0 0.0
    %2146 = vmatprep.subr.mxu0 0.0
    %2147 = vmatpush1.msra.mxu0 0.0
    %2148 = vmatprep.subr.mxu0 0.0
    %2149 = vmatpush1.msra.mxu0 0.0
    %2150 = vmatprep.subr.mxu0 0.0
    %2151 = vmatpush1.msra.mxu0 0.0
    %2152 = vmatprep.subr.mxu0 0.0
    %2153 = vmatpush1.msra.mxu0 0.0
    %2154 = vmatprep.subr.mxu0 0.0
    %2155 = vmatpush1.msra.mxu0 0.0
    %2156 = vmatprep.subr.mxu0 0.0
    %2157 = vmatpush1.msra.mxu0 0.0
    %2158 = vmatprep.subr.mxu0 0.0
    %2159 = vmatpush1.msra.mxu0 0.0
    %2160 = vmatprep.mubr.f32.mxu0 0.0
    %2161 = vmatmul.mubr.f32.gmra.mrb[0].mxu0 %v2091
    %v2162 = vpop.f32.mrb[0].mxu0
    %v2163 = vadd.f32 0.0, %v2162
    %v2164 = vpop.f32.mrb[0].mxu0
    %2165 = vmatprep.mubr.f32.mxu0 0.0
    %2166 = vmatmul.mubr.f32.gmra.mrb[0].mxu0 %v2094
    %v2167 = vpop.f32.mrb[0].mxu0
    %v2168 = vadd.f32 0.0, %v2167
    %v2169 = vpop.f32.mrb[0].mxu0
    %2170 = vdwg.mxu0
    %s2171 = scalar_lea.vmem %s8, 64
    %v2172 = vld [vmem:[%s2171] sm:$0xff]
    %v2173 = vld [vmem:[%s2171 + $0x8] sm:$0xff]
    %v2174 = vld [vmem:[%s2171 + $0x10] sm:$0xff]
    %v2175 = vld [vmem:[%s2171 + $0x18] sm:$0xff]
    %v2177 = vsel %vm66, %v2163, 0
    %v2180 = vsel %vm66, %v2168, 0
    %2182 = vmatprep.subr.mxu0 0.0
    %2183 = vmatpush1.msra.mxu0 %v2172
    %2184 = vmatprep.subr.mxu0 0.0
    %2185 = vmatpush1.msra.mxu0 %v2173
    %2186 = vmatprep.subr.mxu0 0.0
    %2187 = vmatpush1.msra.mxu0 %v2174
    %2188 = vmatprep.subr.mxu0 0.0
    %2189 = vmatpush1.msra.mxu0 %v2175
    %2190 = vmatprep.subr.mxu0 0.0
    %2191 = vmatpush1.msra.mxu0 0.0
    %2192 = vmatprep.subr.mxu0 0.0
    %2193 = vmatpush1.msra.mxu0 0.0
    %2194 = vmatprep.subr.mxu0 0.0
    %2195 = vmatpush1.msra.mxu0 0.0
    %2196 = vmatprep.subr.mxu0 0.0
    %2197 = vmatpush1.msra.mxu0 0.0
    %2198 = vmatprep.subr.mxu0 0.0
    %2199 = vmatpush1.msra.mxu0 0.0
    %2200 = vmatprep.subr.mxu0 0.0
    %2201 = vmatpush1.msra.mxu0 0.0
    %2202 = vmatprep.subr.mxu0 0.0
    %2203 = vmatpush1.msra.mxu0 0.0
    %2204 = vmatprep.subr.mxu0 0.0
    %2205 = vmatpush1.msra.mxu0 0.0
    %2206 = vmatprep.subr.mxu0 0.0
    %2207 = vmatpush1.msra.mxu0 0.0
    %2208 = vmatprep.subr.mxu0 0.0
    %2209 = vmatpush1.msra.mxu0 0.0
    %2210 = vmatprep.subr.mxu0 0.0
    %2211 = vmatpush1.msra.mxu0 0.0
    %2212 = vmatprep.subr.mxu0 0.0
    %2213 = vmatpush1.msra.mxu0 0.0
    %2214 = vmatprep.subr.mxu0 0.0
    %2215 = vmatpush1.msra.mxu0 0.0
    %2216 = vmatprep.subr.mxu0 0.0
    %2217 = vmatpush1.msra.mxu0 0.0
    %2218 = vmatprep.subr.mxu0 0.0
    %2219 = vmatpush1.msra.mxu0 0.0
    %2220 = vmatprep.subr.mxu0 0.0
    %2221 = vmatpush1.msra.mxu0 0.0
    %2222 = vmatprep.subr.mxu0 0.0
    %2223 = vmatpush1.msra.mxu0 0.0
    %2224 = vmatprep.subr.mxu0 0.0
    %2225 = vmatpush1.msra.mxu0 0.0
    %2226 = vmatprep.subr.mxu0 0.0
    %2227 = vmatpush1.msra.mxu0 0.0
    %2228 = vmatprep.subr.mxu0 0.0
    %2229 = vmatpush1.msra.mxu0 0.0
    %2230 = vmatprep.subr.mxu0 0.0
    %2231 = vmatpush1.msra.mxu0 0.0
    %2232 = vmatprep.subr.mxu0 0.0
    %2233 = vmatpush1.msra.mxu0 0.0
    %2234 = vmatprep.subr.mxu0 0.0
    %2235 = vmatpush1.msra.mxu0 0.0
    %2236 = vmatprep.subr.mxu0 0.0
    %2237 = vmatpush1.msra.mxu0 0.0
    %2238 = vmatprep.subr.mxu0 0.0
    %2239 = vmatpush1.msra.mxu0 0.0
    %2240 = vmatprep.subr.mxu0 0.0
    %2241 = vmatpush1.msra.mxu0 0.0
    %2242 = vmatprep.subr.mxu0 0.0
    %2243 = vmatpush1.msra.mxu0 0.0
    %2244 = vmatprep.subr.mxu0 0.0
    %2245 = vmatpush1.msra.mxu0 0.0
    %2246 = vmatprep.mubr.f32.mxu0 0.0
    %2247 = vmatmul.mubr.f32.gmra.mrb[0].mxu0 %v2177
    %v2248 = vpop.f32.mrb[0].mxu0
    %v2249 = vadd.f32 0.0, %v2248
    %v2250 = vpop.f32.mrb[0].mxu0
    %2251 = vmatprep.mubr.f32.mxu0 0.0
    %2252 = vmatmul.mubr.f32.gmra.mrb[0].mxu0 %v2180
    %v2253 = vpop.f32.mrb[0].mxu0
    %v2254 = vadd.f32 0.0, %v2253
    %v2255 = vpop.f32.mrb[0].mxu0
    %2256 = vdwg.mxu0
    %v2257 = vadd.f32 %v2079, %v2249
    %v2258 = vadd.f32 %v2084, %v2254
    %s2259 = scalar_lea.vmem %s7, 48
    %v2260 = vld [vmem:[%s2259] sm:$0xff]
    %v2261 = vld [vmem:[%s2259 + $0x8] sm:$0xff]
    %v2263 = vsel %vm1750, %v2260, 0
    %v2266 = vsel %vm1750, %v2261, 0
    %2268 = vmatprep.subr.mxu0 0.0
    %2269 = vmatpush1.msra.mxu0 %v1747
    %2270 = vmatprep.subr.mxu0 0.0
    %2271 = vmatpush1.msra.mxu0 0.0
    %2272 = vmatprep.subr.mxu0 0.0
    %2273 = vmatpush1.msra.mxu0 0.0
    %2274 = vmatprep.subr.mxu0 0.0
    %2275 = vmatpush1.msra.mxu0 0.0
    %2276 = vmatprep.subr.mxu0 0.0
    %2277 = vmatpush1.msra.mxu0 0.0
    %2278 = vmatprep.subr.mxu0 0.0
    %2279 = vmatpush1.msra.mxu0 0.0
    %2280 = vmatprep.subr.mxu0 0.0
    %2281 = vmatpush1.msra.mxu0 0.0
    %2282 = vmatprep.subr.mxu0 0.0
    %2283 = vmatpush1.msra.mxu0 0.0
    %2284 = vmatprep.subr.mxu0 0.0
    %2285 = vmatpush1.msra.mxu0 0.0
    %2286 = vmatprep.subr.mxu0 0.0
    %2287 = vmatpush1.msra.mxu0 0.0
    %2288 = vmatprep.subr.mxu0 0.0
    %2289 = vmatpush1.msra.mxu0 0.0
    %2290 = vmatprep.subr.mxu0 0.0
    %2291 = vmatpush1.msra.mxu0 0.0
    %2292 = vmatprep.subr.mxu0 0.0
    %2293 = vmatpush1.msra.mxu0 0.0
    %2294 = vmatprep.subr.mxu0 0.0
    %2295 = vmatpush1.msra.mxu0 0.0
    %2296 = vmatprep.subr.mxu0 0.0
    %2297 = vmatpush1.msra.mxu0 0.0
    %2298 = vmatprep.subr.mxu0 0.0
    %2299 = vmatpush1.msra.mxu0 0.0
    %2300 = vmatprep.subr.mxu0 0.0
    %2301 = vmatpush1.msra.mxu0 0.0
    %2302 = vmatprep.subr.mxu0 0.0
    %2303 = vmatpush1.msra.mxu0 0.0
    %2304 = vmatprep.subr.mxu0 0.0
    %2305 = vmatpush1.msra.mxu0 0.0
    %2306 = vmatprep.subr.mxu0 0.0
    %2307 = vmatpush1.msra.mxu0 0.0
    %2308 = vmatprep.subr.mxu0 0.0
    %2309 = vmatpush1.msra.mxu0 0.0
    %2310 = vmatprep.subr.mxu0 0.0
    %2311 = vmatpush1.msra.mxu0 0.0
    %2312 = vmatprep.subr.mxu0 0.0
    %2313 = vmatpush1.msra.mxu0 0.0
    %2314 = vmatprep.subr.mxu0 0.0
    %2315 = vmatpush1.msra.mxu0 0.0
    %2316 = vmatprep.subr.mxu0 0.0
    %2317 = vmatpush1.msra.mxu0 0.0
    %2318 = vmatprep.subr.mxu0 0.0
    %2319 = vmatpush1.msra.mxu0 0.0
    %2320 = vmatprep.subr.mxu0 0.0
    %2321 = vmatpush1.msra.mxu0 0.0
    %2322 = vmatprep.subr.mxu0 0.0
    %2323 = vmatpush1.msra.mxu0 0.0
    %2324 = vmatprep.subr.mxu0 0.0
    %2325 = vmatpush1.msra.mxu0 0.0
    %2326 = vmatprep.subr.mxu0 0.0
    %2327 = vmatpush1.msra.mxu0 0.0
    %2328 = vmatprep.subr.mxu0 0.0
    %2329 = vmatpush1.msra.mxu0 0.0
    %2330 = vmatprep.subr.mxu0 0.0
    %2331 = vmatpush1.msra.mxu0 0.0
    %2332 = vmatprep.mubr.f32.mxu0 0.0
    %2333 = vmatmul.mubr.f32.gmra.mrb[0].mxu0 %v2263
    %v2334 = vpop.f32.mrb[0].mxu0
    %v2335 = vadd.f32 0.0, %v2334
    %v2336 = vpop.f32.mrb[0].mxu0
    %2337 = vmatprep.mubr.f32.mxu0 0.0
    %2338 = vmatmul.mubr.f32.gmra.mrb[0].mxu0 %v2266
    %v2339 = vpop.f32.mrb[0].mxu0
    %v2340 = vadd.f32 0.0, %v2339
    %v2341 = vpop.f32.mrb[0].mxu0
    %2342 = vdwg.mxu0
    %s2343 = scalar_lea.vmem %s8, 96
    %v2344 = vld [vmem:[%s2343] sm:$0xff]
    %v2345 = vld [vmem:[%s2343 + $0x8] sm:$0xff]
    %v2346 = vld [vmem:[%s2343 + $0x10] sm:$0xff]
    %v2347 = vld [vmem:[%s2343 + $0x18] sm:$0xff]
    %v2349 = vsel %vm66, %v2335, 0
    %v2352 = vsel %vm66, %v2340, 0
    %2354 = vmatprep.subr.mxu0 0.0
    %2355 = vmatpush1.msra.mxu0 %v2344
    %2356 = vmatprep.subr.mxu0 0.0
    %2357 = vmatpush1.msra.mxu0 %v2345
    %2358 = vmatprep.subr.mxu0 0.0
    %2359 = vmatpush1.msra.mxu0 %v2346
    %2360 = vmatprep.subr.mxu0 0.0
    %2361 = vmatpush1.msra.mxu0 %v2347
    %2362 = vmatprep.subr.mxu0 0.0
    %2363 = vmatpush1.msra.mxu0 0.0
    %2364 = vmatprep.subr.mxu0 0.0
    %2365 = vmatpush1.msra.mxu0 0.0
    %2366 = vmatprep.subr.mxu0 0.0
    %2367 = vmatpush1.msra.mxu0 0.0
    %2368 = vmatprep.subr.mxu0 0.0
    %2369 = vmatpush1.msra.mxu0 0.0
    %2370 = vmatprep.subr.mxu0 0.0
    %2371 = vmatpush1.msra.mxu0 0.0
    %2372 = vmatprep.subr.mxu0 0.0
    %2373 = vmatpush1.msra.mxu0 0.0
    %2374 = vmatprep.subr.mxu0 0.0
    %2375 = vmatpush1.msra.mxu0 0.0
    %2376 = vmatprep.subr.mxu0 0.0
    %2377 = vmatpush1.msra.mxu0 0.0
    %2378 = vmatprep.subr.mxu0 0.0
    %2379 = vmatpush1.msra.mxu0 0.0
    %2380 = vmatprep.subr.mxu0 0.0
    %2381 = vmatpush1.msra.mxu0 0.0
    %2382 = vmatprep.subr.mxu0 0.0
    %2383 = vmatpush1.msra.mxu0 0.0
    %2384 = vmatprep.subr.mxu0 0.0
    %2385 = vmatpush1.msra.mxu0 0.0
    %2386 = vmatprep.subr.mxu0 0.0
    %2387 = vmatpush1.msra.mxu0 0.0
    %2388 = vmatprep.subr.mxu0 0.0
    %2389 = vmatpush1.msra.mxu0 0.0
    %2390 = vmatprep.subr.mxu0 0.0
    %2391 = vmatpush1.msra.mxu0 0.0
    %2392 = vmatprep.subr.mxu0 0.0
    %2393 = vmatpush1.msra.mxu0 0.0
    %2394 = vmatprep.subr.mxu0 0.0
    %2395 = vmatpush1.msra.mxu0 0.0
    %2396 = vmatprep.subr.mxu0 0.0
    %2397 = vmatpush1.msra.mxu0 0.0
    %2398 = vmatprep.subr.mxu0 0.0
    %2399 = vmatpush1.msra.mxu0 0.0
    %2400 = vmatprep.subr.mxu0 0.0
    %2401 = vmatpush1.msra.mxu0 0.0
    %2402 = vmatprep.subr.mxu0 0.0
    %2403 = vmatpush1.msra.mxu0 0.0
    %2404 = vmatprep.subr.mxu0 0.0
    %2405 = vmatpush1.msra.mxu0 0.0
    %2406 = vmatprep.subr.mxu0 0.0
    %2407 = vmatpush1.msra.mxu0 0.0
    %2408 = vmatprep.subr.mxu0 0.0
    %2409 = vmatpush1.msra.mxu0 0.0
    %2410 = vmatprep.subr.mxu0 0.0
    %2411 = vmatpush1.msra.mxu0 0.0
    %2412 = vmatprep.subr.mxu0 0.0
    %2413 = vmatpush1.msra.mxu0 0.0
    %2414 = vmatprep.subr.mxu0 0.0
    %2415 = vmatpush1.msra.mxu0 0.0
    %2416 = vmatprep.subr.mxu0 0.0
    %2417 = vmatpush1.msra.mxu0 0.0
    %2418 = vmatprep.mubr.f32.mxu0 0.0
    %2419 = vmatmul.mubr.f32.gmra.mrb[0].mxu0 %v2349
    %v2420 = vpop.f32.mrb[0].mxu0
    %v2421 = vadd.f32 0.0, %v2420
    %v2422 = vpop.f32.mrb[0].mxu0
    %2423 = vmatprep.mubr.f32.mxu0 0.0
    %2424 = vmatmul.mubr.f32.gmra.mrb[0].mxu0 %v2352
    %v2425 = vpop.f32.mrb[0].mxu0
    %v2426 = vadd.f32 0.0, %v2425
    %v2427 = vpop.f32.mrb[0].mxu0
    %2428 = vdwg.mxu0
    %v2429 = vadd.f32 %v2257, %v2421
    %v2430 = vadd.f32 %v2258, %v2426
    %s2431 = scalar_lea.vmem %s7, 64
    %v2432 = vld [vmem:[%s2431] sm:$0xff]
    %v2433 = vld [vmem:[%s2431 + $0x8] sm:$0xff]
    %v2435 = vsel %vm1750, %v2432, 0
    %v2438 = vsel %vm1750, %v2433, 0
    %2440 = vmatprep.subr.mxu0 0.0
    %2441 = vmatpush1.msra.mxu0 %v1747
    %2442 = vmatprep.subr.mxu0 0.0
    %2443 = vmatpush1.msra.mxu0 0.0
    %2444 = vmatprep.subr.mxu0 0.0
    %2445 = vmatpush1.msra.mxu0 0.0
    %2446 = vmatprep.subr.mxu0 0.0
    %2447 = vmatpush1.msra.mxu0 0.0
    %2448 = vmatprep.subr.mxu0 0.0
    %2449 = vmatpush1.msra.mxu0 0.0
    %2450 = vmatprep.subr.mxu0 0.0
    %2451 = vmatpush1.msra.mxu0 0.0
    %2452 = vmatprep.subr.mxu0 0.0
    %2453 = vmatpush1.msra.mxu0 0.0
    %2454 = vmatprep.subr.mxu0 0.0
    %2455 = vmatpush1.msra.mxu0 0.0
    %2456 = vmatprep.subr.mxu0 0.0
    %2457 = vmatpush1.msra.mxu0 0.0
    %2458 = vmatprep.subr.mxu0 0.0
    %2459 = vmatpush1.msra.mxu0 0.0
    %2460 = vmatprep.subr.mxu0 0.0
    %2461 = vmatpush1.msra.mxu0 0.0
    %2462 = vmatprep.subr.mxu0 0.0
    %2463 = vmatpush1.msra.mxu0 0.0
    %2464 = vmatprep.subr.mxu0 0.0
    %2465 = vmatpush1.msra.mxu0 0.0
    %2466 = vmatprep.subr.mxu0 0.0
    %2467 = vmatpush1.msra.mxu0 0.0
    %2468 = vmatprep.subr.mxu0 0.0
    %2469 = vmatpush1.msra.mxu0 0.0
    %2470 = vmatprep.subr.mxu0 0.0
    %2471 = vmatpush1.msra.mxu0 0.0
    %2472 = vmatprep.subr.mxu0 0.0
    %2473 = vmatpush1.msra.mxu0 0.0
    %2474 = vmatprep.subr.mxu0 0.0
    %2475 = vmatpush1.msra.mxu0 0.0
    %2476 = vmatprep.subr.mxu0 0.0
    %2477 = vmatpush1.msra.mxu0 0.0
    %2478 = vmatprep.subr.mxu0 0.0
    %2479 = vmatpush1.msra.mxu0 0.0
    %2480 = vmatprep.subr.mxu0 0.0
    %2481 = vmatpush1.msra.mxu0 0.0
    %2482 = vmatprep.subr.mxu0 0.0
    %2483 = vmatpush1.msra.mxu0 0.0
    %2484 = vmatprep.subr.mxu0 0.0
    %2485 = vmatpush1.msra.mxu0 0.0
    %2486 = vmatprep.subr.mxu0 0.0
    %2487 = vmatpush1.msra.mxu0 0.0
    %2488 = vmatprep.subr.mxu0 0.0
    %2489 = vmatpush1.msra.mxu0 0.0
    %2490 = vmatprep.subr.mxu0 0.0
    %2491 = vmatpush1.msra.mxu0 0.0
    %2492 = vmatprep.subr.mxu0 0.0
    %2493 = vmatpush1.msra.mxu0 0.0
    %2494 = vmatprep.subr.mxu0 0.0
    %2495 = vmatpush1.msra.mxu0 0.0
    %2496 = vmatprep.subr.mxu0 0.0
    %2497 = vmatpush1.msra.mxu0 0.0
    %2498 = vmatprep.subr.mxu0 0.0
    %2499 = vmatpush1.msra.mxu0 0.0
    %2500 = vmatprep.subr.mxu0 0.0
    %2501 = vmatpush1.msra.mxu0 0.0
    %2502 = vmatprep.subr.mxu0 0.0
    %2503 = vmatpush1.msra.mxu0 0.0
    %2504 = vmatprep.mubr.f32.mxu0 0.0
    %2505 = vmatmul.mubr.f32.gmra.mrb[0].mxu0 %v2435
    %v2506 = vpop.f32.mrb[0].mxu0
    %v2507 = vadd.f32 0.0, %v2506
    %v2508 = vpop.f32.mrb[0].mxu0
    %2509 = vmatprep.mubr.f32.mxu0 0.0
    %2510 = vmatmul.mubr.f32.gmra.mrb[0].mxu0 %v2438
    %v2511 = vpop.f32.mrb[0].mxu0
    %v2512 = vadd.f32 0.0, %v2511
    %v2513 = vpop.f32.mrb[0].mxu0
    %2514 = vdwg.mxu0
    %s2515 = scalar_lea.vmem %s8, 128
    %v2516 = vld [vmem:[%s2515] sm:$0xff]
    %v2517 = vld [vmem:[%s2515 + $0x8] sm:$0xff]
    %v2518 = vld [vmem:[%s2515 + $0x10] sm:$0xff]
    %v2519 = vld [vmem:[%s2515 + $0x18] sm:$0xff]
    %v2521 = vsel %vm66, %v2507, 0
    %v2524 = vsel %vm66, %v2512, 0
    %2526 = vmatprep.subr.mxu0 0.0
    %2527 = vmatpush1.msra.mxu0 %v2516
    %2528 = vmatprep.subr.mxu0 0.0
    %2529 = vmatpush1.msra.mxu0 %v2517
    %2530 = vmatprep.subr.mxu0 0.0
    %2531 = vmatpush1.msra.mxu0 %v2518
    %2532 = vmatprep.subr.mxu0 0.0
    %2533 = vmatpush1.msra.mxu0 %v2519
    %2534 = vmatprep.subr.mxu0 0.0
    %2535 = vmatpush1.msra.mxu0 0.0
    %2536 = vmatprep.subr.mxu0 0.0
    %2537 = vmatpush1.msra.mxu0 0.0
    %2538 = vmatprep.subr.mxu0 0.0
    %2539 = vmatpush1.msra.mxu0 0.0
    %2540 = vmatprep.subr.mxu0 0.0
    %2541 = vmatpush1.msra.mxu0 0.0
    %2542 = vmatprep.subr.mxu0 0.0
    %2543 = vmatpush1.msra.mxu0 0.0
    %2544 = vmatprep.subr.mxu0 0.0
    %2545 = vmatpush1.msra.mxu0 0.0
    %2546 = vmatprep.subr.mxu0 0.0
    %2547 = vmatpush1.msra.mxu0 0.0
    %2548 = vmatprep.subr.mxu0 0.0
    %2549 = vmatpush1.msra.mxu0 0.0
    %2550 = vmatprep.subr.mxu0 0.0
    %2551 = vmatpush1.msra.mxu0 0.0
    %2552 = vmatprep.subr.mxu0 0.0
    %2553 = vmatpush1.msra.mxu0 0.0
    %2554 = vmatprep.subr.mxu0 0.0
    %2555 = vmatpush1.msra.mxu0 0.0
    %2556 = vmatprep.subr.mxu0 0.0
    %2557 = vmatpush1.msra.mxu0 0.0
    %2558 = vmatprep.subr.mxu0 0.0
    %2559 = vmatpush1.msra.mxu0 0.0
    %2560 = vmatprep.subr.mxu0 0.0
    %2561 = vmatpush1.msra.mxu0 0.0
    %2562 = vmatprep.subr.mxu0 0.0
    %2563 = vmatpush1.msra.mxu0 0.0
    %2564 = vmatprep.subr.mxu0 0.0
    %2565 = vmatpush1.msra.mxu0 0.0
    %2566 = vmatprep.subr.mxu0 0.0
    %2567 = vmatpush1.msra.mxu0 0.0
    %2568 = vmatprep.subr.mxu0 0.0
    %2569 = vmatpush1.msra.mxu0 0.0
    %2570 = vmatprep.subr.mxu0 0.0
    %2571 = vmatpush1.msra.mxu0 0.0
    %2572 = vmatprep.subr.mxu0 0.0
    %2573 = vmatpush1.msra.mxu0 0.0
    %2574 = vmatprep.subr.mxu0 0.0
    %2575 = vmatpush1.msra.mxu0 0.0
    %2576 = vmatprep.subr.mxu0 0.0
    %2577 = vmatpush1.msra.mxu0 0.0
    %2578 = vmatprep.subr.mxu0 0.0
    %2579 = vmatpush1.msra.mxu0 0.0
    %2580 = vmatprep.subr.mxu0 0.0
    %2581 = vmatpush1.msra.mxu0 0.0
    %2582 = vmatprep.subr.mxu0 0.0
    %2583 = vmatpush1.msra.mxu0 0.0
    %2584 = vmatprep.subr.mxu0 0.0
    %2585 = vmatpush1.msra.mxu0 0.0
    %2586 = vmatprep.subr.mxu0 0.0
    %2587 = vmatpush1.msra.mxu0 0.0
    %2588 = vmatprep.subr.mxu0 0.0
    %2589 = vmatpush1.msra.mxu0 0.0
    %2590 = vmatprep.mubr.f32.mxu0 0.0
    %2591 = vmatmul.mubr.f32.gmra.mrb[0].mxu0 %v2521
    %v2592 = vpop.f32.mrb[0].mxu0
    %v2593 = vadd.f32 0.0, %v2592
    %v2594 = vpop.f32.mrb[0].mxu0
    %2595 = vmatprep.mubr.f32.mxu0 0.0
    %2596 = vmatmul.mubr.f32.gmra.mrb[0].mxu0 %v2524
    %v2597 = vpop.f32.mrb[0].mxu0
    %v2598 = vadd.f32 0.0, %v2597
    %v2599 = vpop.f32.mrb[0].mxu0
    %2600 = vdwg.mxu0
    %v2601 = vadd.f32 %v2429, %v2593
    %v2602 = vadd.f32 %v2430, %v2598
    %s2603 = scalar_lea.vmem %s7, 80
    %v2604 = vld [vmem:[%s2603] sm:$0xff]
    %v2605 = vld [vmem:[%s2603 + $0x8] sm:$0xff]
    %v2607 = vsel %vm1750, %v2604, 0
    %v2610 = vsel %vm1750, %v2605, 0
    %2612 = vmatprep.subr.mxu0 0.0
    %2613 = vmatpush1.msra.mxu0 %v1747
    %2614 = vmatprep.subr.mxu0 0.0
    %2615 = vmatpush1.msra.mxu0 0.0
    %2616 = vmatprep.subr.mxu0 0.0
    %2617 = vmatpush1.msra.mxu0 0.0
    %2618 = vmatprep.subr.mxu0 0.0
    %2619 = vmatpush1.msra.mxu0 0.0
    %2620 = vmatprep.subr.mxu0 0.0
    %2621 = vmatpush1.msra.mxu0 0.0
    %2622 = vmatprep.subr.mxu0 0.0
    %2623 = vmatpush1.msra.mxu0 0.0
    %2624 = vmatprep.subr.mxu0 0.0
    %2625 = vmatpush1.msra.mxu0 0.0
    %2626 = vmatprep.subr.mxu0 0.0
    %2627 = vmatpush1.msra.mxu0 0.0
    %2628 = vmatprep.subr.mxu0 0.0
    %2629 = vmatpush1.msra.mxu0 0.0
    %2630 = vmatprep.subr.mxu0 0.0
    %2631 = vmatpush1.msra.mxu0 0.0
    %2632 = vmatprep.subr.mxu0 0.0
    %2633 = vmatpush1.msra.mxu0 0.0
    %2634 = vmatprep.subr.mxu0 0.0
    %2635 = vmatpush1.msra.mxu0 0.0
    %2636 = vmatprep.subr.mxu0 0.0
    %2637 = vmatpush1.msra.mxu0 0.0
    %2638 = vmatprep.subr.mxu0 0.0
    %2639 = vmatpush1.msra.mxu0 0.0
    %2640 = vmatprep.subr.mxu0 0.0
    %2641 = vmatpush1.msra.mxu0 0.0
    %2642 = vmatprep.subr.mxu0 0.0
    %2643 = vmatpush1.msra.mxu0 0.0
    %2644 = vmatprep.subr.mxu0 0.0
    %2645 = vmatpush1.msra.mxu0 0.0
    %2646 = vmatprep.subr.mxu0 0.0
    %2647 = vmatpush1.msra.mxu0 0.0
    %2648 = vmatprep.subr.mxu0 0.0
    %2649 = vmatpush1.msra.mxu0 0.0
    %2650 = vmatprep.subr.mxu0 0.0
    %2651 = vmatpush1.msra.mxu0 0.0
    %2652 = vmatprep.subr.mxu0 0.0
    %2653 = vmatpush1.msra.mxu0 0.0
    %2654 = vmatprep.subr.mxu0 0.0
    %2655 = vmatpush1.msra.mxu0 0.0
    %2656 = vmatprep.subr.mxu0 0.0
    %2657 = vmatpush1.msra.mxu0 0.0
    %2658 = vmatprep.subr.mxu0 0.0
    %2659 = vmatpush1.msra.mxu0 0.0
    %2660 = vmatprep.subr.mxu0 0.0
    %2661 = vmatpush1.msra.mxu0 0.0
    %2662 = vmatprep.subr.mxu0 0.0
    %2663 = vmatpush1.msra.mxu0 0.0
    %2664 = vmatprep.subr.mxu0 0.0
    %2665 = vmatpush1.msra.mxu0 0.0
    %2666 = vmatprep.subr.mxu0 0.0
    %2667 = vmatpush1.msra.mxu0 0.0
    %2668 = vmatprep.subr.mxu0 0.0
    %2669 = vmatpush1.msra.mxu0 0.0
    %2670 = vmatprep.subr.mxu0 0.0
    %2671 = vmatpush1.msra.mxu0 0.0
    %2672 = vmatprep.subr.mxu0 0.0
    %2673 = vmatpush1.msra.mxu0 0.0
    %2674 = vmatprep.subr.mxu0 0.0
    %2675 = vmatpush1.msra.mxu0 0.0
    %2676 = vmatprep.mubr.f32.mxu0 0.0
    %2677 = vmatmul.mubr.f32.gmra.mrb[0].mxu0 %v2607
    %v2678 = vpop.f32.mrb[0].mxu0
    %v2679 = vadd.f32 0.0, %v2678
    %v2680 = vpop.f32.mrb[0].mxu0
    %2681 = vmatprep.mubr.f32.mxu0 0.0
    %2682 = vmatmul.mubr.f32.gmra.mrb[0].mxu0 %v2610
    %v2683 = vpop.f32.mrb[0].mxu0
    %v2684 = vadd.f32 0.0, %v2683
    %v2685 = vpop.f32.mrb[0].mxu0
    %2686 = vdwg.mxu0
    %s2687 = scalar_lea.vmem %s8, 160
    %v2688 = vld [vmem:[%s2687] sm:$0xff]
    %v2689 = vld [vmem:[%s2687 + $0x8] sm:$0xff]
    %v2690 = vld [vmem:[%s2687 + $0x10] sm:$0xff]
    %v2691 = vld [vmem:[%s2687 + $0x18] sm:$0xff]
    %v2693 = vsel %vm66, %v2679, 0
    %v2696 = vsel %vm66, %v2684, 0
    %2698 = vmatprep.subr.mxu0 0.0
    %2699 = vmatpush1.msra.mxu0 %v2688
    %2700 = vmatprep.subr.mxu0 0.0
    %2701 = vmatpush1.msra.mxu0 %v2689
    %2702 = vmatprep.subr.mxu0 0.0
    %2703 = vmatpush1.msra.mxu0 %v2690
    %2704 = vmatprep.subr.mxu0 0.0
    %2705 = vmatpush1.msra.mxu0 %v2691
    %2706 = vmatprep.subr.mxu0 0.0
    %2707 = vmatpush1.msra.mxu0 0.0
    %2708 = vmatprep.subr.mxu0 0.0
    %2709 = vmatpush1.msra.mxu0 0.0
    %2710 = vmatprep.subr.mxu0 0.0
    %2711 = vmatpush1.msra.mxu0 0.0
    %2712 = vmatprep.subr.mxu0 0.0
    %2713 = vmatpush1.msra.mxu0 0.0
    %2714 = vmatprep.subr.mxu0 0.0
    %2715 = vmatpush1.msra.mxu0 0.0
    %2716 = vmatprep.subr.mxu0 0.0
    %2717 = vmatpush1.msra.mxu0 0.0
    %2718 = vmatprep.subr.mxu0 0.0
    %2719 = vmatpush1.msra.mxu0 0.0
    %2720 = vmatprep.subr.mxu0 0.0
    %2721 = vmatpush1.msra.mxu0 0.0
    %2722 = vmatprep.subr.mxu0 0.0
    %2723 = vmatpush1.msra.mxu0 0.0
    %2724 = vmatprep.subr.mxu0 0.0
    %2725 = vmatpush1.msra.mxu0 0.0
    %2726 = vmatprep.subr.mxu0 0.0
    %2727 = vmatpush1.msra.mxu0 0.0
    %2728 = vmatprep.subr.mxu0 0.0
    %2729 = vmatpush1.msra.mxu0 0.0
    %2730 = vmatprep.subr.mxu0 0.0
    %2731 = vmatpush1.msra.mxu0 0.0
    %2732 = vmatprep.subr.mxu0 0.0
    %2733 = vmatpush1.msra.mxu0 0.0
    %2734 = vmatprep.subr.mxu0 0.0
    %2735 = vmatpush1.msra.mxu0 0.0
    %2736 = vmatprep.subr.mxu0 0.0
    %2737 = vmatpush1.msra.mxu0 0.0
    %2738 = vmatprep.subr.mxu0 0.0
    %2739 = vmatpush1.msra.mxu0 0.0
    %2740 = vmatprep.subr.mxu0 0.0
    %2741 = vmatpush1.msra.mxu0 0.0
    %2742 = vmatprep.subr.mxu0 0.0
    %2743 = vmatpush1.msra.mxu0 0.0
    %2744 = vmatprep.subr.mxu0 0.0
    %2745 = vmatpush1.msra.mxu0 0.0
    %2746 = vmatprep.subr.mxu0 0.0
    %2747 = vmatpush1.msra.mxu0 0.0
    %2748 = vmatprep.subr.mxu0 0.0
    %2749 = vmatpush1.msra.mxu0 0.0
    %2750 = vmatprep.subr.mxu0 0.0
    %2751 = vmatpush1.msra.mxu0 0.0
    %2752 = vmatprep.subr.mxu0 0.0
    %2753 = vmatpush1.msra.mxu0 0.0
    %2754 = vmatprep.subr.mxu0 0.0
    %2755 = vmatpush1.msra.mxu0 0.0
    %2756 = vmatprep.subr.mxu0 0.0
    %2757 = vmatpush1.msra.mxu0 0.0
    %2758 = vmatprep.subr.mxu0 0.0
    %2759 = vmatpush1.msra.mxu0 0.0
    %2760 = vmatprep.subr.mxu0 0.0
    %2761 = vmatpush1.msra.mxu0 0.0
    %2762 = vmatprep.mubr.f32.mxu0 0.0
    %2763 = vmatmul.mubr.f32.gmra.mrb[0].mxu0 %v2693
    %v2764 = vpop.f32.mrb[0].mxu0
    %v2765 = vadd.f32 0.0, %v2764
    %v2766 = vpop.f32.mrb[0].mxu0
    %2767 = vmatprep.mubr.f32.mxu0 0.0
    %2768 = vmatmul.mubr.f32.gmra.mrb[0].mxu0 %v2696
    %v2769 = vpop.f32.mrb[0].mxu0
    %v2770 = vadd.f32 0.0, %v2769
    %v2771 = vpop.f32.mrb[0].mxu0
    %2772 = vdwg.mxu0
    %v2773 = vadd.f32 %v2601, %v2765
    %v2774 = vadd.f32 %v2602, %v2770
    %v2775 = vld [vmem:[%s9] sm:$0x1]
    %v2777 = vlaneseq
    %v2778 = vshrl.u32 %v2777, 7
    %v2779 = vsub.s32 0, %v2778
    %v2780 = vrot.slane %v2775, %v2779
    %v2782 = vadd.f32 %v2773, %v2780
    %v2783 = vadd.f32 %v2774, %v2780
    %s2784 = sld [smem:[#allocation2 + $0x2]]
    %vm2785 = vcmp.ge.f32.partialorder %v2782, 0.0
    %vm2786 = vcmp.ge.f32.partialorder %v2783, 0.0
    %v2787 = vstv %s2784
    %v2788 = vmul.f32 %v2787, %v2782
    %v2789 = vmul.f32 %v2787, %v2783
    %v2790 = vsel %vm2785, %v2782, %v2788
    %v2791 = vsel %vm2786, %v2783, %v2789
    %v2792 = vld [vmem:[%s10] sm:$0xff]
    %v2793 = vld [vmem:[%s10 + $0x8] sm:$0xff]
    %v2794 = vld [vmem:[%s10 + $0x10] sm:$0xff]
    %v2795 = vld [vmem:[%s10 + $0x18] sm:$0xff]
    %v2797 = vsel %vm948, %v2792, 0
    %v2800 = vsel %vm948, %v2793, 0
    %v2803 = vsel %vm948, %v2794, 0
    %v2806 = vsel %vm948, %v2795, 0
    %2808 = vmatprep.subr.mxu0 0.0
    %2809 = vmatpush1.msra.mxu0 %v2790
    %2810 = vmatprep.subr.mxu0 0.0
    %2811 = vmatpush1.msra.mxu0 %v2791
    %2812 = vmatprep.subr.mxu0 0.0
    %2813 = vmatpush1.msra.mxu0 0.0
    %2814 = vmatprep.subr.mxu0 0.0
    %2815 = vmatpush1.msra.mxu0 0.0
    %2816 = vmatprep.subr.mxu0 0.0
    %2817 = vmatpush1.msra.mxu0 0.0
    %2818 = vmatprep.subr.mxu0 0.0
    %2819 = vmatpush1.msra.mxu0 0.0
    %2820 = vmatprep.subr.mxu0 0.0
    %2821 = vmatpush1.msra.mxu0 0.0
    %2822 = vmatprep.subr.mxu0 0.0
    %2823 = vmatpush1.msra.mxu0 0.0
    %2824 = vmatprep.subr.mxu0 0.0
    %2825 = vmatpush1.msra.mxu0 0.0
    %2826 = vmatprep.subr.mxu0 0.0
    %2827 = vmatpush1.msra.mxu0 0.0
    %2828 = vmatprep.subr.mxu0 0.0
    %2829 = vmatpush1.msra.mxu0 0.0
    %2830 = vmatprep.subr.mxu0 0.0
    %2831 = vmatpush1.msra.mxu0 0.0
    %2832 = vmatprep.subr.mxu0 0.0
    %2833 = vmatpush1.msra.mxu0 0.0
    %2834 = vmatprep.subr.mxu0 0.0
    %2835 = vmatpush1.msra.mxu0 0.0
    %2836 = vmatprep.subr.mxu0 0.0
    %2837 = vmatpush1.msra.mxu0 0.0
    %2838 = vmatprep.subr.mxu0 0.0
    %2839 = vmatpush1.msra.mxu0 0.0
    %2840 = vmatprep.subr.mxu0 0.0
    %2841 = vmatpush1.msra.mxu0 0.0
    %2842 = vmatprep.subr.mxu0 0.0
    %2843 = vmatpush1.msra.mxu0 0.0
    %2844 = vmatprep.subr.mxu0 0.0
    %2845 = vmatpush1.msra.mxu0 0.0
    %2846 = vmatprep.subr.mxu0 0.0
    %2847 = vmatpush1.msra.mxu0 0.0
    %2848 = vmatprep.subr.mxu0 0.0
    %2849 = vmatpush1.msra.mxu0 0.0
    %2850 = vmatprep.subr.mxu0 0.0
    %2851 = vmatpush1.msra.mxu0 0.0
    %2852 = vmatprep.subr.mxu0 0.0
    %2853 = vmatpush1.msra.mxu0 0.0
    %2854 = vmatprep.subr.mxu0 0.0
    %2855 = vmatpush1.msra.mxu0 0.0
    %2856 = vmatprep.subr.mxu0 0.0
    %2857 = vmatpush1.msra.mxu0 0.0
    %2858 = vmatprep.subr.mxu0 0.0
    %2859 = vmatpush1.msra.mxu0 0.0
    %2860 = vmatprep.subr.mxu0 0.0
    %2861 = vmatpush1.msra.mxu0 0.0
    %2862 = vmatprep.subr.mxu0 0.0
    %2863 = vmatpush1.msra.mxu0 0.0
    %2864 = vmatprep.subr.mxu0 0.0
    %2865 = vmatpush1.msra.mxu0 0.0
    %2866 = vmatprep.subr.mxu0 0.0
    %2867 = vmatpush1.msra.mxu0 0.0
    %2868 = vmatprep.subr.mxu0 0.0
    %2869 = vmatpush1.msra.mxu0 0.0
    %2870 = vmatprep.subr.mxu0 0.0
    %2871 = vmatpush1.msra.mxu0 0.0
    %2872 = vmatprep.mubr.f32.mxu0 0.0
    %2873 = vmatmul.mubr.f32.gmra.mrb[0].mxu0 %v2797
    %v2874 = vpop.f32.mrb[0].mxu0
    %v2875 = vadd.f32 0.0, %v2874
    %v2876 = vpop.f32.mrb[0].mxu0
    %2877 = vmatprep.mubr.f32.mxu0 0.0
    %2878 = vmatmul.mubr.f32.gmra.mrb[0].mxu0 %v2800
    %v2879 = vpop.f32.mrb[0].mxu0
    %v2880 = vadd.f32 0.0, %v2879
    %v2881 = vpop.f32.mrb[0].mxu0
    %2882 = vmatprep.mubr.f32.mxu0 0.0
    %2883 = vmatmul.mubr.f32.gmra.mrb[0].mxu0 %v2803
    %v2884 = vpop.f32.mrb[0].mxu0
    %v2885 = vadd.f32 0.0, %v2884
    %v2886 = vpop.f32.mrb[0].mxu0
    %2887 = vmatprep.mubr.f32.mxu0 0.0
    %2888 = vmatmul.mubr.f32.gmra.mrb[0].mxu0 %v2806
    %v2889 = vpop.f32.mrb[0].mxu0
    %v2890 = vadd.f32 0.0, %v2889
    %v2891 = vpop.f32.mrb[0].mxu0
    %2892 = vdwg.mxu0
    %v2893 = vld [vmem:[%s11] sm:$0xff]
    %v2894 = vld [vmem:[%s11 + $0x8] sm:$0xff]
    %v2895 = vld [vmem:[%s11 + $0x10] sm:$0xff]
    %v2896 = vld [vmem:[%s11 + $0x18] sm:$0xff]
    %v2897 = vld [vmem:[%s11 + $0x20] sm:$0xff]
    %v2898 = vld [vmem:[%s11 + $0x28] sm:$0xff]
    %v2899 = vld [vmem:[%s11 + $0x30] sm:$0xff]
    %v2900 = vld [vmem:[%s11 + $0x38] sm:$0xff]
    %s2901 = scalar_lea.vmem %s10, 32
    %v2902 = vld [vmem:[%s2901] sm:$0xff]
    %v2903 = vld [vmem:[%s2901 + $0x8] sm:$0xff]
    %v2904 = vld [vmem:[%s2901 + $0x10] sm:$0xff]
    %v2905 = vld [vmem:[%s2901 + $0x18] sm:$0xff]
    %v2907 = vsel %vm948, %v2902, 0
    %v2910 = vsel %vm948, %v2903, 0
    %v2913 = vsel %vm948, %v2904, 0
    %v2916 = vsel %vm948, %v2905, 0
    %2918 = vmatprep.subr.mxu0 0.0
    %2919 = vmatpush1.msra.mxu0 %v2790
    %2920 = vmatprep.subr.mxu0 0.0
    %2921 = vmatpush1.msra.mxu0 %v2791
    %2922 = vmatprep.subr.mxu0 0.0
    %2923 = vmatpush1.msra.mxu0 0.0
    %2924 = vmatprep.subr.mxu0 0.0
    %2925 = vmatpush1.msra.mxu0 0.0
    %2926 = vmatprep.subr.mxu0 0.0
    %2927 = vmatpush1.msra.mxu0 0.0
    %2928 = vmatprep.subr.mxu0 0.0
    %2929 = vmatpush1.msra.mxu0 0.0
    %2930 = vmatprep.subr.mxu0 0.0
    %2931 = vmatpush1.msra.mxu0 0.0
    %2932 = vmatprep.subr.mxu0 0.0
    %2933 = vmatpush1.msra.mxu0 0.0
    %2934 = vmatprep.subr.mxu0 0.0
    %2935 = vmatpush1.msra.mxu0 0.0
    %2936 = vmatprep.subr.mxu0 0.0
    %2937 = vmatpush1.msra.mxu0 0.0
    %2938 = vmatprep.subr.mxu0 0.0
    %2939 = vmatpush1.msra.mxu0 0.0
    %2940 = vmatprep.subr.mxu0 0.0
    %2941 = vmatpush1.msra.mxu0 0.0
    %2942 = vmatprep.subr.mxu0 0.0
    %2943 = vmatpush1.msra.mxu0 0.0
    %2944 = vmatprep.subr.mxu0 0.0
    %2945 = vmatpush1.msra.mxu0 0.0
    %2946 = vmatprep.subr.mxu0 0.0
    %2947 = vmatpush1.msra.mxu0 0.0
    %2948 = vmatprep.subr.mxu0 0.0
    %2949 = vmatpush1.msra.mxu0 0.0
    %2950 = vmatprep.subr.mxu0 0.0
    %2951 = vmatpush1.msra.mxu0 0.0
    %2952 = vmatprep.subr.mxu0 0.0
    %2953 = vmatpush1.msra.mxu0 0.0
    %2954 = vmatprep.subr.mxu0 0.0
    %2955 = vmatpush1.msra.mxu0 0.0
    %2956 = vmatprep.subr.mxu0 0.0
    %2957 = vmatpush1.msra.mxu0 0.0
    %2958 = vmatprep.subr.mxu0 0.0
    %2959 = vmatpush1.msra.mxu0 0.0
    %2960 = vmatprep.subr.mxu0 0.0
    %2961 = vmatpush1.msra.mxu0 0.0
    %2962 = vmatprep.subr.mxu0 0.0
    %2963 = vmatpush1.msra.mxu0 0.0
    %2964 = vmatprep.subr.mxu0 0.0
    %2965 = vmatpush1.msra.mxu0 0.0
    %2966 = vmatprep.subr.mxu0 0.0
    %2967 = vmatpush1.msra.mxu0 0.0
    %2968 = vmatprep.subr.mxu0 0.0
    %2969 = vmatpush1.msra.mxu0 0.0
    %2970 = vmatprep.subr.mxu0 0.0
    %2971 = vmatpush1.msra.mxu0 0.0
    %2972 = vmatprep.subr.mxu0 0.0
    %2973 = vmatpush1.msra.mxu0 0.0
    %2974 = vmatprep.subr.mxu0 0.0
    %2975 = vmatpush1.msra.mxu0 0.0
    %2976 = vmatprep.subr.mxu0 0.0
    %2977 = vmatpush1.msra.mxu0 0.0
    %2978 = vmatprep.subr.mxu0 0.0
    %2979 = vmatpush1.msra.mxu0 0.0
    %2980 = vmatprep.subr.mxu0 0.0
    %2981 = vmatpush1.msra.mxu0 0.0
    %2982 = vmatprep.mubr.f32.mxu0 0.0
    %2983 = vmatmul.mubr.f32.gmra.mrb[0].mxu0 %v2907
    %v2984 = vpop.f32.mrb[0].mxu0
    %v2985 = vadd.f32 0.0, %v2984
    %v2986 = vpop.f32.mrb[0].mxu0
    %2987 = vmatprep.mubr.f32.mxu0 0.0
    %2988 = vmatmul.mubr.f32.gmra.mrb[0].mxu0 %v2910
    %v2989 = vpop.f32.mrb[0].mxu0
    %v2990 = vadd.f32 0.0, %v2989
    %v2991 = vpop.f32.mrb[0].mxu0
    %2992 = vmatprep.mubr.f32.mxu0 0.0
    %2993 = vmatmul.mubr.f32.gmra.mrb[0].mxu0 %v2913
    %v2994 = vpop.f32.mrb[0].mxu0
    %v2995 = vadd.f32 0.0, %v2994
    %v2996 = vpop.f32.mrb[0].mxu0
    %2997 = vmatprep.mubr.f32.mxu0 0.0
    %2998 = vmatmul.mubr.f32.gmra.mrb[0].mxu0 %v2916
    %v2999 = vpop.f32.mrb[0].mxu0
    %v3000 = vadd.f32 0.0, %v2999
    %v3001 = vpop.f32.mrb[0].mxu0
    %3002 = vdwg.mxu0
    %s3003 = scalar_lea.vmem %s11, 64
    %v3004 = vld [vmem:[%s3003] sm:$0xff]
    %v3005 = vld [vmem:[%s3003 + $0x8] sm:$0xff]
    %v3006 = vld [vmem:[%s3003 + $0x10] sm:$0xff]
    %v3007 = vld [vmem:[%s3003 + $0x18] sm:$0xff]
    %v3008 = vld [vmem:[%s3003 + $0x20] sm:$0xff]
    %v3009 = vld [vmem:[%s3003 + $0x28] sm:$0xff]
    %v3010 = vld [vmem:[%s3003 + $0x30] sm:$0xff]
    %v3011 = vld [vmem:[%s3003 + $0x38] sm:$0xff]
    %v3013 = vsel %vm1114, %v2985, 0
    %v3016 = vsel %vm1114, %v2990, 0
    %v3019 = vsel %vm1114, %v2995, 0
    %v3022 = vsel %vm1114, %v3000, 0
    %3024 = vmatprep.subr.mxu0 0.0
    %3025 = vmatpush1.msra.mxu0 %v3004
    %3026 = vmatprep.subr.mxu0 0.0
    %3027 = vmatpush1.msra.mxu0 %v3005
    %3028 = vmatprep.subr.mxu0 0.0
    %3029 = vmatpush1.msra.mxu0 %v3006
    %3030 = vmatprep.subr.mxu0 0.0
    %3031 = vmatpush1.msra.mxu0 %v3007
    %3032 = vmatprep.subr.mxu0 0.0
    %3033 = vmatpush1.msra.mxu0 %v3008
    %3034 = vmatprep.subr.mxu0 0.0
    %3035 = vmatpush1.msra.mxu0 %v3009
    %3036 = vmatprep.subr.mxu0 0.0
    %3037 = vmatpush1.msra.mxu0 %v3010
    %3038 = vmatprep.subr.mxu0 0.0
    %3039 = vmatpush1.msra.mxu0 %v3011
    %3040 = vmatprep.subr.mxu0 0.0
    %3041 = vmatpush1.msra.mxu0 0.0
    %3042 = vmatprep.subr.mxu0 0.0
    %3043 = vmatpush1.msra.mxu0 0.0
    %3044 = vmatprep.subr.mxu0 0.0
    %3045 = vmatpush1.msra.mxu0 0.0
    %3046 = vmatprep.subr.mxu0 0.0
    %3047 = vmatpush1.msra.mxu0 0.0
    %3048 = vmatprep.subr.mxu0 0.0
    %3049 = vmatpush1.msra.mxu0 0.0
    %3050 = vmatprep.subr.mxu0 0.0
    %3051 = vmatpush1.msra.mxu0 0.0
    %3052 = vmatprep.subr.mxu0 0.0
    %3053 = vmatpush1.msra.mxu0 0.0
    %3054 = vmatprep.subr.mxu0 0.0
    %3055 = vmatpush1.msra.mxu0 0.0
    %3056 = vmatprep.subr.mxu0 0.0
    %3057 = vmatpush1.msra.mxu0 0.0
    %3058 = vmatprep.subr.mxu0 0.0
    %3059 = vmatpush1.msra.mxu0 0.0
    %3060 = vmatprep.subr.mxu0 0.0
    %3061 = vmatpush1.msra.mxu0 0.0
    %3062 = vmatprep.subr.mxu0 0.0
    %3063 = vmatpush1.msra.mxu0 0.0
    %3064 = vmatprep.subr.mxu0 0.0
    %3065 = vmatpush1.msra.mxu0 0.0
    %3066 = vmatprep.subr.mxu0 0.0
    %3067 = vmatpush1.msra.mxu0 0.0
    %3068 = vmatprep.subr.mxu0 0.0
    %3069 = vmatpush1.msra.mxu0 0.0
    %3070 = vmatprep.subr.mxu0 0.0
    %3071 = vmatpush1.msra.mxu0 0.0
    %3072 = vmatprep.subr.mxu0 0.0
    %3073 = vmatpush1.msra.mxu0 0.0
    %3074 = vmatprep.subr.mxu0 0.0
    %3075 = vmatpush1.msra.mxu0 0.0
    %3076 = vmatprep.subr.mxu0 0.0
    %3077 = vmatpush1.msra.mxu0 0.0
    %3078 = vmatprep.subr.mxu0 0.0
    %3079 = vmatpush1.msra.mxu0 0.0
    %3080 = vmatprep.subr.mxu0 0.0
    %3081 = vmatpush1.msra.mxu0 0.0
    %3082 = vmatprep.subr.mxu0 0.0
    %3083 = vmatpush1.msra.mxu0 0.0
    %3084 = vmatprep.subr.mxu0 0.0
    %3085 = vmatpush1.msra.mxu0 0.0
    %3086 = vmatprep.subr.mxu0 0.0
    %3087 = vmatpush1.msra.mxu0 0.0
    %3088 = vmatprep.mubr.f32.mxu0 0.0
    %3089 = vmatmul.mubr.f32.gmra.mrb[0].mxu0 %v3013
    %v3090 = vpop.f32.mrb[0].mxu0
    %v3091 = vadd.f32 0.0, %v3090
    %v3092 = vpop.f32.mrb[0].mxu0
    %3093 = vmatprep.mubr.f32.mxu0 0.0
    %3094 = vmatmul.mubr.f32.gmra.mrb[0].mxu0 %v3016
    %v3095 = vpop.f32.mrb[0].mxu0
    %v3096 = vadd.f32 0.0, %v3095
    %v3097 = vpop.f32.mrb[0].mxu0
    %3098 = vmatprep.mubr.f32.mxu0 0.0
    %3099 = vmatmul.mubr.f32.gmra.mrb[0].mxu0 %v3019
    %v3100 = vpop.f32.mrb[0].mxu0
    %v3101 = vadd.f32 0.0, %v3100
    %v3102 = vpop.f32.mrb[0].mxu0
    %3103 = vmatprep.mubr.f32.mxu0 0.0
    %3104 = vmatmul.mubr.f32.gmra.mrb[0].mxu0 %v3022
    %v3105 = vpop.f32.mrb[0].mxu0
    %v3106 = vadd.f32 0.0, %v3105
    %v3107 = vpop.f32.mrb[0].mxu0
    %3108 = vdwg.mxu0
    %v3110 = vsel %vm1114, %v2875, 0
    %v3113 = vsel %vm1114, %v2880, 0
    %v3116 = vsel %vm1114, %v2885, 0
    %v3119 = vsel %vm1114, %v2890, 0
    %3121 = vmatprep.subr.mxu0 0.0
    %3122 = vmatpush1.msra.mxu0 %v2893
    %3123 = vmatprep.subr.mxu0 0.0
    %3124 = vmatpush1.msra.mxu0 %v2894
    %3125 = vmatprep.subr.mxu0 0.0
    %3126 = vmatpush1.msra.mxu0 %v2895
    %3127 = vmatprep.subr.mxu0 0.0
    %3128 = vmatpush1.msra.mxu0 %v2896
    %3129 = vmatprep.subr.mxu0 0.0
    %3130 = vmatpush1.msra.mxu0 %v2897
    %3131 = vmatprep.subr.mxu0 0.0
    %3132 = vmatpush1.msra.mxu0 %v2898
    %3133 = vmatprep.subr.mxu0 0.0
    %3134 = vmatpush1.msra.mxu0 %v2899
    %3135 = vmatprep.subr.mxu0 0.0
    %3136 = vmatpush1.msra.mxu0 %v2900
    %3137 = vmatprep.subr.mxu0 0.0
    %3138 = vmatpush1.msra.mxu0 0.0
    %3139 = vmatprep.subr.mxu0 0.0
    %3140 = vmatpush1.msra.mxu0 0.0
    %3141 = vmatprep.subr.mxu0 0.0
    %3142 = vmatpush1.msra.mxu0 0.0
    %3143 = vmatprep.subr.mxu0 0.0
    %3144 = vmatpush1.msra.mxu0 0.0
    %3145 = vmatprep.subr.mxu0 0.0
    %3146 = vmatpush1.msra.mxu0 0.0
    %3147 = vmatprep.subr.mxu0 0.0
    %3148 = vmatpush1.msra.mxu0 0.0
    %3149 = vmatprep.subr.mxu0 0.0
    %3150 = vmatpush1.msra.mxu0 0.0
    %3151 = vmatprep.subr.mxu0 0.0
    %3152 = vmatpush1.msra.mxu0 0.0
    %3153 = vmatprep.subr.mxu0 0.0
    %3154 = vmatpush1.msra.mxu0 0.0
    %3155 = vmatprep.subr.mxu0 0.0
    %3156 = vmatpush1.msra.mxu0 0.0
    %3157 = vmatprep.subr.mxu0 0.0
    %3158 = vmatpush1.msra.mxu0 0.0
    %3159 = vmatprep.subr.mxu0 0.0
    %3160 = vmatpush1.msra.mxu0 0.0
    %3161 = vmatprep.subr.mxu0 0.0
    %3162 = vmatpush1.msra.mxu0 0.0
    %3163 = vmatprep.subr.mxu0 0.0
    %3164 = vmatpush1.msra.mxu0 0.0
    %3165 = vmatprep.subr.mxu0 0.0
    %3166 = vmatpush1.msra.mxu0 0.0
    %3167 = vmatprep.subr.mxu0 0.0
    %3168 = vmatpush1.msra.mxu0 0.0
    %3169 = vmatprep.subr.mxu0 0.0
    %3170 = vmatpush1.msra.mxu0 0.0
    %3171 = vmatprep.subr.mxu0 0.0
    %3172 = vmatpush1.msra.mxu0 0.0
    %3173 = vmatprep.subr.mxu0 0.0
    %3174 = vmatpush1.msra.mxu0 0.0
    %3175 = vmatprep.subr.mxu0 0.0
    %3176 = vmatpush1.msra.mxu0 0.0
    %3177 = vmatprep.subr.mxu0 0.0
    %3178 = vmatpush1.msra.mxu0 0.0
    %3179 = vmatprep.subr.mxu0 0.0
    %3180 = vmatpush1.msra.mxu0 0.0
    %3181 = vmatprep.subr.mxu0 0.0
    %3182 = vmatpush1.msra.mxu0 0.0
    %3183 = vmatprep.subr.mxu0 0.0
    %3184 = vmatpush1.msra.mxu0 0.0
    %3185 = vmatprep.mubr.f32.mxu0 0.0
    %3186 = vmatmul.mubr.f32.gmra.mrb[0].mxu0 %v3110
    %v3187 = vpop.f32.mrb[0].mxu0
    %v3188 = vadd.f32 %v3091, %v3187
    %v3189 = vpop.f32.mrb[0].mxu0
    %3190 = vmatprep.mubr.f32.mxu0 0.0
    %3191 = vmatmul.mubr.f32.gmra.mrb[0].mxu0 %v3113
    %v3192 = vpop.f32.mrb[0].mxu0
    %v3193 = vadd.f32 %v3096, %v3192
    %v3194 = vpop.f32.mrb[0].mxu0
    %3195 = vmatprep.mubr.f32.mxu0 0.0
    %3196 = vmatmul.mubr.f32.gmra.mrb[0].mxu0 %v3116
    %v3197 = vpop.f32.mrb[0].mxu0
    %v3198 = vadd.f32 %v3101, %v3197
    %v3199 = vpop.f32.mrb[0].mxu0
    %3200 = vmatprep.mubr.f32.mxu0 0.0
    %3201 = vmatmul.mubr.f32.gmra.mrb[0].mxu0 %v3119
    %v3202 = vpop.f32.mrb[0].mxu0
    %v3203 = vadd.f32 %v3106, %v3202
    %v3204 = vpop.f32.mrb[0].mxu0
    %3205 = vdwg.mxu0
    %s3206 = scalar_lea.vmem %s10, 64
    %v3207 = vld [vmem:[%s3206] sm:$0xff]
    %v3208 = vld [vmem:[%s3206 + $0x8] sm:$0xff]
    %v3209 = vld [vmem:[%s3206 + $0x10] sm:$0xff]
    %v3210 = vld [vmem:[%s3206 + $0x18] sm:$0xff]
    %v3212 = vsel %vm948, %v3207, 0
    %v3215 = vsel %vm948, %v3208, 0
    %v3218 = vsel %vm948, %v3209, 0
    %v3221 = vsel %vm948, %v3210, 0
    %3223 = vmatprep.subr.mxu0 0.0
    %3224 = vmatpush1.msra.mxu0 %v2790
    %3225 = vmatprep.subr.mxu0 0.0
    %3226 = vmatpush1.msra.mxu0 %v2791
    %3227 = vmatprep.subr.mxu0 0.0
    %3228 = vmatpush1.msra.mxu0 0.0
    %3229 = vmatprep.subr.mxu0 0.0
    %3230 = vmatpush1.msra.mxu0 0.0
    %3231 = vmatprep.subr.mxu0 0.0
    %3232 = vmatpush1.msra.mxu0 0.0
    %3233 = vmatprep.subr.mxu0 0.0
    %3234 = vmatpush1.msra.mxu0 0.0
    %3235 = vmatprep.subr.mxu0 0.0
    %3236 = vmatpush1.msra.mxu0 0.0
    %3237 = vmatprep.subr.mxu0 0.0
    %3238 = vmatpush1.msra.mxu0 0.0
    %3239 = vmatprep.subr.mxu0 0.0
    %3240 = vmatpush1.msra.mxu0 0.0
    %3241 = vmatprep.subr.mxu0 0.0
    %3242 = vmatpush1.msra.mxu0 0.0
    %3243 = vmatprep.subr.mxu0 0.0
    %3244 = vmatpush1.msra.mxu0 0.0
    %3245 = vmatprep.subr.mxu0 0.0
    %3246 = vmatpush1.msra.mxu0 0.0
    %3247 = vmatprep.subr.mxu0 0.0
    %3248 = vmatpush1.msra.mxu0 0.0
    %3249 = vmatprep.subr.mxu0 0.0
    %3250 = vmatpush1.msra.mxu0 0.0
    %3251 = vmatprep.subr.mxu0 0.0
    %3252 = vmatpush1.msra.mxu0 0.0
    %3253 = vmatprep.subr.mxu0 0.0
    %3254 = vmatpush1.msra.mxu0 0.0
    %3255 = vmatprep.subr.mxu0 0.0
    %3256 = vmatpush1.msra.mxu0 0.0
    %3257 = vmatprep.subr.mxu0 0.0
    %3258 = vmatpush1.msra.mxu0 0.0
    %3259 = vmatprep.subr.mxu0 0.0
    %3260 = vmatpush1.msra.mxu0 0.0
    %3261 = vmatprep.subr.mxu0 0.0
    %3262 = vmatpush1.msra.mxu0 0.0
    %3263 = vmatprep.subr.mxu0 0.0
    %3264 = vmatpush1.msra.mxu0 0.0
    %3265 = vmatprep.subr.mxu0 0.0
    %3266 = vmatpush1.msra.mxu0 0.0
    %3267 = vmatprep.subr.mxu0 0.0
    %3268 = vmatpush1.msra.mxu0 0.0
    %3269 = vmatprep.subr.mxu0 0.0
    %3270 = vmatpush1.msra.mxu0 0.0
    %3271 = vmatprep.subr.mxu0 0.0
    %3272 = vmatpush1.msra.mxu0 0.0
    %3273 = vmatprep.subr.mxu0 0.0
    %3274 = vmatpush1.msra.mxu0 0.0
    %3275 = vmatprep.subr.mxu0 0.0
    %3276 = vmatpush1.msra.mxu0 0.0
    %3277 = vmatprep.subr.mxu0 0.0
    %3278 = vmatpush1.msra.mxu0 0.0
    %3279 = vmatprep.subr.mxu0 0.0
    %3280 = vmatpush1.msra.mxu0 0.0
    %3281 = vmatprep.subr.mxu0 0.0
    %3282 = vmatpush1.msra.mxu0 0.0
    %3283 = vmatprep.subr.mxu0 0.0
    %3284 = vmatpush1.msra.mxu0 0.0
    %3285 = vmatprep.subr.mxu0 0.0
    %3286 = vmatpush1.msra.mxu0 0.0
    %3287 = vmatprep.mubr.f32.mxu0 0.0
    %3288 = vmatmul.mubr.f32.gmra.mrb[0].mxu0 %v3212
    %v3289 = vpop.f32.mrb[0].mxu0
    %v3290 = vadd.f32 0.0, %v3289
    %v3291 = vpop.f32.mrb[0].mxu0
    %3292 = vmatprep.mubr.f32.mxu0 0.0
    %3293 = vmatmul.mubr.f32.gmra.mrb[0].mxu0 %v3215
    %v3294 = vpop.f32.mrb[0].mxu0
    %v3295 = vadd.f32 0.0, %v3294
    %v3296 = vpop.f32.mrb[0].mxu0
    %3297 = vmatprep.mubr.f32.mxu0 0.0
    %3298 = vmatmul.mubr.f32.gmra.mrb[0].mxu0 %v3218
    %v3299 = vpop.f32.mrb[0].mxu0
    %v3300 = vadd.f32 0.0, %v3299
    %v3301 = vpop.f32.mrb[0].mxu0
    %3302 = vmatprep.mubr.f32.mxu0 0.0
    %3303 = vmatmul.mubr.f32.gmra.mrb[0].mxu0 %v3221
    %v3304 = vpop.f32.mrb[0].mxu0
    %v3305 = vadd.f32 0.0, %v3304
    %v3306 = vpop.f32.mrb[0].mxu0
    %3307 = vdwg.mxu0
    %s3308 = scalar_lea.vmem %s11, 128
    %v3309 = vld [vmem:[%s3308] sm:$0xff]
    %v3310 = vld [vmem:[%s3308 + $0x8] sm:$0xff]
    %v3311 = vld [vmem:[%s3308 + $0x10] sm:$0xff]
    %v3312 = vld [vmem:[%s3308 + $0x18] sm:$0xff]
    %v3313 = vld [vmem:[%s3308 + $0x20] sm:$0xff]
    %v3314 = vld [vmem:[%s3308 + $0x28] sm:$0xff]
    %v3315 = vld [vmem:[%s3308 + $0x30] sm:$0xff]
    %v3316 = vld [vmem:[%s3308 + $0x38] sm:$0xff]
    %v3318 = vsel %vm1114, %v3290, 0
    %v3321 = vsel %vm1114, %v3295, 0
    %v3324 = vsel %vm1114, %v3300, 0
    %v3327 = vsel %vm1114, %v3305, 0
    %3329 = vmatprep.subr.mxu0 0.0
    %3330 = vmatpush1.msra.mxu0 %v3309
    %3331 = vmatprep.subr.mxu0 0.0
    %3332 = vmatpush1.msra.mxu0 %v3310
    %3333 = vmatprep.subr.mxu0 0.0
    %3334 = vmatpush1.msra.mxu0 %v3311
    %3335 = vmatprep.subr.mxu0 0.0
    %3336 = vmatpush1.msra.mxu0 %v3312
    %3337 = vmatprep.subr.mxu0 0.0
    %3338 = vmatpush1.msra.mxu0 %v3313
    %3339 = vmatprep.subr.mxu0 0.0
    %3340 = vmatpush1.msra.mxu0 %v3314
    %3341 = vmatprep.subr.mxu0 0.0
    %3342 = vmatpush1.msra.mxu0 %v3315
    %3343 = vmatprep.subr.mxu0 0.0
    %3344 = vmatpush1.msra.mxu0 %v3316
    %3345 = vmatprep.subr.mxu0 0.0
    %3346 = vmatpush1.msra.mxu0 0.0
    %3347 = vmatprep.subr.mxu0 0.0
    %3348 = vmatpush1.msra.mxu0 0.0
    %3349 = vmatprep.subr.mxu0 0.0
    %3350 = vmatpush1.msra.mxu0 0.0
    %3351 = vmatprep.subr.mxu0 0.0
    %3352 = vmatpush1.msra.mxu0 0.0
    %3353 = vmatprep.subr.mxu0 0.0
    %3354 = vmatpush1.msra.mxu0 0.0
    %3355 = vmatprep.subr.mxu0 0.0
    %3356 = vmatpush1.msra.mxu0 0.0
    %3357 = vmatprep.subr.mxu0 0.0
    %3358 = vmatpush1.msra.mxu0 0.0
    %3359 = vmatprep.subr.mxu0 0.0
    %3360 = vmatpush1.msra.mxu0 0.0
    %3361 = vmatprep.subr.mxu0 0.0
    %3362 = vmatpush1.msra.mxu0 0.0
    %3363 = vmatprep.subr.mxu0 0.0
    %3364 = vmatpush1.msra.mxu0 0.0
    %3365 = vmatprep.subr.mxu0 0.0
    %3366 = vmatpush1.msra.mxu0 0.0
    %3367 = vmatprep.subr.mxu0 0.0
    %3368 = vmatpush1.msra.mxu0 0.0
    %3369 = vmatprep.subr.mxu0 0.0
    %3370 = vmatpush1.msra.mxu0 0.0
    %3371 = vmatprep.subr.mxu0 0.0
    %3372 = vmatpush1.msra.mxu0 0.0
    %3373 = vmatprep.subr.mxu0 0.0
    %3374 = vmatpush1.msra.mxu0 0.0
    %3375 = vmatprep.subr.mxu0 0.0
    %3376 = vmatpush1.msra.mxu0 0.0
    %3377 = vmatprep.subr.mxu0 0.0
    %3378 = vmatpush1.msra.mxu0 0.0
    %3379 = vmatprep.subr.mxu0 0.0
    %3380 = vmatpush1.msra.mxu0 0.0
    %3381 = vmatprep.subr.mxu0 0.0
    %3382 = vmatpush1.msra.mxu0 0.0
    %3383 = vmatprep.subr.mxu0 0.0
    %3384 = vmatpush1.msra.mxu0 0.0
    %3385 = vmatprep.subr.mxu0 0.0
    %3386 = vmatpush1.msra.mxu0 0.0
    %3387 = vmatprep.subr.mxu0 0.0
    %3388 = vmatpush1.msra.mxu0 0.0
    %3389 = vmatprep.subr.mxu0 0.0
    %3390 = vmatpush1.msra.mxu0 0.0
    %3391 = vmatprep.subr.mxu0 0.0
    %3392 = vmatpush1.msra.mxu0 0.0
    %3393 = vmatprep.mubr.f32.mxu0 0.0
    %3394 = vmatmul.mubr.f32.gmra.mrb[0].mxu0 %v3318
    %v3395 = vpop.f32.mrb[0].mxu0
    %v3396 = vadd.f32 0.0, %v3395
    %v3397 = vpop.f32.mrb[0].mxu0
    %3398 = vmatprep.mubr.f32.mxu0 0.0
    %3399 = vmatmul.mubr.f32.gmra.mrb[0].mxu0 %v3321
    %v3400 = vpop.f32.mrb[0].mxu0
    %v3401 = vadd.f32 0.0, %v3400
    %v3402 = vpop.f32.mrb[0].mxu0
    %3403 = vmatprep.mubr.f32.mxu0 0.0
    %3404 = vmatmul.mubr.f32.gmra.mrb[0].mxu0 %v3324
    %v3405 = vpop.f32.mrb[0].mxu0
    %v3406 = vadd.f32 0.0, %v3405
    %v3407 = vpop.f32.mrb[0].mxu0
    %3408 = vmatprep.mubr.f32.mxu0 0.0
    %3409 = vmatmul.mubr.f32.gmra.mrb[0].mxu0 %v3327
    %v3410 = vpop.f32.mrb[0].mxu0
    %v3411 = vadd.f32 0.0, %v3410
    %v3412 = vpop.f32.mrb[0].mxu0
    %3413 = vdwg.mxu0
    %v3414 = vadd.f32 %v3188, %v3396
    %v3415 = vadd.f32 %v3193, %v3401
    %v3416 = vadd.f32 %v3198, %v3406
    %v3417 = vadd.f32 %v3203, %v3411
    %s3418 = scalar_lea.vmem %s10, 96
    %v3419 = vld [vmem:[%s3418] sm:$0xff]
    %v3420 = vld [vmem:[%s3418 + $0x8] sm:$0xff]
    %v3421 = vld [vmem:[%s3418 + $0x10] sm:$0xff]
    %v3422 = vld [vmem:[%s3418 + $0x18] sm:$0xff]
    %v3424 = vsel %vm948, %v3419, 0
    %v3427 = vsel %vm948, %v3420, 0
    %v3430 = vsel %vm948, %v3421, 0
    %v3433 = vsel %vm948, %v3422, 0
    %3435 = vmatprep.subr.mxu0 0.0
    %3436 = vmatpush1.msra.mxu0 %v2790
    %3437 = vmatprep.subr.mxu0 0.0
    %3438 = vmatpush1.msra.mxu0 %v2791
    %3439 = vmatprep.subr.mxu0 0.0
    %3440 = vmatpush1.msra.mxu0 0.0
    %3441 = vmatprep.subr.mxu0 0.0
    %3442 = vmatpush1.msra.mxu0 0.0
    %3443 = vmatprep.subr.mxu0 0.0
    %3444 = vmatpush1.msra.mxu0 0.0
    %3445 = vmatprep.subr.mxu0 0.0
    %3446 = vmatpush1.msra.mxu0 0.0
    %3447 = vmatprep.subr.mxu0 0.0
    %3448 = vmatpush1.msra.mxu0 0.0
    %3449 = vmatprep.subr.mxu0 0.0
    %3450 = vmatpush1.msra.mxu0 0.0
    %3451 = vmatprep.subr.mxu0 0.0
    %3452 = vmatpush1.msra.mxu0 0.0
    %3453 = vmatprep.subr.mxu0 0.0
    %3454 = vmatpush1.msra.mxu0 0.0
    %3455 = vmatprep.subr.mxu0 0.0
    %3456 = vmatpush1.msra.mxu0 0.0
    %3457 = vmatprep.subr.mxu0 0.0
    %3458 = vmatpush1.msra.mxu0 0.0
    %3459 = vmatprep.subr.mxu0 0.0
    %3460 = vmatpush1.msra.mxu0 0.0
    %3461 = vmatprep.subr.mxu0 0.0
    %3462 = vmatpush1.msra.mxu0 0.0
    %3463 = vmatprep.subr.mxu0 0.0
    %3464 = vmatpush1.msra.mxu0 0.0
    %3465 = vmatprep.subr.mxu0 0.0
    %3466 = vmatpush1.msra.mxu0 0.0
    %3467 = vmatprep.subr.mxu0 0.0
    %3468 = vmatpush1.msra.mxu0 0.0
    %3469 = vmatprep.subr.mxu0 0.0
    %3470 = vmatpush1.msra.mxu0 0.0
    %3471 = vmatprep.subr.mxu0 0.0
    %3472 = vmatpush1.msra.mxu0 0.0
    %3473 = vmatprep.subr.mxu0 0.0
    %3474 = vmatpush1.msra.mxu0 0.0
    %3475 = vmatprep.subr.mxu0 0.0
    %3476 = vmatpush1.msra.mxu0 0.0
    %3477 = vmatprep.subr.mxu0 0.0
    %3478 = vmatpush1.msra.mxu0 0.0
    %3479 = vmatprep.subr.mxu0 0.0
    %3480 = vmatpush1.msra.mxu0 0.0
    %3481 = vmatprep.subr.mxu0 0.0
    %3482 = vmatpush1.msra.mxu0 0.0
    %3483 = vmatprep.subr.mxu0 0.0
    %3484 = vmatpush1.msra.mxu0 0.0
    %3485 = vmatprep.subr.mxu0 0.0
    %3486 = vmatpush1.msra.mxu0 0.0
    %3487 = vmatprep.subr.mxu0 0.0
    %3488 = vmatpush1.msra.mxu0 0.0
    %3489 = vmatprep.subr.mxu0 0.0
    %3490 = vmatpush1.msra.mxu0 0.0
    %3491 = vmatprep.subr.mxu0 0.0
    %3492 = vmatpush1.msra.mxu0 0.0
    %3493 = vmatprep.subr.mxu0 0.0
    %3494 = vmatpush1.msra.mxu0 0.0
    %3495 = vmatprep.subr.mxu0 0.0
    %3496 = vmatpush1.msra.mxu0 0.0
    %3497 = vmatprep.subr.mxu0 0.0
    %3498 = vmatpush1.msra.mxu0 0.0
    %3499 = vmatprep.mubr.f32.mxu0 0.0
    %3500 = vmatmul.mubr.f32.gmra.mrb[0].mxu0 %v3424
    %v3501 = vpop.f32.mrb[0].mxu0
    %v3502 = vadd.f32 0.0, %v3501
    %v3503 = vpop.f32.mrb[0].mxu0
    %3504 = vmatprep.mubr.f32.mxu0 0.0
    %3505 = vmatmul.mubr.f32.gmra.mrb[0].mxu0 %v3427
    %v3506 = vpop.f32.mrb[0].mxu0
    %v3507 = vadd.f32 0.0, %v3506
    %v3508 = vpop.f32.mrb[0].mxu0
    %3509 = vmatprep.mubr.f32.mxu0 0.0
    %3510 = vmatmul.mubr.f32.gmra.mrb[0].mxu0 %v3430
    %v3511 = vpop.f32.mrb[0].mxu0
    %v3512 = vadd.f32 0.0, %v3511
    %v3513 = vpop.f32.mrb[0].mxu0
    %3514 = vmatprep.mubr.f32.mxu0 0.0
    %3515 = vmatmul.mubr.f32.gmra.mrb[0].mxu0 %v3433
    %v3516 = vpop.f32.mrb[0].mxu0
    %v3517 = vadd.f32 0.0, %v3516
    %v3518 = vpop.f32.mrb[0].mxu0
    %3519 = vdwg.mxu0
    %s3520 = scalar_lea.vmem %s11, 192
    %v3521 = vld [vmem:[%s3520] sm:$0xff]
    %v3522 = vld [vmem:[%s3520 + $0x8] sm:$0xff]
    %v3523 = vld [vmem:[%s3520 + $0x10] sm:$0xff]
    %v3524 = vld [vmem:[%s3520 + $0x18] sm:$0xff]
    %v3525 = vld [vmem:[%s3520 + $0x20] sm:$0xff]
    %v3526 = vld [vmem:[%s3520 + $0x28] sm:$0xff]
    %v3527 = vld [vmem:[%s3520 + $0x30] sm:$0xff]
    %v3528 = vld [vmem:[%s3520 + $0x38] sm:$0xff]
    %v3530 = vsel %vm1114, %v3502, 0
    %v3533 = vsel %vm1114, %v3507, 0
    %v3536 = vsel %vm1114, %v3512, 0
    %v3539 = vsel %vm1114, %v3517, 0
    %3541 = vmatprep.subr.mxu0 0.0
    %3542 = vmatpush1.msra.mxu0 %v3521
    %3543 = vmatprep.subr.mxu0 0.0
    %3544 = vmatpush1.msra.mxu0 %v3522
    %3545 = vmatprep.subr.mxu0 0.0
    %3546 = vmatpush1.msra.mxu0 %v3523
    %3547 = vmatprep.subr.mxu0 0.0
    %3548 = vmatpush1.msra.mxu0 %v3524
    %3549 = vmatprep.subr.mxu0 0.0
    %3550 = vmatpush1.msra.mxu0 %v3525
    %3551 = vmatprep.subr.mxu0 0.0
    %3552 = vmatpush1.msra.mxu0 %v3526
    %3553 = vmatprep.subr.mxu0 0.0
    %3554 = vmatpush1.msra.mxu0 %v3527
    %3555 = vmatprep.subr.mxu0 0.0
    %3556 = vmatpush1.msra.mxu0 %v3528
    %3557 = vmatprep.subr.mxu0 0.0
    %3558 = vmatpush1.msra.mxu0 0.0
    %3559 = vmatprep.subr.mxu0 0.0
    %3560 = vmatpush1.msra.mxu0 0.0
    %3561 = vmatprep.subr.mxu0 0.0
    %3562 = vmatpush1.msra.mxu0 0.0
    %3563 = vmatprep.subr.mxu0 0.0
    %3564 = vmatpush1.msra.mxu0 0.0
    %3565 = vmatprep.subr.mxu0 0.0
    %3566 = vmatpush1.msra.mxu0 0.0
    %3567 = vmatprep.subr.mxu0 0.0
    %3568 = vmatpush1.msra.mxu0 0.0
    %3569 = vmatprep.subr.mxu0 0.0
    %3570 = vmatpush1.msra.mxu0 0.0
    %3571 = vmatprep.subr.mxu0 0.0
    %3572 = vmatpush1.msra.mxu0 0.0
    %3573 = vmatprep.subr.mxu0 0.0
    %3574 = vmatpush1.msra.mxu0 0.0
    %3575 = vmatprep.subr.mxu0 0.0
    %3576 = vmatpush1.msra.mxu0 0.0
    %3577 = vmatprep.subr.mxu0 0.0
    %3578 = vmatpush1.msra.mxu0 0.0
    %3579 = vmatprep.subr.mxu0 0.0
    %3580 = vmatpush1.msra.mxu0 0.0
    %3581 = vmatprep.subr.mxu0 0.0
    %3582 = vmatpush1.msra.mxu0 0.0
    %3583 = vmatprep.subr.mxu0 0.0
    %3584 = vmatpush1.msra.mxu0 0.0
    %3585 = vmatprep.subr.mxu0 0.0
    %3586 = vmatpush1.msra.mxu0 0.0
    %3587 = vmatprep.subr.mxu0 0.0
    %3588 = vmatpush1.msra.mxu0 0.0
    %3589 = vmatprep.subr.mxu0 0.0
    %3590 = vmatpush1.msra.mxu0 0.0
    %3591 = vmatprep.subr.mxu0 0.0
    %3592 = vmatpush1.msra.mxu0 0.0
    %3593 = vmatprep.subr.mxu0 0.0
    %3594 = vmatpush1.msra.mxu0 0.0
    %3595 = vmatprep.subr.mxu0 0.0
    %3596 = vmatpush1.msra.mxu0 0.0
    %3597 = vmatprep.subr.mxu0 0.0
    %3598 = vmatpush1.msra.mxu0 0.0
    %3599 = vmatprep.subr.mxu0 0.0
    %3600 = vmatpush1.msra.mxu0 0.0
    %3601 = vmatprep.subr.mxu0 0.0
    %3602 = vmatpush1.msra.mxu0 0.0
    %3603 = vmatprep.subr.mxu0 0.0
    %3604 = vmatpush1.msra.mxu0 0.0
    %3605 = vmatprep.mubr.f32.mxu0 0.0
    %3606 = vmatmul.mubr.f32.gmra.mrb[0].mxu0 %v3530
    %v3607 = vpop.f32.mrb[0].mxu0
    %v3608 = vadd.f32 0.0, %v3607
    %v3609 = vpop.f32.mrb[0].mxu0
    %3610 = vmatprep.mubr.f32.mxu0 0.0
    %3611 = vmatmul.mubr.f32.gmra.mrb[0].mxu0 %v3533
    %v3612 = vpop.f32.mrb[0].mxu0
    %v3613 = vadd.f32 0.0, %v3612
    %v3614 = vpop.f32.mrb[0].mxu0
    %3615 = vmatprep.mubr.f32.mxu0 0.0
    %3616 = vmatmul.mubr.f32.gmra.mrb[0].mxu0 %v3536
    %v3617 = vpop.f32.mrb[0].mxu0
    %v3618 = vadd.f32 0.0, %v3617
    %v3619 = vpop.f32.mrb[0].mxu0
    %3620 = vmatprep.mubr.f32.mxu0 0.0
    %3621 = vmatmul.mubr.f32.gmra.mrb[0].mxu0 %v3539
    %v3622 = vpop.f32.mrb[0].mxu0
    %v3623 = vadd.f32 0.0, %v3622
    %v3624 = vpop.f32.mrb[0].mxu0
    %3625 = vdwg.mxu0
    %v3626 = vadd.f32 %v3414, %v3608
    %v3627 = vadd.f32 %v3415, %v3613
    %v3628 = vadd.f32 %v3416, %v3618
    %v3629 = vadd.f32 %v3417, %v3623
    %s3630 = scalar_lea.vmem %s10, 128
    %v3631 = vld [vmem:[%s3630] sm:$0xff]
    %v3632 = vld [vmem:[%s3630 + $0x8] sm:$0xff]
    %v3633 = vld [vmem:[%s3630 + $0x10] sm:$0xff]
    %v3634 = vld [vmem:[%s3630 + $0x18] sm:$0xff]
    %v3636 = vsel %vm948, %v3631, 0
    %v3639 = vsel %vm948, %v3632, 0
    %v3642 = vsel %vm948, %v3633, 0
    %v3645 = vsel %vm948, %v3634, 0
    %3647 = vmatprep.subr.mxu0 0.0
    %3648 = vmatpush1.msra.mxu0 %v2790
    %3649 = vmatprep.subr.mxu0 0.0
    %3650 = vmatpush1.msra.mxu0 %v2791
    %3651 = vmatprep.subr.mxu0 0.0
    %3652 = vmatpush1.msra.mxu0 0.0
    %3653 = vmatprep.subr.mxu0 0.0
    %3654 = vmatpush1.msra.mxu0 0.0
    %3655 = vmatprep.subr.mxu0 0.0
    %3656 = vmatpush1.msra.mxu0 0.0
    %3657 = vmatprep.subr.mxu0 0.0
    %3658 = vmatpush1.msra.mxu0 0.0
    %3659 = vmatprep.subr.mxu0 0.0
    %3660 = vmatpush1.msra.mxu0 0.0
    %3661 = vmatprep.subr.mxu0 0.0
    %3662 = vmatpush1.msra.mxu0 0.0
    %3663 = vmatprep.subr.mxu0 0.0
    %3664 = vmatpush1.msra.mxu0 0.0
    %3665 = vmatprep.subr.mxu0 0.0
    %3666 = vmatpush1.msra.mxu0 0.0
    %3667 = vmatprep.subr.mxu0 0.0
    %3668 = vmatpush1.msra.mxu0 0.0
    %3669 = vmatprep.subr.mxu0 0.0
    %3670 = vmatpush1.msra.mxu0 0.0
    %3671 = vmatprep.subr.mxu0 0.0
    %3672 = vmatpush1.msra.mxu0 0.0
    %3673 = vmatprep.subr.mxu0 0.0
    %3674 = vmatpush1.msra.mxu0 0.0
    %3675 = vmatprep.subr.mxu0 0.0
    %3676 = vmatpush1.msra.mxu0 0.0
    %3677 = vmatprep.subr.mxu0 0.0
    %3678 = vmatpush1.msra.mxu0 0.0
    %3679 = vmatprep.subr.mxu0 0.0
    %3680 = vmatpush1.msra.mxu0 0.0
    %3681 = vmatprep.subr.mxu0 0.0
    %3682 = vmatpush1.msra.mxu0 0.0
    %3683 = vmatprep.subr.mxu0 0.0
    %3684 = vmatpush1.msra.mxu0 0.0
    %3685 = vmatprep.subr.mxu0 0.0
    %3686 = vmatpush1.msra.mxu0 0.0
    %3687 = vmatprep.subr.mxu0 0.0
    %3688 = vmatpush1.msra.mxu0 0.0
    %3689 = vmatprep.subr.mxu0 0.0
    %3690 = vmatpush1.msra.mxu0 0.0
    %3691 = vmatprep.subr.mxu0 0.0
    %3692 = vmatpush1.msra.mxu0 0.0
    %3693 = vmatprep.subr.mxu0 0.0
    %3694 = vmatpush1.msra.mxu0 0.0
    %3695 = vmatprep.subr.mxu0 0.0
    %3696 = vmatpush1.msra.mxu0 0.0
    %3697 = vmatprep.subr.mxu0 0.0
    %3698 = vmatpush1.msra.mxu0 0.0
    %3699 = vmatprep.subr.mxu0 0.0
    %3700 = vmatpush1.msra.mxu0 0.0
    %3701 = vmatprep.subr.mxu0 0.0
    %3702 = vmatpush1.msra.mxu0 0.0
    %3703 = vmatprep.subr.mxu0 0.0
    %3704 = vmatpush1.msra.mxu0 0.0
    %3705 = vmatprep.subr.mxu0 0.0
    %3706 = vmatpush1.msra.mxu0 0.0
    %3707 = vmatprep.subr.mxu0 0.0
    %3708 = vmatpush1.msra.mxu0 0.0
    %3709 = vmatprep.subr.mxu0 0.0
    %3710 = vmatpush1.msra.mxu0 0.0
    %3711 = vmatprep.mubr.f32.mxu0 0.0
    %3712 = vmatmul.mubr.f32.gmra.mrb[0].mxu0 %v3636
    %v3713 = vpop.f32.mrb[0].mxu0
    %v3714 = vadd.f32 0.0, %v3713
    %v3715 = vpop.f32.mrb[0].mxu0
    %3716 = vmatprep.mubr.f32.mxu0 0.0
    %3717 = vmatmul.mubr.f32.gmra.mrb[0].mxu0 %v3639
    %v3718 = vpop.f32.mrb[0].mxu0
    %v3719 = vadd.f32 0.0, %v3718
    %v3720 = vpop.f32.mrb[0].mxu0
    %3721 = vmatprep.mubr.f32.mxu0 0.0
    %3722 = vmatmul.mubr.f32.gmra.mrb[0].mxu0 %v3642
    %v3723 = vpop.f32.mrb[0].mxu0
    %v3724 = vadd.f32 0.0, %v3723
    %v3725 = vpop.f32.mrb[0].mxu0
    %3726 = vmatprep.mubr.f32.mxu0 0.0
    %3727 = vmatmul.mubr.f32.gmra.mrb[0].mxu0 %v3645
    %v3728 = vpop.f32.mrb[0].mxu0
    %v3729 = vadd.f32 0.0, %v3728
    %v3730 = vpop.f32.mrb[0].mxu0
    %3731 = vdwg.mxu0
    %s3732 = scalar_lea.vmem %s11, 256
    %v3733 = vld [vmem:[%s3732] sm:$0xff]
    %v3734 = vld [vmem:[%s3732 + $0x8] sm:$0xff]
    %v3735 = vld [vmem:[%s3732 + $0x10] sm:$0xff]
    %v3736 = vld [vmem:[%s3732 + $0x18] sm:$0xff]
    %v3737 = vld [vmem:[%s3732 + $0x20] sm:$0xff]
    %v3738 = vld [vmem:[%s3732 + $0x28] sm:$0xff]
    %v3739 = vld [vmem:[%s3732 + $0x30] sm:$0xff]
    %v3740 = vld [vmem:[%s3732 + $0x38] sm:$0xff]
    %v3742 = vsel %vm1114, %v3714, 0
    %v3745 = vsel %vm1114, %v3719, 0
    %v3748 = vsel %vm1114, %v3724, 0
    %v3751 = vsel %vm1114, %v3729, 0
    %3753 = vmatprep.subr.mxu0 0.0
    %3754 = vmatpush1.msra.mxu0 %v3733
    %3755 = vmatprep.subr.mxu0 0.0
    %3756 = vmatpush1.msra.mxu0 %v3734
    %3757 = vmatprep.subr.mxu0 0.0
    %3758 = vmatpush1.msra.mxu0 %v3735
    %3759 = vmatprep.subr.mxu0 0.0
    %3760 = vmatpush1.msra.mxu0 %v3736
    %3761 = vmatprep.subr.mxu0 0.0
    %3762 = vmatpush1.msra.mxu0 %v3737
    %3763 = vmatprep.subr.mxu0 0.0
    %3764 = vmatpush1.msra.mxu0 %v3738
    %3765 = vmatprep.subr.mxu0 0.0
    %3766 = vmatpush1.msra.mxu0 %v3739
    %3767 = vmatprep.subr.mxu0 0.0
    %3768 = vmatpush1.msra.mxu0 %v3740
    %3769 = vmatprep.subr.mxu0 0.0
    %3770 = vmatpush1.msra.mxu0 0.0
    %3771 = vmatprep.subr.mxu0 0.0
    %3772 = vmatpush1.msra.mxu0 0.0
    %3773 = vmatprep.subr.mxu0 0.0
    %3774 = vmatpush1.msra.mxu0 0.0
    %3775 = vmatprep.subr.mxu0 0.0
    %3776 = vmatpush1.msra.mxu0 0.0
    %3777 = vmatprep.subr.mxu0 0.0
    %3778 = vmatpush1.msra.mxu0 0.0
    %3779 = vmatprep.subr.mxu0 0.0
    %3780 = vmatpush1.msra.mxu0 0.0
    %3781 = vmatprep.subr.mxu0 0.0
    %3782 = vmatpush1.msra.mxu0 0.0
    %3783 = vmatprep.subr.mxu0 0.0
    %3784 = vmatpush1.msra.mxu0 0.0
    %3785 = vmatprep.subr.mxu0 0.0
    %3786 = vmatpush1.msra.mxu0 0.0
    %3787 = vmatprep.subr.mxu0 0.0
    %3788 = vmatpush1.msra.mxu0 0.0
    %3789 = vmatprep.subr.mxu0 0.0
    %3790 = vmatpush1.msra.mxu0 0.0
    %3791 = vmatprep.subr.mxu0 0.0
    %3792 = vmatpush1.msra.mxu0 0.0
    %3793 = vmatprep.subr.mxu0 0.0
    %3794 = vmatpush1.msra.mxu0 0.0
    %3795 = vmatprep.subr.mxu0 0.0
    %3796 = vmatpush1.msra.mxu0 0.0
    %3797 = vmatprep.subr.mxu0 0.0
    %3798 = vmatpush1.msra.mxu0 0.0
    %3799 = vmatprep.subr.mxu0 0.0
    %3800 = vmatpush1.msra.mxu0 0.0
    %3801 = vmatprep.subr.mxu0 0.0
    %3802 = vmatpush1.msra.mxu0 0.0
    %3803 = vmatprep.subr.mxu0 0.0
    %3804 = vmatpush1.msra.mxu0 0.0
    %3805 = vmatprep.subr.mxu0 0.0
    %3806 = vmatpush1.msra.mxu0 0.0
    %3807 = vmatprep.subr.mxu0 0.0
    %3808 = vmatpush1.msra.mxu0 0.0
    %3809 = vmatprep.subr.mxu0 0.0
    %3810 = vmatpush1.msra.mxu0 0.0
    %3811 = vmatprep.subr.mxu0 0.0
    %3812 = vmatpush1.msra.mxu0 0.0
    %3813 = vmatprep.subr.mxu0 0.0
    %3814 = vmatpush1.msra.mxu0 0.0
    %3815 = vmatprep.subr.mxu0 0.0
    %3816 = vmatpush1.msra.mxu0 0.0
    %3817 = vmatprep.mubr.f32.mxu0 0.0
    %3818 = vmatmul.mubr.f32.gmra.mrb[0].mxu0 %v3742
    %v3819 = vpop.f32.mrb[0].mxu0
    %v3820 = vadd.f32 0.0, %v3819
    %v3821 = vpop.f32.mrb[0].mxu0
    %3822 = vmatprep.mubr.f32.mxu0 0.0
    %3823 = vmatmul.mubr.f32.gmra.mrb[0].mxu0 %v3745
    %v3824 = vpop.f32.mrb[0].mxu0
    %v3825 = vadd.f32 0.0, %v3824
    %v3826 = vpop.f32.mrb[0].mxu0
    %3827 = vmatprep.mubr.f32.mxu0 0.0
    %3828 = vmatmul.mubr.f32.gmra.mrb[0].mxu0 %v3748
    %v3829 = vpop.f32.mrb[0].mxu0
    %v3830 = vadd.f32 0.0, %v3829
    %v3831 = vpop.f32.mrb[0].mxu0
    %3832 = vmatprep.mubr.f32.mxu0 0.0
    %3833 = vmatmul.mubr.f32.gmra.mrb[0].mxu0 %v3751
    %v3834 = vpop.f32.mrb[0].mxu0
    %v3835 = vadd.f32 0.0, %v3834
    %v3836 = vpop.f32.mrb[0].mxu0
    %3837 = vdwg.mxu0
    %v3838 = vadd.f32 %v3626, %v3820
    %v3839 = vadd.f32 %v3627, %v3825
    %v3840 = vadd.f32 %v3628, %v3830
    %v3841 = vadd.f32 %v3629, %v3835
    %s3842 = scalar_lea.vmem %s10, 160
    %v3843 = vld [vmem:[%s3842] sm:$0xff]
    %v3844 = vld [vmem:[%s3842 + $0x8] sm:$0xff]
    %v3845 = vld [vmem:[%s3842 + $0x10] sm:$0xff]
    %v3846 = vld [vmem:[%s3842 + $0x18] sm:$0xff]
    %v3848 = vsel %vm948, %v3843, 0
    %v3851 = vsel %vm948, %v3844, 0
    %v3854 = vsel %vm948, %v3845, 0
    %v3857 = vsel %vm948, %v3846, 0
    %3859 = vmatprep.subr.mxu0 0.0
    %3860 = vmatpush1.msra.mxu0 %v2790
    %3861 = vmatprep.subr.mxu0 0.0
    %3862 = vmatpush1.msra.mxu0 %v2791
    %3863 = vmatprep.subr.mxu0 0.0
    %3864 = vmatpush1.msra.mxu0 0.0
    %3865 = vmatprep.subr.mxu0 0.0
    %3866 = vmatpush1.msra.mxu0 0.0
    %3867 = vmatprep.subr.mxu0 0.0
    %3868 = vmatpush1.msra.mxu0 0.0
    %3869 = vmatprep.subr.mxu0 0.0
    %3870 = vmatpush1.msra.mxu0 0.0
    %3871 = vmatprep.subr.mxu0 0.0
    %3872 = vmatpush1.msra.mxu0 0.0
    %3873 = vmatprep.subr.mxu0 0.0
    %3874 = vmatpush1.msra.mxu0 0.0
    %3875 = vmatprep.subr.mxu0 0.0
    %3876 = vmatpush1.msra.mxu0 0.0
    %3877 = vmatprep.subr.mxu0 0.0
    %3878 = vmatpush1.msra.mxu0 0.0
    %3879 = vmatprep.subr.mxu0 0.0
    %3880 = vmatpush1.msra.mxu0 0.0
    %3881 = vmatprep.subr.mxu0 0.0
    %3882 = vmatpush1.msra.mxu0 0.0
    %3883 = vmatprep.subr.mxu0 0.0
    %3884 = vmatpush1.msra.mxu0 0.0
    %3885 = vmatprep.subr.mxu0 0.0
    %3886 = vmatpush1.msra.mxu0 0.0
    %3887 = vmatprep.subr.mxu0 0.0
    %3888 = vmatpush1.msra.mxu0 0.0
    %3889 = vmatprep.subr.mxu0 0.0
    %3890 = vmatpush1.msra.mxu0 0.0
    %3891 = vmatprep.subr.mxu0 0.0
    %3892 = vmatpush1.msra.mxu0 0.0
    %3893 = vmatprep.subr.mxu0 0.0
    %3894 = vmatpush1.msra.mxu0 0.0
    %3895 = vmatprep.subr.mxu0 0.0
    %3896 = vmatpush1.msra.mxu0 0.0
    %3897 = vmatprep.subr.mxu0 0.0
    %3898 = vmatpush1.msra.mxu0 0.0
    %3899 = vmatprep.subr.mxu0 0.0
    %3900 = vmatpush1.msra.mxu0 0.0
    %3901 = vmatprep.subr.mxu0 0.0
    %3902 = vmatpush1.msra.mxu0 0.0
    %3903 = vmatprep.subr.mxu0 0.0
    %3904 = vmatpush1.msra.mxu0 0.0
    %3905 = vmatprep.subr.mxu0 0.0
    %3906 = vmatpush1.msra.mxu0 0.0
    %3907 = vmatprep.subr.mxu0 0.0
    %3908 = vmatpush1.msra.mxu0 0.0
    %3909 = vmatprep.subr.mxu0 0.0
    %3910 = vmatpush1.msra.mxu0 0.0
    %3911 = vmatprep.subr.mxu0 0.0
    %3912 = vmatpush1.msra.mxu0 0.0
    %3913 = vmatprep.subr.mxu0 0.0
    %3914 = vmatpush1.msra.mxu0 0.0
    %3915 = vmatprep.subr.mxu0 0.0
    %3916 = vmatpush1.msra.mxu0 0.0
    %3917 = vmatprep.subr.mxu0 0.0
    %3918 = vmatpush1.msra.mxu0 0.0
    %3919 = vmatprep.subr.mxu0 0.0
    %3920 = vmatpush1.msra.mxu0 0.0
    %3921 = vmatprep.subr.mxu0 0.0
    %3922 = vmatpush1.msra.mxu0 0.0
    %3923 = vmatprep.mubr.f32.mxu0 0.0
    %3924 = vmatmul.mubr.f32.gmra.mrb[0].mxu0 %v3848
    %v3925 = vpop.f32.mrb[0].mxu0
    %v3926 = vadd.f32 0.0, %v3925
    %v3927 = vpop.f32.mrb[0].mxu0
    %3928 = vmatprep.mubr.f32.mxu0 0.0
    %3929 = vmatmul.mubr.f32.gmra.mrb[0].mxu0 %v3851
    %v3930 = vpop.f32.mrb[0].mxu0
    %v3931 = vadd.f32 0.0, %v3930
    %v3932 = vpop.f32.mrb[0].mxu0
    %3933 = vmatprep.mubr.f32.mxu0 0.0
    %3934 = vmatmul.mubr.f32.gmra.mrb[0].mxu0 %v3854
    %v3935 = vpop.f32.mrb[0].mxu0
    %v3936 = vadd.f32 0.0, %v3935
    %v3937 = vpop.f32.mrb[0].mxu0
    %3938 = vmatprep.mubr.f32.mxu0 0.0
    %3939 = vmatmul.mubr.f32.gmra.mrb[0].mxu0 %v3857
    %v3940 = vpop.f32.mrb[0].mxu0
    %v3941 = vadd.f32 0.0, %v3940
    %v3942 = vpop.f32.mrb[0].mxu0
    %3943 = vdwg.mxu0
    %s3944 = scalar_lea.vmem %s11, 320
    %v3945 = vld [vmem:[%s3944] sm:$0xff]
    %v3946 = vld [vmem:[%s3944 + $0x8] sm:$0xff]
    %v3947 = vld [vmem:[%s3944 + $0x10] sm:$0xff]
    %v3948 = vld [vmem:[%s3944 + $0x18] sm:$0xff]
    %v3949 = vld [vmem:[%s3944 + $0x20] sm:$0xff]
    %v3950 = vld [vmem:[%s3944 + $0x28] sm:$0xff]
    %v3951 = vld [vmem:[%s3944 + $0x30] sm:$0xff]
    %v3952 = vld [vmem:[%s3944 + $0x38] sm:$0xff]
    %v3954 = vsel %vm1114, %v3926, 0
    %v3957 = vsel %vm1114, %v3931, 0
    %v3960 = vsel %vm1114, %v3936, 0
    %v3963 = vsel %vm1114, %v3941, 0
    %3965 = vmatprep.subr.mxu0 0.0
    %3966 = vmatpush1.msra.mxu0 %v3945
    %3967 = vmatprep.subr.mxu0 0.0
    %3968 = vmatpush1.msra.mxu0 %v3946
    %3969 = vmatprep.subr.mxu0 0.0
    %3970 = vmatpush1.msra.mxu0 %v3947
    %3971 = vmatprep.subr.mxu0 0.0
    %3972 = vmatpush1.msra.mxu0 %v3948
    %3973 = vmatprep.subr.mxu0 0.0
    %3974 = vmatpush1.msra.mxu0 %v3949
    %3975 = vmatprep.subr.mxu0 0.0
    %3976 = vmatpush1.msra.mxu0 %v3950
    %3977 = vmatprep.subr.mxu0 0.0
    %3978 = vmatpush1.msra.mxu0 %v3951
    %3979 = vmatprep.subr.mxu0 0.0
    %3980 = vmatpush1.msra.mxu0 %v3952
    %3981 = vmatprep.subr.mxu0 0.0
    %3982 = vmatpush1.msra.mxu0 0.0
    %3983 = vmatprep.subr.mxu0 0.0
    %3984 = vmatpush1.msra.mxu0 0.0
    %3985 = vmatprep.subr.mxu0 0.0
    %3986 = vmatpush1.msra.mxu0 0.0
    %3987 = vmatprep.subr.mxu0 0.0
    %3988 = vmatpush1.msra.mxu0 0.0
    %3989 = vmatprep.subr.mxu0 0.0
    %3990 = vmatpush1.msra.mxu0 0.0
    %3991 = vmatprep.subr.mxu0 0.0
    %3992 = vmatpush1.msra.mxu0 0.0
    %3993 = vmatprep.subr.mxu0 0.0
    %3994 = vmatpush1.msra.mxu0 0.0
    %3995 = vmatprep.subr.mxu0 0.0
    %3996 = vmatpush1.msra.mxu0 0.0
    %3997 = vmatprep.subr.mxu0 0.0
    %3998 = vmatpush1.msra.mxu0 0.0
    %3999 = vmatprep.subr.mxu0 0.0
    %4000 = vmatpush1.msra.mxu0 0.0
    %4001 = vmatprep.subr.mxu0 0.0
    %4002 = vmatpush1.msra.mxu0 0.0
    %4003 = vmatprep.subr.mxu0 0.0
    %4004 = vmatpush1.msra.mxu0 0.0
    %4005 = vmatprep.subr.mxu0 0.0
    %4006 = vmatpush1.msra.mxu0 0.0
    %4007 = vmatprep.subr.mxu0 0.0
    %4008 = vmatpush1.msra.mxu0 0.0
    %4009 = vmatprep.subr.mxu0 0.0
    %4010 = vmatpush1.msra.mxu0 0.0
    %4011 = vmatprep.subr.mxu0 0.0
    %4012 = vmatpush1.msra.mxu0 0.0
    %4013 = vmatprep.subr.mxu0 0.0
    %4014 = vmatpush1.msra.mxu0 0.0
    %4015 = vmatprep.subr.mxu0 0.0
    %4016 = vmatpush1.msra.mxu0 0.0
    %4017 = vmatprep.subr.mxu0 0.0
    %4018 = vmatpush1.msra.mxu0 0.0
    %4019 = vmatprep.subr.mxu0 0.0
    %4020 = vmatpush1.msra.mxu0 0.0
    %4021 = vmatprep.subr.mxu0 0.0
    %4022 = vmatpush1.msra.mxu0 0.0
    %4023 = vmatprep.subr.mxu0 0.0
    %4024 = vmatpush1.msra.mxu0 0.0
    %4025 = vmatprep.subr.mxu0 0.0
    %4026 = vmatpush1.msra.mxu0 0.0
    %4027 = vmatprep.subr.mxu0 0.0
    %4028 = vmatpush1.msra.mxu0 0.0
    %4029 = vmatprep.mubr.f32.mxu0 0.0
    %4030 = vmatmul.mubr.f32.gmra.mrb[0].mxu0 %v3954
    %v4031 = vpop.f32.mrb[0].mxu0
    %v4032 = vadd.f32 0.0, %v4031
    %v4033 = vpop.f32.mrb[0].mxu0
    %4034 = vmatprep.mubr.f32.mxu0 0.0
    %4035 = vmatmul.mubr.f32.gmra.mrb[0].mxu0 %v3957
    %v4036 = vpop.f32.mrb[0].mxu0
    %v4037 = vadd.f32 0.0, %v4036
    %v4038 = vpop.f32.mrb[0].mxu0
    %4039 = vmatprep.mubr.f32.mxu0 0.0
    %4040 = vmatmul.mubr.f32.gmra.mrb[0].mxu0 %v3960
    %v4041 = vpop.f32.mrb[0].mxu0
    %v4042 = vadd.f32 0.0, %v4041
    %v4043 = vpop.f32.mrb[0].mxu0
    %4044 = vmatprep.mubr.f32.mxu0 0.0
    %4045 = vmatmul.mubr.f32.gmra.mrb[0].mxu0 %v3963
    %v4046 = vpop.f32.mrb[0].mxu0
    %v4047 = vadd.f32 0.0, %v4046
    %v4048 = vpop.f32.mrb[0].mxu0
    %4049 = vdwg.mxu0
    %v4050 = vadd.f32 %v3838, %v4032
    %v4051 = vadd.f32 %v3839, %v4037
    %v4052 = vadd.f32 %v3840, %v4042
    %v4053 = vadd.f32 %v3841, %v4047
    %v4054 = vld [vmem:[%s12] sm:$0x1]
    %v4056 = vlaneseq
    %v4057 = vshrl.u32 %v4056, 7
    %v4058 = vsub.s32 0, %v4057
    %v4059 = vrot.slane %v4054, %v4058
    %v4061 = vadd.f32 %v4050, %v4059
    %v4062 = vadd.f32 %v4051, %v4059
    %v4063 = vadd.f32 %v4052, %v4059
    %v4064 = vadd.f32 %v4053, %v4059
    %v4065 = vsub.f32 0.0, %v4061
    %v4066 = vsub.f32 0.0, %v4062
    %v4067 = vsub.f32 0.0, %v4063
    %v4068 = vsub.f32 0.0, %v4064
    %v4069 = vmul.f32 %v4065, 1.442695
    %v4070 = vpow.pop %v4069
    %v4071 = vmul.f32 %v4066, 1.442695
    %v4072 = vpow.pop %v4071
    %v4073 = vmul.f32 %v4067, 1.442695
    %v4074 = vpow.pop %v4073
    %v4075 = vmul.f32 %v4068, 1.442695
    %v4076 = vpow.pop %v4075
    %v4077 = vadd.f32 %v4070, 1.0
    %v4078 = vadd.f32 %v4072, 1.0
    %v4079 = vadd.f32 %v4074, 1.0
    %v4080 = vadd.f32 %v4076, 1.0
    %v4081 = vrcp.pop %v4077
    %v4082 = vmul.f32 1.0, %v4081
    %v4083 = vrcp.pop %v4078
    %v4084 = vmul.f32 1.0, %v4083
    %v4085 = vrcp.pop %v4079
    %v4086 = vmul.f32 1.0, %v4085
    %v4087 = vrcp.pop %v4080
    %v4088 = vmul.f32 1.0, %v4087
    %4089 = vst.msk [vmem:[%s14] sm:$0xff] %vm245, %v4082
    %4090 = vst.msk [vmem:[%s14 + $0x8] sm:$0xff] %vm245, %v4084
    %4091 = vst.msk [vmem:[%s14 + $0x10] sm:$0xff] %vm245, %v4086
    %4092 = vst.msk [vmem:[%s14 + $0x18] sm:$0xff] %vm245, %v4088
    // Predicated region
    $region62: #{autoencoder_forward.1} parent=1 // pred_check
      _
    $region63: #{autoencoder_forward.1} parent=1 // pred_check_branch
      %4094 = sbr.rel (0) target = $region65
    $region64: #{autoencoder_forward.1} parent=1 // pred_region
      _
    $region65: #{autoencoder_forward.1} parent=1 // pred_fallthru
      _
    // Predicated region
    $region66: #{autoencoder_forward.1} parent=1 // pred_check
      _
    $region67: #{autoencoder_forward.1} parent=1 // pred_check_branch
      %4096 = sbr.rel (0) target = $region69
    $region68: #{autoencoder_forward.1} parent=1 // pred_region
      _
    $region69: #{autoencoder_forward.1} parent=1 // pred_fallthru
      _
    %4097 = vsyncpa [#allocation3], 1

</llo_original>
